<compile_context>
chip_gen: v6e
topology: v6e:2x2x1
jax: 0.10.0
libtpu: 0.0.40
codegen_flags: <defaults>
</compile_context>

<pallas_src>
import functools

import jax
import jax.numpy as jnp
from jax.experimental import pallas as pl
from jax.experimental.pallas import tpu as pltpu

# ---------------- model hyper-parameters (params.*) ----------------
HID = 32            # params.hidden_dim
EMB = 32            # params.embed_dim
VOCAB = 64          # params.vocab_sz
NUM_REGIONS = 49    # hard-coded 7x7 spatial grid in the module
FEAT = 2048         # hard-coded ResNet-152 feature channels

ENC_HALF = HID + EMB          # 64
ENC_OUT = 2 * ENC_HALF        # 128 : [ V(32) | raw g(32) | ZV(49) | zero pad(15) ]


def _round_up(x, m):
    return (x + m - 1) // m * m


def _pick_m_blk(rows):
    # Biggest tile that still yields >=2 grid steps (v7x megacore sharding),
    # capped at 1024 rows (4 MiB bf16 block, well within VMEM on all chips).
    if rows < 16:
        return _round_up(rows, 8)
    return min(1024, _round_up((rows + 1) // 2, 8))


def _attention_compute_dtype():
    # bf16 VPU/EUP exists on v6e/v7x; keep elementwise attention math in f32 on
    # v5e (and older) where bf16 would force extra converts.
    try:
        kind = jax.devices()[0].device_kind.lower()
    except Exception:
        return jnp.float32
    if "v6" in kind or "v7" in kind:
        return jnp.bfloat16
    return jnp.float32


# =====================================================================
# Encoder kernel (M-blocked over B*49 rows):
#   AW = A @ [Wi | Wg] + [b_i | b_g]      (bf16 MXU matmul, f32 accumulate)
#   slab[:, :HID]         = relu(AW[:, :HID])              (V rows)
#   slab[:, HID:64]       = AW[:, HID:]                    (raw; relu after spatial mean)
#   slab[:, 64:]          = relu(AW[:, :HID]) @ W_v_pad    (ZV; cols 49:64 of W_v are 0)
# Single lane-dense 128-wide bf16 output slab.
# =====================================================================
def encoder_kernel(a_ref, w_ref, b_ref, wv_ref, out_ref):
    aw = jnp.dot(a_ref[...], w_ref[...],
                 preferred_element_type=jnp.float32) + b_ref[...]        # (M, 64)
    v = jnp.maximum(aw, 0.0)
    col = jax.lax.broadcasted_iota(jnp.int32, aw.shape, 1)
    left = jnp.where(col < HID, v, aw)                                   # (M, 64)
    zv = jnp.dot(v[:, :HID].astype(jnp.bfloat16), wv_ref[...],
                 preferred_element_type=jnp.float32)                     # (M, 64)
    out_ref[:, :ENC_HALF] = left.astype(jnp.bfloat16)
    out_ref[:, ENC_HALF:] = zv.astype(jnp.bfloat16)


def encoder_pallas(a_flat_bf16, w_enc_bf16, b_enc, wv_pad_bf16):
    rows = a_flat_bf16.shape[0]
    m_blk = _pick_m_blk(rows)
    rows_p = _round_up(rows, m_blk)
    if rows_p != rows:
        a_flat_bf16 = jnp.pad(a_flat_bf16, ((0, rows_p - rows), (0, 0)))

    slab = pl.pallas_call(
        encoder_kernel,
        out_shape=jax.ShapeDtypeStruct((rows_p, ENC_OUT), jnp.bfloat16),
        grid=(rows_p // m_blk,),
        in_specs=[
            pl.BlockSpec((m_blk, FEAT), lambda m: (m, 0)),
            pl.BlockSpec((FEAT, ENC_HALF), lambda m: (0, 0)),      # resident weight
            pl.BlockSpec((1, ENC_HALF), lambda m: (0, 0)),
            pl.BlockSpec((HID, ENC_HALF), lambda m: (0, 0)),       # W_v padded 49->64
        ],
        out_specs=pl.BlockSpec((m_blk, ENC_OUT), lambda m: (m, 0)),
        compiler_params=pltpu.CompilerParams(dimension_semantics=("parallel",)),
    )(a_flat_bf16, w_enc_bf16, b_enc, wv_pad_bf16)
    return slab[:rows]


# =====================================================================
# Decoder kernel: the WHOLE caption in one kernel invocation (no grid).
# lax.fori_loop over T; (h, c) carried as loop values; per-step logits written
# into the VMEM-resident (T, B, VOCAB) output block (one HBM writeback at end).
# =====================================================================
def decoder_kernel(xall_ref, v_ref, zv_ref, whall_ref, b_ref,
                   wg_ref, whrow_ref, wmlp_ref, bmlp_ref,
                   pred_ref, *, att_dtype):
    T = xall_ref.shape[0]
    B = xall_ref.shape[1]

    # hoisted, loop-invariant loads / casts (resident for the whole sequence)
    whall = whall_ref[...]                              # (H, 5H)
    bias = b_ref[...]                                   # (1, 4H)
    wg = wg_ref[...]                                    # (H, 49)
    whrow = whrow_ref[...].astype(att_dtype)            # (1, 1, 49)
    wmlp = wmlp_ref[...]                                # (H, VOCAB)
    bmlp = bmlp_ref[...]                                # (1, VOCAB)
    zvv = zv_ref[...].astype(att_dtype)                 # (B, 49, 49)
    vv = v_ref[...].astype(jnp.float32)                 # (B, 49, H)

    def sigmoid(x):
        # exact sigmoid -- errors in the recurrent gates would compound over T.
        return 1.0 / (1.0 + jnp.exp(-x))

    def step(t, carry):
        h_prev, c_prev = carry
        xall = xall_ref[t]                                               # (B, 5H)
        hall = jnp.dot(h_prev, whall, preferred_element_type=jnp.float32)

        # ----- nn.LSTM (seq_len == 1), PyTorch gate order (i, f, g, o) -----
        gates = xall[:, :4 * HID] + hall[:, :4 * HID] + bias             # (B, 4H)
        i_g = sigmoid(gates[:, 0 * HID:1 * HID])
        f_g = sigmoid(gates[:, 1 * HID:2 * HID])
        g_g = jnp.tanh(gates[:, 2 * HID:3 * HID])
        o_g = sigmoid(gates[:, 3 * HID:4 * HID])
        c_new = f_g * c_prev + i_g * g_g
        tc = jnp.tanh(c_new)                      # shared by h_new and s_t
        h_new = o_g * tc

        # ----- sentinel gate: g_t = sigmoid(W_x x + W_h h_{t-1}); s_t = g_t*tanh(c) -----
        g_t = sigmoid(xall[:, 4 * HID:] + hall[:, 4 * HID:])
        s_t = g_t * tc                                                    # (B, H)

        # ----- adaptive attention (Atten.forward), batched over B -----
        # Matches the reference exactly: alpha is the region-only 49-way softmax
        # and beta = alpha[:, :, -1]; the W_s / hat_alpha branch is dead code
        # (it never feeds the returned hat_c), so it is not computed.
        zg = jnp.dot(h_new, wg, preferred_element_type=jnp.float32)      # (B, 49)
        z = jnp.tanh(zvv + zg.astype(att_dtype)[:, None, :])             # (B, 49, 49)
        scores = jnp.sum(z * whrow, axis=-1).astype(jnp.float32)         # (B, 49)
        m = jnp.max(scores, axis=-1, keepdims=True)
        e = jnp.exp(scores - m)
        alpha = e * pl.reciprocal(jnp.sum(e, axis=-1, keepdims=True), approx=True)
        # VPU weighted sum (no M=1 MXU einsum on the recurrent chain)
        c_t = jnp.sum(alpha[:, :, None] * vv, axis=1)                    # (B, H)
        beta = alpha[:, NUM_REGIONS - 1:NUM_REGIONS]                     # (B, 1)
        hat_c = beta * s_t + (1.0 - beta) * c_t                          # (B, H)

        logits = jnp.dot(hat_c + h_new, wmlp,
                         preferred_element_type=jnp.float32) + bmlp      # (B, VOCAB)
        pred_ref[t] = logits
        return h_new, c_new

    h0 = jnp.zeros((B, HID), jnp.float32)
    c0 = jnp.zeros((B, HID), jnp.float32)
    jax.lax.fori_loop(0, T, step, (h0, c0))


def decoder_pallas(xall_tbe, V, ZV, whall, b_gates, wg_att, wh_row3, wmlp, b_mlp,
                   att_dtype):
    T, B, _ = xall_tbe.shape
    # TODO(synk): for large B on v7x, add a leading "parallel" batch grid axis so
    # both TensorCores are used and the per-core resident V/ZV footprint shrinks;
    # omitted here (demo batch is tiny, everything fits in one invocation).
    kernel = functools.partial(decoder_kernel, att_dtype=att_dtype)
    return pl.pallas_call(
        kernel,
        out_shape=jax.ShapeDtypeStruct((T, B, VOCAB), jnp.float32),
    )(xall_tbe, V, ZV, whall, b_gates, wg_att, wh_row3, wmlp, b_mlp)


# =====================================================================
# Glue (jitted JAX): stand-in backbone, embedding fold, packing
# =====================================================================
def backbone_standin(imgs, proj):
    # TODO(synk): pretrained torchvision ResNet-152 backbone is not reproducible
    # in-script; deterministic stand-in = average-pool to 7x7 + 1x1 projection 3->2048.
    B, C, Hs, Ws = imgs.shape
    ph, pw = Hs // 7, Ws // 7
    pooled = imgs.reshape(B, C, 7, ph, 7, pw).mean(axis=(3, 5))           # (B, 3, 7, 7)
    A = jnp.maximum(jnp.einsum('bchw,cd->bhwd', pooled, proj), 0.0)       # NHWC
    return A.reshape(B, NUM_REGIONS, FEAT)                                # (B, 49, 2048)


@jax.jit
def _forward_core(imgs, captions, p):
    B, T = captions.shape
    att_dtype = _attention_compute_dtype()

    # ---------------- encoderCNN ----------------
    a = backbone_standin(imgs, p['backbone_proj'])                        # (B, 49, 2048)
    a_flat = a.reshape(B * NUM_REGIONS, FEAT).astype(jnp.bfloat16)
    w_enc = jnp.concatenate([p['wi_t'], p['wg_enc_t']], axis=1).astype(jnp.bfloat16)
    b_enc = jnp.concatenate([p['b_i_enc'], p['b_g_enc']], axis=1)         # (1, 64)
    wv_pad = jnp.pad(p['wv_t'],
                     ((0, 0), (0, ENC_HALF - NUM_REGIONS))).astype(jnp.bfloat16)

    slab = encoder_pallas(a_flat, w_enc, b_enc, wv_pad)                   # (B*49, 128) bf16
    slab = slab.reshape(B, NUM_REGIONS, ENC_OUT)
    V = slab[:, :, :HID]                                                  # bf16, relu'd
    v_g = jnp.maximum(
        jnp.mean(slab[:, :, HID:ENC_HALF].astype(jnp.float32), axis=1), 0.0)  # (B, E)
    ZV = slab[:, :, ENC_HALF:ENC_HALF + NUM_REGIONS]                      # (B, 49, 49) bf16

    # ---------------- decoderLSTM ----------------
    # fused x-path weight: rows 0:E multiply the word embedding, rows E:2E multiply v_g
    wxall = jnp.concatenate([p['wih_t'], p['wx_t']], axis=1)              # (2E, 5H)
    whall = jnp.concatenate([p['whh_t'], p['whc_t']], axis=1)             # (H, 5H)
    b_gates = p['b_ih'] + p['b_hh']                                       # (1, 4H)

    # hoist the (non-recurrent) x matmul off the serial chain:
    #   x_t @ Wxall == emb_proj[caption_t] + vg_proj
    emb_proj = p['embedding'] @ wxall[:EMB]                               # (VOCAB, 5H)
    vg_proj = v_g @ wxall[EMB:]                                           # (B, 5H)
    xall = emb_proj[captions] + vg_proj[:, None, :]                       # (B, T, 5H)
    xall_tbe = jnp.transpose(xall, (1, 0, 2))                             # (T, B, 5H)

    wh_row3 = p['wh_row'].reshape(1, 1, NUM_REGIONS)

    preds_tbv = decoder_pallas(xall_tbe, V, ZV, whall, b_gates,
                               p['wg_att_t'], wh_row3, p['wmlp_t'], p['b_mlp'],
                               att_dtype)
    return jnp.transpose(preds_tbv, (1, 0, 2))                            # (B, T, VOCAB)


def pack_padded(preds, lengths):
    # emulates torch.nn.utils.rnn.pack_padded_sequence(preds, l, batch_first=True)
    assert list(lengths) == sorted(lengths, reverse=True)
    data, batch_sizes = [], []
    for t in range(int(lengths[0])):
        n = sum(1 for L in lengths if L > t)
        batch_sizes.append(n)
        data.append(preds[:n, t, :])
    return jnp.concatenate(data, axis=0), jnp.asarray(batch_sizes, dtype=jnp.int32)


def adaptive_attention_forward(imgs, captions, lengths, params):
    preds = _forward_core(imgs, captions, params)                         # (B, T, VOCAB)
    return pack_padded(preds, lengths)


def init_params(key):
    ks = jax.random.split(key, 18)
    scale = 0.1

    def rn(k, shape):
        return scale * jax.random.normal(k, shape, dtype=jnp.float32)

    return {
        'backbone_proj': rn(ks[0], (3, FEAT)),
        'embedding':     rn(ks[1], (VOCAB, EMB)),
        'wi_t':          rn(ks[2], (FEAT, HID)),          # encoderCNN.feature_i (transposed)
        'b_i_enc':       rn(ks[3], (1, HID)),
        'wg_enc_t':      rn(ks[4], (FEAT, EMB)),          # encoderCNN.feature_g
        'b_g_enc':       rn(ks[5], (1, EMB)),
        'wih_t':         rn(ks[6], (2 * EMB, 4 * HID)),   # nn.LSTM weight_ih_l0^T
        'whh_t':         rn(ks[7], (HID, 4 * HID)),       # nn.LSTM weight_hh_l0^T
        'b_ih':          rn(ks[8], (1, 4 * HID)),
        'b_hh':          rn(ks[9], (1, 4 * HID)),
        'wx_t':          rn(ks[10], (2 * EMB, HID)),      # LSTM_cell.W_x
        'whc_t':         rn(ks[11], (HID, HID)),          # LSTM_cell.W_h
        'wv_t':          rn(ks[12], (HID, NUM_REGIONS)),  # Atten.W_v
        'wg_att_t':      rn(ks[13], (HID, NUM_REGIONS)),  # Atten.W_g
        'ws_t':          rn(ks[14], (HID, NUM_REGIONS)),  # Atten.W_s (dead code in forward)
        'wh_row':        rn(ks[15], (1, NUM_REGIONS)),    # Atten.W_h
        'wmlp_t':        rn(ks[16], (HID, VOCAB)),        # decoder MLP
        'b_mlp':         rn(ks[17], (1, VOCAB)),
    }


if __name__ == "__main__":
    B, T = 2, 6
    key = jax.random.PRNGKey(0)
    k_img, k_cap = jax.random.split(key)
    imgs = jax.random.normal(k_img, (B, 3, 56, 56), dtype=jnp.float32)   # NCHW
    captions = jax.random.randint(k_cap, (B, T), 0, VOCAB)
    lengths = [6, 4]                                                     # sorted descending

    params = init_params(jax.random.PRNGKey(1))
    packed_data, batch_sizes = adaptive_attention_forward(imgs, captions, lengths, params)
    packed_data = jax.block_until_ready(packed_data)

    assert packed_data.shape == (sum(lengths), VOCAB)
    assert batch_sizes.shape == (max(lengths),)
    assert bool(jnp.all(jnp.isfinite(packed_data)))
    print("KERNEL_OK")
</pallas_src>

<mosaic_0001>
module attributes {stable_mosaic.version = 11 : i64} {
  func.func @encoder_kernel(%arg0: i32, %arg1: memref<56x2048xbf16, #tpu.memory_space<vmem>>, %arg2: memref<2048x64xbf16, #tpu.memory_space<vmem>>, %arg3: memref<1x64xf32, #tpu.memory_space<vmem>>, %arg4: memref<32x64xbf16, #tpu.memory_space<vmem>>, %arg5: memref<56x128xbf16, #tpu.memory_space<vmem>>) attributes {dimension_semantics = [#tpu.dimension_semantics<parallel>], iteration_bounds = array<i64: 2>, scalar_prefetch = 0 : i64, scratch_operands = 0 : i64, tpu.core_type = #tpu.core_type<tc>, window_params = [{transform_indices = @transform_0, window_bounds = array<i64: 56, 2048>}, {pipeline_mode = #tpu.pipeline_mode<synchronous>, transform_indices = @transform_1, window_bounds = array<i64: 2048, 64>}, {pipeline_mode = #tpu.pipeline_mode<synchronous>, transform_indices = @transform_2, window_bounds = array<i64: 1, 64>}, {pipeline_mode = #tpu.pipeline_mode<synchronous>, transform_indices = @transform_3, window_bounds = array<i64: 32, 64>}, {transform_indices = @transform_4, window_bounds = array<i64: 56, 128>}]} {
    %c0 = arith.constant 0 : index
    %c0_0 = arith.constant 0 : index
    %0 = vector.load %arg1[%c0, %c0_0] : memref<56x2048xbf16, #tpu.memory_space<vmem>>, vector<56x2048xbf16>
    %c0_1 = arith.constant 0 : index
    %c0_2 = arith.constant 0 : index
    %1 = vector.load %arg2[%c0_1, %c0_2] : memref<2048x64xbf16, #tpu.memory_space<vmem>>, vector<2048x64xbf16>
    %cst = arith.constant dense<0.000000e+00> : vector<56x64xf32>
    %2 = tpu.matmul %0, %1, %cst {dimension_numbers = #tpu.dot_dimension_numbers<[1], [0], [0], [1], [0, 0, 1, 1], [], []>} : vector<56x2048xbf16>, vector<2048x64xbf16>, vector<56x64xf32> -> vector<56x64xf32>
    %c0_3 = arith.constant 0 : index
    %c0_4 = arith.constant 0 : index
    %3 = vector.load %arg3[%c0_3, %c0_4] : memref<1x64xf32, #tpu.memory_space<vmem>>, vector<1x64xf32>
    %4 = vector.broadcast %3 : vector<1x64xf32> to vector<56x64xf32>
    %5 = arith.addf %2, %4 : vector<56x64xf32>
    %cst_5 = arith.constant 0.000000e+00 : f32
    %6 = vector.broadcast %cst_5 : f32 to vector<56x64xf32>
    %7 = arith.maximumf %5, %6 : vector<56x64xf32>
    %8 = tpu.iota {dimensions = array<i32: 1>} : vector<56x64xi32>
    %c32_i32 = arith.constant 32 : i32
    %9 = vector.broadcast %c32_i32 : i32 to vector<56x64xi32>
    %10 = arith.cmpi slt, %8, %9 : vector<56x64xi32>
    %11 = arith.select %10, %7, %5 : vector<56x64xi1>, vector<56x64xf32>
    %12 = vector.extract_strided_slice %7 {offsets = [0, 0], sizes = [56, 32], strides = [1, 1]} : vector<56x64xf32> to vector<56x32xf32>
    %13 = arith.truncf %12 : vector<56x32xf32> to vector<56x32xbf16>
    %c0_6 = arith.constant 0 : index
    %c0_7 = arith.constant 0 : index
    %14 = vector.load %arg4[%c0_6, %c0_7] : memref<32x64xbf16, #tpu.memory_space<vmem>>, vector<32x64xbf16>
    %cst_8 = arith.constant dense<0.000000e+00> : vector<56x64xf32>
    %15 = tpu.matmul %13, %14, %cst_8 {dimension_numbers = #tpu.dot_dimension_numbers<[1], [0], [0], [1], [0, 0, 1, 1], [], []>} : vector<56x32xbf16>, vector<32x64xbf16>, vector<56x64xf32> -> vector<56x64xf32>
    %16 = arith.truncf %11 : vector<56x64xf32> to vector<56x64xbf16>
    %c0_9 = arith.constant 0 : index
    %c0_10 = arith.constant 0 : index
    %17 = vector.load %arg5[%c0_9, %c0_10] : memref<56x128xbf16, #tpu.memory_space<vmem>>, vector<56x64xbf16>
    tpu.vector_store %arg5[%c0_9, %c0_10], %16 {strides = array<i32>} : memref<56x128xbf16, #tpu.memory_space<vmem>>, vector<56x64xbf16>,
    %18 = arith.truncf %15 : vector<56x64xf32> to vector<56x64xbf16>
    %c0_11 = arith.constant 0 : index
    %c64 = arith.constant 64 : index
    %19 = vector.load %arg5[%c0_11, %c64] : memref<56x128xbf16, #tpu.memory_space<vmem>>, vector<56x64xbf16>
    tpu.vector_store %arg5[%c0_11, %c64], %18 {strides = array<i32>} : memref<56x128xbf16, #tpu.memory_space<vmem>>, vector<56x64xbf16>,
    return
  }
  func.func @transform_0(%arg0: i32) -> (i32, i32) {
    %c0_i32 = arith.constant 0 : i32
    %c0_i32_0 = arith.constant 0 : i32
    return %arg0, %c0_i32 : i32, i32
  }
  func.func @transform_1(%arg0: i32) -> (i32, i32) {
    %c0_i32 = arith.constant 0 : i32
    %c0_i32_0 = arith.constant 0 : i32
    %c0_i32_1 = arith.constant 0 : i32
    return %c0_i32, %c0_i32_0 : i32, i32
  }
  func.func @transform_2(%arg0: i32) -> (i32, i32) {
    %c0_i32 = arith.constant 0 : i32
    %c0_i32_0 = arith.constant 0 : i32
    %c0_i32_1 = arith.constant 0 : i32
    return %c0_i32, %c0_i32_0 : i32, i32
  }
  func.func @transform_3(%arg0: i32) -> (i32, i32) {
    %c0_i32 = arith.constant 0 : i32
    %c0_i32_0 = arith.constant 0 : i32
    %c0_i32_1 = arith.constant 0 : i32
    return %c0_i32, %c0_i32_0 : i32, i32
  }
  func.func @transform_4(%arg0: i32) -> (i32, i32) {
    %c0_i32 = arith.constant 0 : i32
    %c0_i32_0 = arith.constant 0 : i32
    return %arg0, %c0_i32 : i32, i32
  }
}

module attributes {stable_mosaic.version = 11 : i64} {
  func.func @decoder_kernel(%arg0: memref<6x2x160xf32, #tpu.memory_space<vmem>>, %arg1: memref<2x49x32xbf16, #tpu.memory_space<vmem>>, %arg2: memref<2x49x49xbf16, #tpu.memory_space<vmem>>, %arg3: memref<32x160xf32, #tpu.memory_space<vmem>>, %arg4: memref<1x128xf32, #tpu.memory_space<vmem>>, %arg5: memref<32x49xf32, #tpu.memory_space<vmem>>, %arg6: memref<1x1x49xf32, #tpu.memory_space<vmem>>, %arg7: memref<32x64xf32, #tpu.memory_space<vmem>>, %arg8: memref<1x64xf32, #tpu.memory_space<vmem>>, %arg9: memref<6x2x64xf32, #tpu.memory_space<vmem>>) attributes {dimension_semantics = [], scalar_prefetch = 0 : i64, scratch_operands = 0 : i64, tpu.core_type = #tpu.core_type<tc>} {
    %c0 = arith.constant 0 : index
    %c0_0 = arith.constant 0 : index
    %0 = vector.load %arg3[%c0, %c0_0] : memref<32x160xf32, #tpu.memory_space<vmem>>, vector<32x160xf32>
    %c0_1 = arith.constant 0 : index
    %c0_2 = arith.constant 0 : index
    %1 = vector.load %arg4[%c0_1, %c0_2] : memref<1x128xf32, #tpu.memory_space<vmem>>, vector<1x128xf32>
    %c0_3 = arith.constant 0 : index
    %c0_4 = arith.constant 0 : index
    %2 = vector.load %arg5[%c0_3, %c0_4] : memref<32x49xf32, #tpu.memory_space<vmem>>, vector<32x49xf32>
    %c0_5 = arith.constant 0 : index
    %c0_6 = arith.constant 0 : index
    %c0_7 = arith.constant 0 : index
    %3 = vector.load %arg6[%c0_5, %c0_6, %c0_7] : memref<1x1x49xf32, #tpu.memory_space<vmem>>, vector<1x1x49xf32>
    %c0_8 = arith.constant 0 : index
    %c0_9 = arith.constant 0 : index
    %4 = vector.load %arg7[%c0_8, %c0_9] : memref<32x64xf32, #tpu.memory_space<vmem>>, vector<32x64xf32>
    %c0_10 = arith.constant 0 : index
    %c0_11 = arith.constant 0 : index
    %5 = vector.load %arg8[%c0_10, %c0_11] : memref<1x64xf32, #tpu.memory_space<vmem>>, vector<1x64xf32>
    %c0_12 = arith.constant 0 : index
    %c0_13 = arith.constant 0 : index
    %c0_14 = arith.constant 0 : index
    %6 = vector.load %arg2[%c0_12, %c0_13, %c0_14] : memref<2x49x49xbf16, #tpu.memory_space<vmem>>, vector<2x49x49xbf16>
    %7 = arith.extf %6 : vector<2x49x49xbf16> to vector<2x49x49xf32>
    %c0_15 = arith.constant 0 : index
    %c0_16 = arith.constant 0 : index
    %c0_17 = arith.constant 0 : index
    %8 = vector.load %arg1[%c0_15, %c0_16, %c0_17] : memref<2x49x32xbf16, #tpu.memory_space<vmem>>, vector<2x49x32xbf16>
    %9 = arith.extf %8 : vector<2x49x32xbf16> to vector<2x49x32xf32>
    %cst = arith.constant 0.000000e+00 : f32
    %10 = vector.broadcast %cst : f32 to vector<2x32xf32>
    %cst_18 = arith.constant 0.000000e+00 : f32
    %11 = vector.broadcast %cst_18 : f32 to vector<2x32xf32>
    %c0_i32 = arith.constant 0 : i32
    %c6_i32 = arith.constant 6 : i32
    %12 = arith.addi %c0_i32, %c6_i32 : i32
    %c1_i32 = arith.constant 1 : i32
    %13:2 = scf.for %arg10 = %c0_i32 to %12 step %c1_i32 iter_args(%arg11 = %10, %arg12 = %11) -> (vector<2x32xf32>, vector<2x32xf32>)  : i32 {
      %14 = arith.index_cast %arg10 : i32 to index
      %c0_20 = arith.constant 0 : index
      %c0_21 = arith.constant 0 : index
      %15 = vector.load %arg0[%14, %c0_20, %c0_21] : memref<6x2x160xf32, #tpu.memory_space<vmem>>, vector<1x2x160xf32>
      %16 = vector.shape_cast %15 : vector<1x2x160xf32> to vector<2x160xf32>
      %cst_22 = arith.constant dense<0.000000e+00> : vector<2x160xf32>
      %17 = tpu.matmul %arg11, %0, %cst_22 {dimension_numbers = #tpu.dot_dimension_numbers<[1], [0], [0], [1], [0, 0, 1, 1], [], []>} : vector<2x32xf32>, vector<32x160xf32>, vector<2x160xf32> -> vector<2x160xf32>
      %18 = vector.extract_strided_slice %16 {offsets = [0, 0], sizes = [2, 128], strides = [1, 1]} : vector<2x160xf32> to vector<2x128xf32>
      %19 = vector.extract_strided_slice %17 {offsets = [0, 0], sizes = [2, 128], strides = [1, 1]} : vector<2x160xf32> to vector<2x128xf32>
      %20 = arith.addf %18, %19 : vector<2x128xf32>
      %21 = vector.broadcast %1 : vector<1x128xf32> to vector<2x128xf32>
      %22 = arith.addf %20, %21 : vector<2x128xf32>
      %23 = vector.extract_strided_slice %22 {offsets = [0, 0], sizes = [2, 32], strides = [1, 1]} : vector<2x128xf32> to vector<2x32xf32>
      %cst_23 = arith.constant 0.000000e+00 : f32
      %24 = vector.broadcast %cst_23 : f32 to vector<2x32xf32>
      %25 = arith.subf %24, %23 : vector<2x32xf32>
      %26 = math.exp %25 : vector<2x32xf32>
      %cst_24 = arith.constant 1.000000e+00 : f32
      %27 = vector.broadcast %cst_24 : f32 to vector<2x32xf32>
      %28 = arith.addf %27, %26 : vector<2x32xf32>
      %cst_25 = arith.constant 1.000000e+00 : f32
      %29 = vector.broadcast %cst_25 : f32 to vector<2x32xf32>
      %30 = arith.divf %29, %28 : vector<2x32xf32>
      %31 = vector.extract_strided_slice %22 {offsets = [0, 32], sizes = [2, 32], strides = [1, 1]} : vector<2x128xf32> to vector<2x32xf32>
      %cst_26 = arith.constant 0.000000e+00 : f32
      %32 = vector.broadcast %cst_26 : f32 to vector<2x32xf32>
      %33 = arith.subf %32, %31 : vector<2x32xf32>
      %34 = math.exp %33 : vector<2x32xf32>
      %cst_27 = arith.constant 1.000000e+00 : f32
      %35 = vector.broadcast %cst_27 : f32 to vector<2x32xf32>
      %36 = arith.addf %35, %34 : vector<2x32xf32>
      %cst_28 = arith.constant 1.000000e+00 : f32
      %37 = vector.broadcast %cst_28 : f32 to vector<2x32xf32>
      %38 = arith.divf %37, %36 : vector<2x32xf32>
      %39 = vector.extract_strided_slice %22 {offsets = [0, 64], sizes = [2, 32], strides = [1, 1]} : vector<2x128xf32> to vector<2x32xf32>
      %40 = math.tanh %39 : vector<2x32xf32>
      %41 = vector.extract_strided_slice %22 {offsets = [0, 96], sizes = [2, 32], strides = [1, 1]} : vector<2x128xf32> to vector<2x32xf32>
      %cst_29 = arith.constant 0.000000e+00 : f32
      %42 = vector.broadcast %cst_29 : f32 to vector<2x32xf32>
      %43 = arith.subf %42, %41 : vector<2x32xf32>
      %44 = math.exp %43 : vector<2x32xf32>
      %cst_30 = arith.constant 1.000000e+00 : f32
      %45 = vector.broadcast %cst_30 : f32 to vector<2x32xf32>
      %46 = arith.addf %45, %44 : vector<2x32xf32>
      %cst_31 = arith.constant 1.000000e+00 : f32
      %47 = vector.broadcast %cst_31 : f32 to vector<2x32xf32>
      %48 = arith.divf %47, %46 : vector<2x32xf32>
      %49 = arith.mulf %38, %arg12 : vector<2x32xf32>
      %50 = arith.mulf %30, %40 : vector<2x32xf32>
      %51 = arith.addf %49, %50 : vector<2x32xf32>
      %52 = math.tanh %51 : vector<2x32xf32>
      %53 = arith.mulf %48, %52 : vector<2x32xf32>
      %54 = vector.extract_strided_slice %16 {offsets = [0, 128], sizes = [2, 32], strides = [1, 1]} : vector<2x160xf32> to vector<2x32xf32>
      %55 = vector.extract_strided_slice %17 {offsets = [0, 128], sizes = [2, 32], strides = [1, 1]} : vector<2x160xf32> to vector<2x32xf32>
      %56 = arith.addf %54, %55 : vector<2x32xf32>
      %cst_32 = arith.constant 0.000000e+00 : f32
      %57 = vector.broadcast %cst_32 : f32 to vector<2x32xf32>
      %58 = arith.subf %57, %56 : vector<2x32xf32>
      %59 = math.exp %58 : vector<2x32xf32>
      %cst_33 = arith.constant 1.000000e+00 : f32
      %60 = vector.broadcast %cst_33 : f32 to vector<2x32xf32>
      %61 = arith.addf %60, %59 : vector<2x32xf32>
      %cst_34 = arith.constant 1.000000e+00 : f32
      %62 = vector.broadcast %cst_34 : f32 to vector<2x32xf32>
      %63 = arith.divf %62, %61 : vector<2x32xf32>
      %64 = arith.mulf %63, %52 : vector<2x32xf32>
      %cst_35 = arith.constant dense<0.000000e+00> : vector<2x49xf32>
      %65 = tpu.matmul %53, %2, %cst_35 {dimension_numbers = #tpu.dot_dimension_numbers<[1], [0], [0], [1], [0, 0, 1, 1], [], []>} : vector<2x32xf32>, vector<32x49xf32>, vector<2x49xf32> -> vector<2x49xf32>
      %66 = vector.shape_cast %65 : vector<2x49xf32> to vector<2x1x49xf32>
      %67 = vector.broadcast %66 : vector<2x1x49xf32> to vector<2x49x49xf32>
      %68 = arith.addf %7, %67 : vector<2x49x49xf32>
      %69 = math.tanh %68 : vector<2x49x49xf32>
      %70 = vector.broadcast %3 : vector<1x1x49xf32> to vector<2x49x49xf32>
      %71 = arith.mulf %69, %70 : vector<2x49x49xf32>
      %cst_36 = arith.constant dense<0.000000e+00> : vector<2x49xf32>
      %72 = vector.multi_reduction <add>, %71, %cst_36 [2] : vector<2x49x49xf32> to vector<2x49xf32>
      %cst_37 = arith.constant dense<0xFF800000> : vector<2xf32>
      %73 = vector.multi_reduction <maximumf>, %72, %cst_37 [1] : vector<2x49xf32> to vector<2xf32>
      %74 = vector.shape_cast %73 : vector<2xf32> to vector<2x1xf32>
      %75 = vector.broadcast %74 : vector<2x1xf32> to vector<2x49xf32>
      %76 = arith.subf %72, %75 : vector<2x49xf32>
      %77 = math.exp %76 : vector<2x49xf32>
      %cst_38 = arith.constant dense<0.000000e+00> : vector<2xf32>
      %78 = vector.multi_reduction <add>, %77, %cst_38 [1] : vector<2x49xf32> to vector<2xf32>
      %79 = vector.shape_cast %78 : vector<2xf32> to vector<2x1xf32>
      %80 = tpu.reciprocal %79 {approx = true} : vector<2x1xf32> -> vector<2x1xf32>
      %81 = vector.broadcast %80 : vector<2x1xf32> to vector<2x49xf32>
      %82 = arith.mulf %77, %81 : vector<2x49xf32>
      %83 = vector.shape_cast %82 : vector<2x49xf32> to vector<2x49x1xf32>
      %84 = vector.broadcast %83 : vector<2x49x1xf32> to vector<2x49x32xf32>
      %85 = arith.mulf %84, %9 : vector<2x49x32xf32>
      %cst_39 = arith.constant dense<0.000000e+00> : vector<2x32xf32>
      %86 = vector.multi_reduction <add>, %85, %cst_39 [1] : vector<2x49x32xf32> to vector<2x32xf32>
      %87 = vector.extract_strided_slice %82 {offsets = [0, 48], sizes = [2, 1], strides = [1, 1]} : vector<2x49xf32> to vector<2x1xf32>
      %88 = vector.broadcast %87 : vector<2x1xf32> to vector<2x32xf32>
      %89 = arith.mulf %88, %64 : vector<2x32xf32>
      %cst_40 = arith.constant 1.000000e+00 : f32
      %90 = vector.broadcast %cst_40 : f32 to vector<2x1xf32>
      %91 = arith.subf %90, %87 : vector<2x1xf32>
      %92 = vector.broadcast %91 : vector<2x1xf32> to vector<2x32xf32>
      %93 = arith.mulf %92, %86 : vector<2x32xf32>
      %94 = arith.addf %89, %93 : vector<2x32xf32>
      %95 = arith.addf %94, %53 : vector<2x32xf32>
      %cst_41 = arith.constant dense<0.000000e+00> : vector<2x64xf32>
      %96 = tpu.matmul %95, %4, %cst_41 {dimension_numbers = #tpu.dot_dimension_numbers<[1], [0], [0], [1], [0, 0, 1, 1], [], []>} : vector<2x32xf32>, vector<32x64xf32>, vector<2x64xf32> -> vector<2x64xf32>
      %97 = vector.broadcast %5 : vector<1x64xf32> to vector<2x64xf32>
      %98 = arith.addf %96, %97 : vector<2x64xf32>
      %99 = arith.index_cast %arg10 : i32 to index
      %c0_42 = arith.constant 0 : index
      %c0_43 = arith.constant 0 : index
      %100 = vector.load %arg9[%99, %c0_42, %c0_43] : memref<6x2x64xf32, #tpu.memory_space<vmem>>, vector<1x2x64xf32>
      %101 = vector.shape_cast %100 : vector<1x2x64xf32> to vector<2x64xf32>
      %102 = vector.shape_cast %98 : vector<2x64xf32> to vector<1x2x64xf32>
      tpu.vector_store %arg9[%99, %c0_42, %c0_43], %102 {strides = array<i32>} : memref<6x2x64xf32, #tpu.memory_space<vmem>>, vector<1x2x64xf32>,
      scf.yield %53, %51 : vector<2x32xf32>, vector<2x32xf32>
    }
    %c6_i32_19 = arith.constant 6 : i32
    return
  }
}

</mosaic_0001>

<llo_original>
// kernel: _forward_core.3
$region0: #{_forward_core.3}
  #allocation0 [shape = 'u32[]', space=smem, size = 0x4, offset = 0x4, fixed_abs, tag = 'smem constant byte address 0x4 - core index']
  #allocation1 [shape = 'u32[144,128]{1,0:T(1,128)}', space=vmem, size = 0x12000, scoped, tag = 'internal scratch']
  %s0 = inlined_call_operand.vmem [shape: f32[6,2,160], index: 0, kind: input, shape index: {}]
  %s1 = inlined_call_operand.vmem [shape: bf16[2,49,32], index: 1, kind: input, shape index: {}]
  %s2 = inlined_call_operand.vmem [shape: bf16[2,49,49], index: 2, kind: input, shape index: {}]
  %s3 = inlined_call_operand.vmem [shape: f32[32,160], index: 3, kind: input, shape index: {}]
  %s4 = inlined_call_operand.vmem [shape: f32[1,128], index: 4, kind: input, shape index: {}]
  %s5 = inlined_call_operand.vmem [shape: f32[32,49], index: 5, kind: input, shape index: {}]
  %s6 = inlined_call_operand.vmem [shape: f32[1,1,49], index: 6, kind: input, shape index: {}]
  %s7 = inlined_call_operand.vmem [shape: f32[32,64], index: 7, kind: input, shape index: {}]
  %s8 = inlined_call_operand.vmem [shape: f32[1,64], index: 8, kind: input, shape index: {}]
  %s9 = inlined_call_operand.hbm [shape: f32[6,2,64], index: 9, kind: output, shape index: {}]
  %s10 = sld [smem:[#allocation0]]
  $region53: #{_forward_core.3} parent=0
    _
  %s12 = ssub.s32 1, %s10
  %s13 = scalar_select 0, %s12, %s10
  $region1: #{_forward_core.3} parent=0
    #allocation2 [shape = 'u8[6144]{0}', space=vmem, size = 0x1800, scoped, tag = 'output window, operand 0, single buffered']
    #allocation3 [shape = 's32[1]{0}', space=sflag, size = 0x4, scoped, tag = 'scoped memory for _forward_core.3']
    %14 = vsyncpa [#allocation3], 0
    // Predicated region
    $region2: #{_forward_core.3} parent=1 // pred_check
      _
    $region3: #{_forward_core.3} parent=1 // pred_check_branch
      %16 = sbr.rel (0) target = $region5
    $region4: #{_forward_core.3} parent=1 // pred_region
      _
    $region5: #{_forward_core.3} parent=1 // pred_fallthru
      _
    // Predicated region
    $region6: #{_forward_core.3} parent=1 // pred_check
      _
    $region7: #{_forward_core.3} parent=1 // pred_check_branch
      %18 = sbr.rel (0) target = $region9
    $region8: #{_forward_core.3} parent=1 // pred_region
      _
    $region9: #{_forward_core.3} parent=1 // pred_fallthru
      _
    // Predicated region
    $region10: #{_forward_core.3} parent=1 // pred_check
      _
    $region11: #{_forward_core.3} parent=1 // pred_check_branch
      %20 = sbr.rel (0) target = $region13
    $region12: #{_forward_core.3} parent=1 // pred_region
      _
    $region13: #{_forward_core.3} parent=1 // pred_fallthru
      _
    // Predicated region
    $region14: #{_forward_core.3} parent=1 // pred_check
      _
    $region15: #{_forward_core.3} parent=1 // pred_check_branch
      %22 = sbr.rel (0) target = $region17
    $region16: #{_forward_core.3} parent=1 // pred_region
      _
    $region17: #{_forward_core.3} parent=1 // pred_fallthru
      _
    // Predicated region
    $region18: #{_forward_core.3} parent=1 // pred_check
      _
    $region19: #{_forward_core.3} parent=1 // pred_check_branch
      %24 = sbr.rel (0) target = $region21
    $region20: #{_forward_core.3} parent=1 // pred_region
      _
    $region21: #{_forward_core.3} parent=1 // pred_fallthru
      _
    // Predicated region
    $region22: #{_forward_core.3} parent=1 // pred_check
      _
    $region23: #{_forward_core.3} parent=1 // pred_check_branch
      %26 = sbr.rel (0) target = $region25
    $region24: #{_forward_core.3} parent=1 // pred_region
      _
    $region25: #{_forward_core.3} parent=1 // pred_fallthru
      _
    // Predicated region
    $region26: #{_forward_core.3} parent=1 // pred_check
      _
    $region27: #{_forward_core.3} parent=1 // pred_check_branch
      %28 = sbr.rel (0) target = $region29
    $region28: #{_forward_core.3} parent=1 // pred_region
      _
    $region29: #{_forward_core.3} parent=1 // pred_fallthru
      _
    // Predicated region
    $region30: #{_forward_core.3} parent=1 // pred_check
      _
    $region31: #{_forward_core.3} parent=1 // pred_check_branch
      %30 = sbr.rel (0) target = $region33
    $region32: #{_forward_core.3} parent=1 // pred_region
      _
    $region33: #{_forward_core.3} parent=1 // pred_fallthru
      _
    // Predicated region
    $region34: #{_forward_core.3} parent=1 // pred_check
      _
    $region35: #{_forward_core.3} parent=1 // pred_check_branch
      %32 = sbr.rel (0) target = $region37
    $region36: #{_forward_core.3} parent=1 // pred_region
      _
    $region37: #{_forward_core.3} parent=1 // pred_fallthru
      _
    %v33 = vld [vmem:[%s3] sm:$0xff]
    %v34 = vld [vmem:[%s3 + $0x8] sm:$0xff]
    %v35 = vld [vmem:[%s3 + $0x10] sm:$0xff]
    %v36 = vld [vmem:[%s3 + $0x18] sm:$0xff]
    %v37 = vld [vmem:[%s3 + $0x20] sm:$0xff]
    %v38 = vld [vmem:[%s3 + $0x28] sm:$0xff]
    %v39 = vld [vmem:[%s3 + $0x30] sm:$0xff]
    %v40 = vld [vmem:[%s3 + $0x38] sm:$0xff]
    %v41 = vld [vmem:[%s4] sm:$0x1]
    %v42 = vld [vmem:[%s5] sm:$0xff]
    %v43 = vld [vmem:[%s5 + $0x8] sm:$0xff]
    %v44 = vld [vmem:[%s5 + $0x10] sm:$0xff]
    %v45 = vld [vmem:[%s5 + $0x18] sm:$0xff]
    %v46 = vld [vmem:[%s6] sm:$0x1]
    %v47 = vld [vmem:[%s7] sm:$0xff]
    %v48 = vld [vmem:[%s7 + $0x8] sm:$0xff]
    %v49 = vld [vmem:[%s7 + $0x10] sm:$0xff]
    %v50 = vld [vmem:[%s7 + $0x18] sm:$0xff]
    %v51 = vld [vmem:[%s8] sm:$0x1]
    %v52 = vld [vmem:[%s2] sm:$0xf]
    %v53 = vld [vmem:[%s2 + $0x4] sm:$0xf]
    %v54 = vld [vmem:[%s2 + $0x8] sm:$0xf]
    %v55 = vld [vmem:[%s2 + $0xc] sm:$0xf]
    %v56 = vld [vmem:[%s2 + $0x10] sm:$0xf]
    %v57 = vld [vmem:[%s2 + $0x14] sm:$0xf]
    %v58 = vld [vmem:[%s2 + $0x18] sm:$0x1]
    %v59 = vld [vmem:[%s2 + $0x1c] sm:$0xf]
    %v60 = vld [vmem:[%s2 + $0x20] sm:$0xf]
    %v61 = vld [vmem:[%s2 + $0x24] sm:$0xf]
    %v62 = vld [vmem:[%s2 + $0x28] sm:$0xf]
    %v63 = vld [vmem:[%s2 + $0x2c] sm:$0xf]
    %v64 = vld [vmem:[%s2 + $0x30] sm:$0xf]
    %v65 = vld [vmem:[%s2 + $0x34] sm:$0x1]
    %v66 = vunpack.c.l.bf16 %v52
    %v67 = vunpack.c.l.bf16 %v53
    %v68 = vunpack.c.l.bf16 %v54
    %v69 = vunpack.c.l.bf16 %v55
    %v70 = vunpack.c.l.bf16 %v56
    %v71 = vunpack.c.l.bf16 %v57
    %v72 = vunpack.c.l.bf16 %v58
    %v73 = vunpack.c.l.bf16 %v59
    %v74 = vunpack.c.l.bf16 %v60
    %v75 = vunpack.c.l.bf16 %v61
    %v76 = vunpack.c.l.bf16 %v62
    %v77 = vunpack.c.l.bf16 %v63
    %v78 = vunpack.c.l.bf16 %v64
    %v79 = vunpack.c.l.bf16 %v65
    %v80 = vld [vmem:[%s1] sm:$0xf]
    %v81 = vld [vmem:[%s1 + $0x4] sm:$0xf]
    %v82 = vld [vmem:[%s1 + $0x8] sm:$0xf]
    %v83 = vld [vmem:[%s1 + $0xc] sm:$0xf]
    %v84 = vld [vmem:[%s1 + $0x10] sm:$0xf]
    %v85 = vld [vmem:[%s1 + $0x14] sm:$0xf]
    %v86 = vld [vmem:[%s1 + $0x18] sm:$0x1]
    %v87 = vld [vmem:[%s1 + $0x1c] sm:$0xf]
    %v88 = vld [vmem:[%s1 + $0x20] sm:$0xf]
    %v89 = vld [vmem:[%s1 + $0x24] sm:$0xf]
    %v90 = vld [vmem:[%s1 + $0x28] sm:$0xf]
    %v91 = vld [vmem:[%s1 + $0x2c] sm:$0xf]
    %v92 = vld [vmem:[%s1 + $0x30] sm:$0xf]
    %v93 = vld [vmem:[%s1 + $0x34] sm:$0x1]
    %v94 = vunpack.c.l.bf16 %v80
    %v95 = vunpack.c.l.bf16 %v81
    %v96 = vunpack.c.l.bf16 %v82
    %v97 = vunpack.c.l.bf16 %v83
    %v98 = vunpack.c.l.bf16 %v84
    %v99 = vunpack.c.l.bf16 %v85
    %v100 = vunpack.c.l.bf16 %v86
    %v101 = vunpack.c.l.bf16 %v87
    %v102 = vunpack.c.l.bf16 %v88
    %v103 = vunpack.c.l.bf16 %v89
    %v104 = vunpack.c.l.bf16 %v90
    %v105 = vunpack.c.l.bf16 %v91
    %v106 = vunpack.c.l.bf16 %v92
    %v107 = vunpack.c.l.bf16 %v93
    loop: start=0, step=1, limit=6
    $region38: #{_forward_core.3} parent=1 // loop_pre_header
      _
    $region39: #{_forward_core.3} parent=1 // loop_header
      %s109 = sphi 0, %s113
      %p110 = scmp.ge.s32.totalorder %s109, 6
      %v114 = vphi 0.0, %v235
      %v115 = vphi 0.0, %v229
    $region40: #{_forward_core.3} parent=1 // loop_header_branch
      %112 = sbr.rel (%p110) target = $region44
    $region41: #{_forward_core.3} parent=1 // loop_body
      %s116 = smul.u32 %s109, 2
      %s117 = smul.addr %s116, 2
      %s118 = scalar_lea.vmem %s0, %s117
      %v119 = vld [vmem:[%s118] sm:$0xf]
      %v122 = vunpack.c.l.s4 1983009808
      %v123 = vunpack.c.0.s8 %v122
      %v124 = vlaneseq
      %v125 = vshrl.u32 %v124, 7
      %v126 = vsub.s32 %v123, %v125
      %v127 = vrot.slane %v114, %v126
      %128 = vrot.lane.b32.xlu0 %v127, 32
      %v129 = vpop.permute.xlu0 %128
      %vm130 = vcmask 261120
      %v131 = vsel %vm130, %v129, 0
      %133 = vmatprep.subr.mxu0 0.0
      %134 = vmatpush1.msra.mxu0 0.0
      %135 = vmatprep.subr.mxu0 0.0
      %136 = vmatpush1.msra.mxu0 0.0
      %137 = vmatprep.subr.mxu0 0.0
      %138 = vmatpush1.msra.mxu0 0.0
      %139 = vmatprep.subr.mxu0 0.0
      %140 = vmatpush1.msra.mxu0 0.0
      %141 = vmatprep.subr.mxu0 0.0
      %142 = vmatpush1.msra.mxu0 0.0
      %143 = vmatprep.subr.mxu0 0.0
      %144 = vmatpush1.msra.mxu0 0.0
      %145 = vmatprep.subr.mxu0 0.0
      %146 = vmatpush1.msra.mxu0 0.0
      %147 = vmatprep.subr.mxu0 0.0
      %148 = vmatpush1.msra.mxu0 0.0
      %149 = vmatprep.subr.mxu0 0.0
      %150 = vmatpush1.msra.mxu0 0.0
      %151 = vmatprep.subr.mxu0 0.0
      %152 = vmatpush1.msra.mxu0 0.0
      %153 = vmatprep.subr.mxu0 0.0
      %154 = vmatpush1.msra.mxu0 0.0
      %155 = vmatprep.subr.mxu0 0.0
      %156 = vmatpush1.msra.mxu0 0.0
      %157 = vmatprep.subr.mxu0 %v40
      %158 = vmatpush1.msra.mxu0 %v39
      %159 = vmatprep.subr.mxu0 %v38
      %160 = vmatpush1.msra.mxu0 %v37
      %161 = vmatprep.subr.mxu0 %v36
      %162 = vmatpush1.msra.mxu0 %v35
      %163 = vmatprep.subr.mxu0 %v34
      %164 = vmatpush1.msra.mxu0 %v33
      %165 = vmatprep.subr.mxu0 0.0
      %166 = vmatpush2.msra.mxu0 0.0
      %167 = vmatprep.subr.mxu0 0.0
      %168 = vmatpush2.msra.mxu0 0.0
      %169 = vmatprep.subr.mxu0 0.0
      %170 = vmatpush2.msra.mxu0 0.0
      %171 = vmatprep.subr.mxu0 0.0
      %172 = vmatpush2.msra.mxu0 0.0
      %173 = vmatprep.subr.mxu0 0.0
      %174 = vmatpush2.msra.mxu0 0.0
      %175 = vmatprep.subr.mxu0 0.0
      %176 = vmatpush2.msra.mxu0 0.0
      %177 = vmatprep.subr.mxu0 0.0
      %178 = vmatpush2.msra.mxu0 0.0
      %179 = vmatprep.subr.mxu0 0.0
      %180 = vmatpush2.msra.mxu0 0.0
      %181 = vmatprep.subr.mxu0 0.0
      %182 = vmatpush2.msra.mxu0 0.0
      %183 = vmatprep.subr.mxu0 0.0
      %184 = vmatpush2.msra.mxu0 0.0
      %185 = vmatprep.subr.mxu0 0.0
      %186 = vmatpush2.msra.mxu0 0.0
      %187 = vmatprep.subr.mxu0 0.0
      %188 = vmatpush2.msra.mxu0 0.0
      %189 = vmatprep.subr.mxu0 0.0
      %190 = vmatpush2.msra.mxu0 0.0
      %191 = vmatprep.subr.mxu0 0.0
      %192 = vmatpush2.msra.mxu0 0.0
      %193 = vmatprep.subr.mxu0 0.0
      %194 = vmatpush2.msra.mxu0 0.0
      %195 = vmatprep.subr.mxu0 0.0
      %196 = vmatpush2.msra.mxu0 0.0
      %197 = vmatprep.mubr.f32.mxu0 0.0
      %198 = vmatmul.mubr.f32.gmra.mxu0 %v131
      %v199 = vpop.f32.mrf.mxu0
      %v200 = vadd.f32 0.0, %v199
      %v201 = vpop.f32.mrf.mxu0
      %v202 = vadd.f32 0.0, %v201
      %203 = vdwg.mxu0
      %v204 = vadd.f32 %v119, %v200
      %v206 = vlaneseq
      %v207 = vshrl.u32 %v206, 7
      %v208 = vsub.s32 0, %v207
      %v209 = vrot.slane %v41, %v208
      %v211 = vadd.f32 %v204, %v209
      %v212 = vsub.f32 0.0, %v211
      %v213 = vmul.f32 %v212, 1.442695
      %v214 = vpow.pop %v213
      %v215 = vadd.f32 %v214, 1.0
      %v216 = vrcp.pop %v215
      %v217 = vmul.f32 1.0, %v216
      %v218 = vtanh.pop %v211
      %v219 = vmul.f32 %v217, %v115
      %221 = vrot.lane.b32.xlu0 %v218, 64
      %v222 = vpop.permute.xlu0 %221
      %v224 = vmul.f32 %v217, %v222
      %226 = vrot.lane.b32.xlu0 %v224, 32
      %v227 = vpop.permute.xlu0 %226
      %v229 = vadd.f32 %v219, %v227
      %v230 = vtanh.pop %v229
      %232 = vrot.lane.b32.xlu0 %v230, 64
      %v233 = vpop.permute.xlu0 %232
      %v235 = vmul.f32 %v217, %v233
      %v237 = vrot.slane %v119, 2
      %v239 = vadd.f32 %v237, %v202
      %v240 = vsub.f32 0.0, %v239
      %v241 = vmul.f32 %v240, 1.442695
      %v242 = vpow.pop %v241
      %v243 = vadd.f32 %v242, 1.0
      %v244 = vrcp.pop %v243
      %v245 = vmul.f32 1.0, %v244
      %246 = vrot.lane.b32.xlu0 %v230, 96
      %v247 = vpop.permute.xlu0 %246
      %v249 = vmul.f32 %v245, %v247
      %v252 = vunpack.c.l.s4 1983009808
      %v253 = vunpack.c.0.s8 %v252
      %v254 = vlaneseq
      %v255 = vshrl.u32 %v254, 7
      %v256 = vsub.s32 %v253, %v255
      %v257 = vrot.slane %v235, %v256
      %258 = vrot.lane.b32.xlu0 %v257, 32
      %v259 = vpop.permute.xlu0 %258
      %v260 = vsel %vm130, %v259, 0
      %262 = vmatprep.subr.mxu0 0.0
      %263 = vmatpush1.msra.mxu0 0.0
      %264 = vmatprep.subr.mxu0 0.0
      %265 = vmatpush1.msra.mxu0 0.0
      %266 = vmatprep.subr.mxu0 0.0
      %267 = vmatpush1.msra.mxu0 0.0
      %268 = vmatprep.subr.mxu0 0.0
      %269 = vmatpush1.msra.mxu0 0.0
      %270 = vmatprep.subr.mxu0 0.0
      %271 = vmatpush1.msra.mxu0 0.0
      %272 = vmatprep.subr.mxu0 0.0
      %273 = vmatpush1.msra.mxu0 0.0
      %274 = vmatprep.subr.mxu0 0.0
      %275 = vmatpush1.msra.mxu0 0.0
      %276 = vmatprep.subr.mxu0 0.0
      %277 = vmatpush1.msra.mxu0 0.0
      %278 = vmatprep.subr.mxu0 0.0
      %279 = vmatpush1.msra.mxu0 0.0
      %280 = vmatprep.subr.mxu0 0.0
      %281 = vmatpush1.msra.mxu0 0.0
      %282 = vmatprep.subr.mxu0 0.0
      %283 = vmatpush1.msra.mxu0 0.0
      %284 = vmatprep.subr.mxu0 0.0
      %285 = vmatpush1.msra.mxu0 0.0
      %286 = vmatprep.subr.mxu0 0.0
      %287 = vmatpush1.msra.mxu0 %v45
      %288 = vmatprep.subr.mxu0 0.0
      %289 = vmatpush1.msra.mxu0 %v44
      %290 = vmatprep.subr.mxu0 0.0
      %291 = vmatpush1.msra.mxu0 %v43
      %292 = vmatprep.subr.mxu0 0.0
      %293 = vmatpush1.msra.mxu0 %v42
      %294 = vmatprep.subr.mxu0 0.0
      %295 = vmatpush2.msra.mxu0 0.0
      %296 = vmatprep.subr.mxu0 0.0
      %297 = vmatpush2.msra.mxu0 0.0
      %298 = vmatprep.subr.mxu0 0.0
      %299 = vmatpush2.msra.mxu0 0.0
      %300 = vmatprep.subr.mxu0 0.0
      %301 = vmatpush2.msra.mxu0 0.0
      %302 = vmatprep.subr.mxu0 0.0
      %303 = vmatpush2.msra.mxu0 0.0
      %304 = vmatprep.subr.mxu0 0.0
      %305 = vmatpush2.msra.mxu0 0.0
      %306 = vmatprep.subr.mxu0 0.0
      %307 = vmatpush2.msra.mxu0 0.0
      %308 = vmatprep.subr.mxu0 0.0
      %309 = vmatpush2.msra.mxu0 0.0
      %310 = vmatprep.subr.mxu0 0.0
      %311 = vmatpush2.msra.mxu0 0.0
      %312 = vmatprep.subr.mxu0 0.0
      %313 = vmatpush2.msra.mxu0 0.0
      %314 = vmatprep.subr.mxu0 0.0
      %315 = vmatpush2.msra.mxu0 0.0
      %316 = vmatprep.subr.mxu0 0.0
      %317 = vmatpush2.msra.mxu0 0.0
      %318 = vmatprep.subr.mxu0 0.0
      %319 = vmatpush2.msra.mxu0 0.0
      %320 = vmatprep.subr.mxu0 0.0
      %321 = vmatpush2.msra.mxu0 0.0
      %322 = vmatprep.subr.mxu0 0.0
      %323 = vmatpush2.msra.mxu0 0.0
      %324 = vmatprep.subr.mxu0 0.0
      %325 = vmatpush2.msra.mxu0 0.0
      %326 = vmatprep.mubr.f32.mxu0 0.0
      %327 = vmatmul.mubr.f32.gmra.mxu0 %v260
      %v328 = vpop.f32.mrf.mxu0
      %v329 = vadd.f32 0.0, %v328
      %v330 = vpop.f32.mrf.mxu0
      %331 = vdwg.mxu0
      %v334 = vunpack.c.l.s4 1966171168
      %v335 = vunpack.c.0.s8 %v334
      %v336 = vlaneseq
      %v337 = vshrl.u32 %v336, 7
      %v338 = vsub.s32 %v335, %v337
      %v339 = vrot.slane %v329, %v338
      %v340 = vcombine.high %v339, %v339
      %v342 = vunpack.c.l.s4 1966171168
      %v343 = vunpack.c.0.s8 %v342
      %v344 = vlaneseq
      %v345 = vshrl.u32 %v344, 7
      %v346 = vsub.s32 %v343, %v345
      %v347 = vrot.slane %v339, %v346
      %v349 = vunpack.c.l.s4 1966171168
      %v350 = vunpack.c.0.s8 %v349
      %v351 = vlaneseq
      %v352 = vshrl.u32 %v351, 7
      %v353 = vsub.s32 %v350, %v352
      %v354 = vrot.slane %v340, %v353
      %v355 = vlaneseq
      %v356 = vshrl.u32 %v355, 7
      %v357 = vsub.s32 0, %v356
      %v358 = vrot.slane %v347, %v357
      %v359 = vlaneseq
      %v360 = vshrl.u32 %v359, 7
      %v361 = vsub.s32 0, %v360
      %v362 = vrot.slane %v354, %v361
      %v365 = vadd.f32 %v66, %v358
      %v366 = vadd.f32 %v67, %v358
      %v367 = vadd.f32 %v68, %v358
      %v368 = vadd.f32 %v69, %v358
      %v369 = vadd.f32 %v70, %v358
      %v370 = vadd.f32 %v71, %v358
      %v371 = vadd.f32 %v72, %v358
      %v372 = vadd.f32 %v73, %v362
      %v373 = vadd.f32 %v74, %v362
      %v374 = vadd.f32 %v75, %v362
      %v375 = vadd.f32 %v76, %v362
      %v376 = vadd.f32 %v77, %v362
      %v377 = vadd.f32 %v78, %v362
      %v378 = vadd.f32 %v79, %v362
      %v379 = vtanh.pop %v365
      %v380 = vtanh.pop %v366
      %v381 = vtanh.pop %v367
      %v382 = vtanh.pop %v368
      %v383 = vtanh.pop %v369
      %v384 = vtanh.pop %v370
      %v385 = vtanh.pop %v371
      %v386 = vtanh.pop %v372
      %v387 = vtanh.pop %v373
      %v388 = vtanh.pop %v374
      %v389 = vtanh.pop %v375
      %v390 = vtanh.pop %v376
      %v391 = vtanh.pop %v377
      %v392 = vtanh.pop %v378
      %v394 = vlaneseq
      %v395 = vshrl.u32 %v394, 7
      %v396 = vsub.s32 0, %v395
      %v397 = vrot.slane %v46, %v396
      %v399 = vmul.f32 %v379, %v397
      %v400 = vmul.f32 %v380, %v397
      %v401 = vmul.f32 %v381, %v397
      %v402 = vmul.f32 %v382, %v397
      %v403 = vmul.f32 %v383, %v397
      %v404 = vmul.f32 %v384, %v397
      %v405 = vmul.f32 %v385, %v397
      %v406 = vmul.f32 %v386, %v397
      %v407 = vmul.f32 %v387, %v397
      %v408 = vmul.f32 %v388, %v397
      %v409 = vmul.f32 %v389, %v397
      %v410 = vmul.f32 %v390, %v397
      %v411 = vmul.f32 %v391, %v397
      %v412 = vmul.f32 %v392, %v397
      %vm413 = vcmask 400384
      %v414 = vsel %vm413, %v399, 0.0
      %415 = vadd.xlane.f32.xlu0 %v414
      %v416 = vpop.xlane.xlu0 %415
      %v417 = vsel %vm413, %v400, 0.0
      %418 = vadd.xlane.f32.xlu0 %v417
      %v419 = vpop.xlane.xlu0 %418
      %v420 = vsel %vm413, %v401, 0.0
      %421 = vadd.xlane.f32.xlu0 %v420
      %v422 = vpop.xlane.xlu0 %421
      %v423 = vsel %vm413, %v402, 0.0
      %424 = vadd.xlane.f32.xlu0 %v423
      %v425 = vpop.xlane.xlu0 %424
      %v426 = vsel %vm413, %v403, 0.0
      %427 = vadd.xlane.f32.xlu0 %v426
      %v428 = vpop.xlane.xlu0 %427
      %v429 = vsel %vm413, %v404, 0.0
      %430 = vadd.xlane.f32.xlu0 %v429
      %v431 = vpop.xlane.xlu0 %430
      %vm432 = vcmask 393216
      %v433 = vsel %vm432, %v405, 0.0
      %434 = vadd.xlane.f32.xlu0 %v433
      %v435 = vpop.xlane.xlu0 %434
      %v436 = vsel %vm413, %v406, 0.0
      %437 = vadd.xlane.f32.xlu0 %v436
      %v438 = vpop.xlane.xlu0 %437
      %v439 = vsel %vm413, %v407, 0.0
      %440 = vadd.xlane.f32.xlu0 %v439
      %v441 = vpop.xlane.xlu0 %440
      %v442 = vsel %vm413, %v408, 0.0
      %443 = vadd.xlane.f32.xlu0 %v442
      %v444 = vpop.xlane.xlu0 %443
      %v445 = vsel %vm413, %v409, 0.0
      %446 = vadd.xlane.f32.xlu0 %v445
      %v447 = vpop.xlane.xlu0 %446
      %v448 = vsel %vm413, %v410, 0.0
      %449 = vadd.xlane.f32.xlu0 %v448
      %v450 = vpop.xlane.xlu0 %449
      %v451 = vsel %vm413, %v411, 0.0
      %452 = vadd.xlane.f32.xlu0 %v451
      %v453 = vpop.xlane.xlu0 %452
      %v454 = vsel %vm432, %v412, 0.0
      %455 = vadd.xlane.f32.xlu0 %v454
      %v456 = vpop.xlane.xlu0 %455
      %v471 = vlaneseq
      %v472 = vand.u32 %v471, 127
      %v473 = vlaneseq
      %v474 = vshrl.u32 %v473, 7
      %v475 = vsub.s32 %v472, %v474
      %v476 = vrot.slane %v416, %v475
      %v477 = vadd.s32 %v472, 4294967288
      %v478 = vlaneseq
      %v479 = vshrl.u32 %v478, 7
      %v480 = vsub.s32 %v477, %v479
      %v481 = vrot.slane %v419, %v480
      %vm482 = vcmask 130112
      %v483 = vsel %vm482, %v481, %v476
      %v484 = vadd.s32 %v472, 4294967280
      %v485 = vlaneseq
      %v486 = vshrl.u32 %v485, 7
      %v487 = vsub.s32 %v484, %v486
      %v488 = vrot.slane %v422, %v487
      %vm489 = vcmask 195712
      %v490 = vsel %vm489, %v488, %v483
      %v491 = vadd.s32 %v472, 4294967272
      %v492 = vlaneseq
      %v493 = vshrl.u32 %v492, 7
      %v494 = vsub.s32 %v491, %v493
      %v495 = vrot.slane %v425, %v494
      %vm496 = vcmask 261312
      %v497 = vsel %vm496, %v495, %v490
      %v498 = vadd.s32 %v472, 4294967264
      %v499 = vlaneseq
      %v500 = vshrl.u32 %v499, 7
      %v501 = vsub.s32 %v498, %v500
      %v502 = vrot.slane %v428, %v501
      %vm503 = vcmask 326912
      %v504 = vsel %vm503, %v502, %v497
      %v505 = vadd.s32 %v472, 4294967256
      %v506 = vlaneseq
      %v507 = vshrl.u32 %v506, 7
      %v508 = vsub.s32 %v505, %v507
      %v509 = vrot.slane %v431, %v508
      %vm510 = vcmask 392512
      %v511 = vsel %vm510, %v509, %v504
      %v512 = vadd.s32 %v472, 4294967248
      %v513 = vlaneseq
      %v514 = vshrl.u32 %v513, 7
      %v515 = vsub.s32 %v512, %v514
      %v516 = vrot.slane %v435, %v515
      %vm517 = vcmask 458112
      %v518 = vsel %vm517, %v516, %v511
      %v519 = vlaneseq
      %v520 = vshrl.u32 %v519, 7
      %v521 = vsub.s32 %v472, %v520
      %v522 = vrot.slane %v438, %v521
      %v523 = vlaneseq
      %v524 = vshrl.u32 %v523, 7
      %v525 = vsub.s32 %v477, %v524
      %v526 = vrot.slane %v441, %v525
      %v527 = vsel %vm482, %v526, %v522
      %v528 = vlaneseq
      %v529 = vshrl.u32 %v528, 7
      %v530 = vsub.s32 %v484, %v529
      %v531 = vrot.slane %v444, %v530
      %v532 = vsel %vm489, %v531, %v527
      %v533 = vlaneseq
      %v534 = vshrl.u32 %v533, 7
      %v535 = vsub.s32 %v491, %v534
      %v536 = vrot.slane %v447, %v535
      %v537 = vsel %vm496, %v536, %v532
      %v538 = vlaneseq
      %v539 = vshrl.u32 %v538, 7
      %v540 = vsub.s32 %v498, %v539
      %v541 = vrot.slane %v450, %v540
      %v542 = vsel %vm503, %v541, %v537
      %v543 = vlaneseq
      %v544 = vshrl.u32 %v543, 7
      %v545 = vsub.s32 %v505, %v544
      %v546 = vrot.slane %v453, %v545
      %v547 = vsel %vm510, %v546, %v542
      %v548 = vlaneseq
      %v549 = vshrl.u32 %v548, 7
      %v550 = vsub.s32 %v512, %v549
      %v551 = vrot.slane %v456, %v550
      %v552 = vsel %vm517, %v551, %v547
      %vm553 = vcmask 1041409
      %v554 = vsel %vm553, %v552, %v518
      %vm556 = vcmask 394240
      %v557 = vsel %vm556, %v554, -inf
      %558 = vmax.xlane.f32.xlu0 %v557
      %v559 = vpop.xlane.xlu0 %558
      %v561 = vlaneseq
      %v562 = vshrl.u32 %v561, 7
      %v563 = vsub.s32 0, %v562
      %v564 = vrot.slane %v559, %v563
      %v565 = vlaneseq
      %v566 = vshrl.u32 %v565, 7
      %v567 = vsub.s32 1, %v566
      %v568 = vrot.slane %v559, %v567
      %v571 = vsub.f32 %v416, %v564
      %v572 = vsub.f32 %v419, %v564
      %v573 = vsub.f32 %v422, %v564
      %v574 = vsub.f32 %v425, %v564
      %v575 = vsub.f32 %v428, %v564
      %v576 = vsub.f32 %v431, %v564
      %v577 = vsub.f32 %v435, %v564
      %v578 = vsub.f32 %v438, %v568
      %v579 = vsub.f32 %v441, %v568
      %v580 = vsub.f32 %v444, %v568
      %v581 = vsub.f32 %v447, %v568
      %v582 = vsub.f32 %v450, %v568
      %v583 = vsub.f32 %v453, %v568
      %v584 = vsub.f32 %v456, %v568
      %v585 = vmul.f32 %v571, 1.442695
      %v586 = vpow.pop %v585
      %v587 = vmul.f32 %v572, 1.442695
      %v588 = vpow.pop %v587
      %v589 = vmul.f32 %v573, 1.442695
      %v590 = vpow.pop %v589
      %v591 = vmul.f32 %v574, 1.442695
      %v592 = vpow.pop %v591
      %v593 = vmul.f32 %v575, 1.442695
      %v594 = vpow.pop %v593
      %v595 = vmul.f32 %v576, 1.442695
      %v596 = vpow.pop %v595
      %v597 = vmul.f32 %v577, 1.442695
      %v598 = vpow.pop %v597
      %v599 = vmul.f32 %v578, 1.442695
      %v600 = vpow.pop %v599
      %v601 = vmul.f32 %v579, 1.442695
      %v602 = vpow.pop %v601
      %v603 = vmul.f32 %v580, 1.442695
      %v604 = vpow.pop %v603
      %v605 = vmul.f32 %v581, 1.442695
      %v606 = vpow.pop %v605
      %v607 = vmul.f32 %v582, 1.442695
      %v608 = vpow.pop %v607
      %v609 = vmul.f32 %v583, 1.442695
      %v610 = vpow.pop %v609
      %v611 = vmul.f32 %v584, 1.442695
      %v612 = vpow.pop %v611
      %627 = vset.pattern.permute.xlu0 0
      %628 = vperm.xlu0 %627, %v586
      %v629 = vpop.permute.xlu0 %628
      %630 = vset.pattern.permute.xlu0 0
      %631 = vperm.xlu0 %630, %v588
      %v632 = vpop.permute.xlu0 %631
      %633 = vset.pattern.permute.xlu0 0
      %634 = vperm.xlu0 %633, %v590
      %v635 = vpop.permute.xlu0 %634
      %636 = vset.pattern.permute.xlu0 0
      %637 = vperm.xlu0 %636, %v592
      %v638 = vpop.permute.xlu0 %637
      %639 = vset.pattern.permute.xlu0 0
      %640 = vperm.xlu0 %639, %v594
      %v641 = vpop.permute.xlu0 %640
      %642 = vset.pattern.permute.xlu0 0
      %643 = vperm.xlu0 %642, %v596
      %v644 = vpop.permute.xlu0 %643
      %645 = vset.pattern.permute.xlu0 0
      %646 = vperm.xlu0 %645, %v598
      %v647 = vpop.permute.xlu0 %646
      %648 = vset.pattern.permute.xlu0 0
      %649 = vperm.xlu0 %648, %v600
      %v650 = vpop.permute.xlu0 %649
      %651 = vset.pattern.permute.xlu0 0
      %652 = vperm.xlu0 %651, %v602
      %v653 = vpop.permute.xlu0 %652
      %654 = vset.pattern.permute.xlu0 0
      %655 = vperm.xlu0 %654, %v604
      %v656 = vpop.permute.xlu0 %655
      %657 = vset.pattern.permute.xlu0 0
      %658 = vperm.xlu0 %657, %v606
      %v659 = vpop.permute.xlu0 %658
      %660 = vset.pattern.permute.xlu0 0
      %661 = vperm.xlu0 %660, %v608
      %v662 = vpop.permute.xlu0 %661
      %663 = vset.pattern.permute.xlu0 0
      %664 = vperm.xlu0 %663, %v610
      %v665 = vpop.permute.xlu0 %664
      %666 = vset.pattern.permute.xlu0 0
      %667 = vperm.xlu0 %666, %v612
      %v668 = vpop.permute.xlu0 %667
      %v669 = vlaneseq
      %v670 = vshrl.u32 %v669, 7
      %v671 = vsub.s32 %v472, %v670
      %v672 = vrot.slane %v629, %v671
      %v673 = vlaneseq
      %v674 = vshrl.u32 %v673, 7
      %v675 = vsub.s32 %v477, %v674
      %v676 = vrot.slane %v632, %v675
      %v677 = vsel %vm482, %v676, %v672
      %v678 = vlaneseq
      %v679 = vshrl.u32 %v678, 7
      %v680 = vsub.s32 %v484, %v679
      %v681 = vrot.slane %v635, %v680
      %v682 = vsel %vm489, %v681, %v677
      %v683 = vlaneseq
      %v684 = vshrl.u32 %v683, 7
      %v685 = vsub.s32 %v491, %v684
      %v686 = vrot.slane %v638, %v685
      %v687 = vsel %vm496, %v686, %v682
      %v688 = vlaneseq
      %v689 = vshrl.u32 %v688, 7
      %v690 = vsub.s32 %v498, %v689
      %v691 = vrot.slane %v641, %v690
      %v692 = vsel %vm503, %v691, %v687
      %v693 = vlaneseq
      %v694 = vshrl.u32 %v693, 7
      %v695 = vsub.s32 %v505, %v694
      %v696 = vrot.slane %v644, %v695
      %v697 = vsel %vm510, %v696, %v692
      %v698 = vlaneseq
      %v699 = vshrl.u32 %v698, 7
      %v700 = vsub.s32 %v512, %v699
      %v701 = vrot.slane %v647, %v700
      %v702 = vsel %vm517, %v701, %v697
      %v703 = vlaneseq
      %v704 = vshrl.u32 %v703, 7
      %v705 = vsub.s32 %v472, %v704
      %v706 = vrot.slane %v650, %v705
      %v707 = vlaneseq
      %v708 = vshrl.u32 %v707, 7
      %v709 = vsub.s32 %v477, %v708
      %v710 = vrot.slane %v653, %v709
      %v711 = vsel %vm482, %v710, %v706
      %v712 = vlaneseq
      %v713 = vshrl.u32 %v712, 7
      %v714 = vsub.s32 %v484, %v713
      %v715 = vrot.slane %v656, %v714
      %v716 = vsel %vm489, %v715, %v711
      %v717 = vlaneseq
      %v718 = vshrl.u32 %v717, 7
      %v719 = vsub.s32 %v491, %v718
      %v720 = vrot.slane %v659, %v719
      %v721 = vsel %vm496, %v720, %v716
      %v722 = vlaneseq
      %v723 = vshrl.u32 %v722, 7
      %v724 = vsub.s32 %v498, %v723
      %v725 = vrot.slane %v662, %v724
      %v726 = vsel %vm503, %v725, %v721
      %v727 = vlaneseq
      %v728 = vshrl.u32 %v727, 7
      %v729 = vsub.s32 %v505, %v728
      %v730 = vrot.slane %v665, %v729
      %v731 = vsel %vm510, %v730, %v726
      %v732 = vlaneseq
      %v733 = vshrl.u32 %v732, 7
      %v734 = vsub.s32 %v512, %v733
      %v735 = vrot.slane %v668, %v734
      %v736 = vsel %vm517, %v735, %v731
      %v737 = vsel %vm553, %v736, %v702
      %v739 = vsel %vm556, %v737, 0.0
      %740 = vadd.xlane.f32.xlu0 %v739
      %v741 = vpop.xlane.xlu0 %740
      %v742 = vrcp.pop %v741
      %v744 = vlaneseq
      %v745 = vshrl.u32 %v744, 7
      %v746 = vsub.s32 0, %v745
      %v747 = vrot.slane %v742, %v746
      %v748 = vlaneseq
      %v749 = vshrl.u32 %v748, 7
      %v750 = vsub.s32 1, %v749
      %v751 = vrot.slane %v742, %v750
      %v754 = vmul.f32 %v586, %v747
      %v755 = vmul.f32 %v588, %v747
      %v756 = vmul.f32 %v590, %v747
      %v757 = vmul.f32 %v592, %v747
      %v758 = vmul.f32 %v594, %v747
      %v759 = vmul.f32 %v596, %v747
      %v760 = vmul.f32 %v598, %v747
      %v761 = vmul.f32 %v600, %v751
      %v762 = vmul.f32 %v602, %v751
      %v763 = vmul.f32 %v604, %v751
      %v764 = vmul.f32 %v606, %v751
      %v765 = vmul.f32 %v608, %v751
      %v766 = vmul.f32 %v610, %v751
      %v767 = vmul.f32 %v612, %v751
      %769 = vset.pattern.permute.xlu0 0
      %770 = vperm.xlu0 %769, %v754
      %v771 = vpop.permute.xlu0 %770
      %774 = vset.pattern.permute.xlu0 0
      %775 = vperm.xlu0 %774, %v755
      %v776 = vpop.permute.xlu0 %775
      %779 = vset.pattern.permute.xlu0 0
      %780 = vperm.xlu0 %779, %v756
      %v781 = vpop.permute.xlu0 %780
      %784 = vset.pattern.permute.xlu0 0
      %785 = vperm.xlu0 %784, %v757
      %v786 = vpop.permute.xlu0 %785
      %789 = vset.pattern.permute.xlu0 0
      %790 = vperm.xlu0 %789, %v758
      %v791 = vpop.permute.xlu0 %790
      %794 = vset.pattern.permute.xlu0 0
      %795 = vperm.xlu0 %794, %v759
      %v796 = vpop.permute.xlu0 %795
      %799 = vset.pattern.permute.xlu0 0
      %800 = vperm.xlu0 %799, %v760
      %v801 = vpop.permute.xlu0 %800
      %804 = vset.pattern.permute.xlu0 0
      %805 = vperm.xlu0 %804, %v761
      %v806 = vpop.permute.xlu0 %805
      %809 = vset.pattern.permute.xlu0 0
      %810 = vperm.xlu0 %809, %v762
      %v811 = vpop.permute.xlu0 %810
      %814 = vset.pattern.permute.xlu0 0
      %815 = vperm.xlu0 %814, %v763
      %v816 = vpop.permute.xlu0 %815
      %819 = vset.pattern.permute.xlu0 0
      %820 = vperm.xlu0 %819, %v764
      %v821 = vpop.permute.xlu0 %820
      %824 = vset.pattern.permute.xlu0 0
      %825 = vperm.xlu0 %824, %v765
      %v826 = vpop.permute.xlu0 %825
      %829 = vset.pattern.permute.xlu0 0
      %830 = vperm.xlu0 %829, %v766
      %v831 = vpop.permute.xlu0 %830
      %834 = vset.pattern.permute.xlu0 0
      %835 = vperm.xlu0 %834, %v767
      %v836 = vpop.permute.xlu0 %835
      %v838 = vmul.f32 %v771, %v94
      %v839 = vmul.f32 %v776, %v95
      %v840 = vmul.f32 %v781, %v96
      %v841 = vmul.f32 %v786, %v97
      %v842 = vmul.f32 %v791, %v98
      %v843 = vmul.f32 %v796, %v99
      %v844 = vmul.f32 %v801, %v100
      %v845 = vmul.f32 %v806, %v101
      %v846 = vmul.f32 %v811, %v102
      %v847 = vmul.f32 %v816, %v103
      %v848 = vmul.f32 %v821, %v104
      %v849 = vmul.f32 %v826, %v105
      %v850 = vmul.f32 %v831, %v106
      %v851 = vmul.f32 %v836, %v107
      %v852 = vsel %vm130, %v838, 0.0
      %v853 = vsel %vm130, %v839, 0.0
      %v854 = vadd.f32 %v852, %v853
      %v855 = vsel %vm130, %v840, 0.0
      %v856 = vadd.f32 %v854, %v855
      %v857 = vsel %vm130, %v841, 0.0
      %v858 = vadd.f32 %v856, %v857
      %v859 = vsel %vm130, %v842, 0.0
      %v860 = vadd.f32 %v858, %v859
      %v861 = vsel %vm130, %v843, 0.0
      %v862 = vadd.f32 %v860, %v861
      %vm863 = vcmask 253952
      %v864 = vsel %vm863, %v844, 0.0
      %v865 = vadd.f32 %v862, %v864
      %v866 = vrot.slane %v865, 4
      %v867 = vadd.f32 %v865, %v866
      %v868 = vrot.slane %v867, 2
      %v869 = vadd.f32 %v867, %v868
      %v870 = vrot.slane %v869, 1
      %v871 = vadd.f32 %v869, %v870
      %v872 = vsel %vm130, %v845, 0.0
      %v873 = vsel %vm130, %v846, 0.0
      %v874 = vadd.f32 %v872, %v873
      %v875 = vsel %vm130, %v847, 0.0
      %v876 = vadd.f32 %v874, %v875
      %v877 = vsel %vm130, %v848, 0.0
      %v878 = vadd.f32 %v876, %v877
      %v879 = vsel %vm130, %v849, 0.0
      %v880 = vadd.f32 %v878, %v879
      %v881 = vsel %vm130, %v850, 0.0
      %v882 = vadd.f32 %v880, %v881
      %v883 = vsel %vm863, %v851, 0.0
      %v884 = vadd.f32 %v882, %v883
      %v885 = vrot.slane %v884, 4
      %v886 = vadd.f32 %v884, %v885
      %v887 = vrot.slane %v886, 2
      %v888 = vadd.f32 %v886, %v887
      %v889 = vrot.slane %v888, 1
      %v890 = vadd.f32 %v888, %v889
      %v891 = vlaneseq
      %v892 = vshrl.u32 %v891, 7
      %v893 = vsub.s32 0, %v892
      %v894 = vrot.slane %v760, %v893
      %v895 = vlaneseq
      %v896 = vshrl.u32 %v895, 7
      %v897 = vsub.s32 0, %v896
      %v898 = vrot.slane %v767, %v897
      %v901 = vunpack.c.l.s4 1983009808
      %v902 = vunpack.c.0.s8 %v901
      %v903 = vlaneseq
      %v904 = vshrl.u32 %v903, 7
      %v905 = vsub.s32 %v902, %v904
      %v906 = vrot.slane %v249, %v905
      %v907 = vlaneseq
      %v908 = vshrl.u32 %v907, 7
      %v909 = vsub.s32 0, %v908
      %v910 = vrot.slane %v906, %v909
      %912 = vbcast.lane.b32.xlu0 %v910, 256
      %v913 = vpop.permute.xlu0 %912
      %s915 = sor.u32 256, 8
      %916 = vbcast.lane.b32.xlu0 %v910, %s915
      %v917 = vpop.permute.xlu0 %916
      %s919 = sor.u32 256, 16
      %920 = vbcast.lane.b32.xlu0 %v910, %s919
      %v921 = vpop.permute.xlu0 %920
      %s923 = sor.u32 256, 24
      %924 = vbcast.lane.b32.xlu0 %v910, %s923
      %v925 = vpop.permute.xlu0 %924
      %v926 = vlaneseq
      %v927 = vshrl.u32 %v926, 7
      %v928 = vsub.s32 1, %v927
      %v929 = vrot.slane %v906, %v928
      %931 = vbcast.lane.b32.xlu0 %v929, 256
      %v932 = vpop.permute.xlu0 %931
      %s934 = sor.u32 256, 8
      %935 = vbcast.lane.b32.xlu0 %v929, %s934
      %v936 = vpop.permute.xlu0 %935
      %s938 = sor.u32 256, 16
      %939 = vbcast.lane.b32.xlu0 %v929, %s938
      %v940 = vpop.permute.xlu0 %939
      %s942 = sor.u32 256, 24
      %943 = vbcast.lane.b32.xlu0 %v929, %s942
      %v944 = vpop.permute.xlu0 %943
      %v953 = vmul.f32 %v894, %v913
      %v954 = vmul.f32 %v894, %v917
      %v955 = vmul.f32 %v894, %v921
      %v956 = vmul.f32 %v894, %v925
      %v957 = vmul.f32 %v898, %v932
      %v958 = vmul.f32 %v898, %v936
      %v959 = vmul.f32 %v898, %v940
      %v960 = vmul.f32 %v898, %v944
      %v961 = vsub.f32 1.0, %v760
      %v962 = vsub.f32 1.0, %v767
      %v963 = vlaneseq
      %v964 = vshrl.u32 %v963, 7
      %v965 = vsub.s32 0, %v964
      %v966 = vrot.slane %v961, %v965
      %v967 = vlaneseq
      %v968 = vshrl.u32 %v967, 7
      %v969 = vsub.s32 0, %v968
      %v970 = vrot.slane %v962, %v969
      %974 = vbcast.lane.b32.xlu0 %v871, 256
      %v975 = vpop.permute.xlu0 %974
      %s977 = sor.u32 256, 8
      %978 = vbcast.lane.b32.xlu0 %v871, %s977
      %v979 = vpop.permute.xlu0 %978
      %s981 = sor.u32 256, 16
      %982 = vbcast.lane.b32.xlu0 %v871, %s981
      %v983 = vpop.permute.xlu0 %982
      %s985 = sor.u32 256, 24
      %986 = vbcast.lane.b32.xlu0 %v871, %s985
      %v987 = vpop.permute.xlu0 %986
      %989 = vbcast.lane.b32.xlu0 %v890, 256
      %v990 = vpop.permute.xlu0 %989
      %s992 = sor.u32 256, 8
      %993 = vbcast.lane.b32.xlu0 %v890, %s992
      %v994 = vpop.permute.xlu0 %993
      %s996 = sor.u32 256, 16
      %997 = vbcast.lane.b32.xlu0 %v890, %s996
      %v998 = vpop.permute.xlu0 %997
      %s1000 = sor.u32 256, 24
      %1001 = vbcast.lane.b32.xlu0 %v890, %s1000
      %v1002 = vpop.permute.xlu0 %1001
      %v1011 = vmul.f32 %v966, %v975
      %v1012 = vmul.f32 %v966, %v979
      %v1013 = vmul.f32 %v966, %v983
      %v1014 = vmul.f32 %v966, %v987
      %v1015 = vmul.f32 %v970, %v990
      %v1016 = vmul.f32 %v970, %v994
      %v1017 = vmul.f32 %v970, %v998
      %v1018 = vmul.f32 %v970, %v1002
      %v1019 = vadd.f32 %v953, %v1011
      %v1020 = vadd.f32 %v954, %v1012
      %v1021 = vadd.f32 %v955, %v1013
      %v1022 = vadd.f32 %v956, %v1014
      %v1023 = vadd.f32 %v957, %v1015
      %v1024 = vadd.f32 %v958, %v1016
      %v1025 = vadd.f32 %v959, %v1017
      %v1026 = vadd.f32 %v960, %v1018
      %v1027 = vlaneseq
      %v1028 = vshrl.u32 %v1027, 7
      %v1029 = vsub.s32 0, %v1028
      %v1030 = vrot.slane %v257, %v1029
      %s1032 = sor.u32 256, 96
      %1033 = vbcast.lane.b32.xlu0 %v1030, %s1032
      %v1034 = vpop.permute.xlu0 %1033
      %s1036 = sor.u32 256, 104
      %1037 = vbcast.lane.b32.xlu0 %v1030, %s1036
      %v1038 = vpop.permute.xlu0 %1037
      %s1040 = sor.u32 256, 112
      %1041 = vbcast.lane.b32.xlu0 %v1030, %s1040
      %v1042 = vpop.permute.xlu0 %1041
      %s1044 = sor.u32 256, 120
      %1045 = vbcast.lane.b32.xlu0 %v1030, %s1044
      %v1046 = vpop.permute.xlu0 %1045
      %v1047 = vlaneseq
      %v1048 = vshrl.u32 %v1047, 7
      %v1049 = vsub.s32 1, %v1048
      %v1050 = vrot.slane %v257, %v1049
      %s1052 = sor.u32 256, 96
      %1053 = vbcast.lane.b32.xlu0 %v1050, %s1052
      %v1054 = vpop.permute.xlu0 %1053
      %s1056 = sor.u32 256, 104
      %1057 = vbcast.lane.b32.xlu0 %v1050, %s1056
      %v1058 = vpop.permute.xlu0 %1057
      %s1060 = sor.u32 256, 112
      %1061 = vbcast.lane.b32.xlu0 %v1050, %s1060
      %v1062 = vpop.permute.xlu0 %1061
      %s1064 = sor.u32 256, 120
      %1065 = vbcast.lane.b32.xlu0 %v1050, %s1064
      %v1066 = vpop.permute.xlu0 %1065
      %v1075 = vadd.f32 %v1019, %v1034
      %v1076 = vadd.f32 %v1020, %v1038
      %v1077 = vadd.f32 %v1021, %v1042
      %v1078 = vadd.f32 %v1022, %v1046
      %v1079 = vadd.f32 %v1023, %v1054
      %v1080 = vadd.f32 %v1024, %v1058
      %v1081 = vadd.f32 %v1025, %v1062
      %v1082 = vadd.f32 %v1026, %v1066
      %v1084 = vlaneseq
      %v1085 = vshrl.u32 %v1084, 7
      %v1086 = vsub.s32 0, %v1085
      %v1087 = vrot.slane %v51, %v1086
      %1097 = vset.pattern.permute.xlu0 0
      %1098 = vperm.xlu0 %1097, %v1075
      %v1099 = vpop.permute.xlu0 %1098
      %1100 = vset.pattern.permute.xlu0 0
      %1101 = vperm.xlu0 %1100, %v1076
      %v1102 = vpop.permute.xlu0 %1101
      %1103 = vset.pattern.permute.xlu0 0
      %1104 = vperm.xlu0 %1103, %v1077
      %v1105 = vpop.permute.xlu0 %1104
      %1106 = vset.pattern.permute.xlu0 0
      %1107 = vperm.xlu0 %1106, %v1078
      %v1108 = vpop.permute.xlu0 %1107
      %1109 = vset.pattern.permute.xlu0 0
      %1110 = vperm.xlu0 %1109, %v1079
      %v1111 = vpop.permute.xlu0 %1110
      %1112 = vset.pattern.permute.xlu0 0
      %1113 = vperm.xlu0 %1112, %v1080
      %v1114 = vpop.permute.xlu0 %1113
      %1115 = vset.pattern.permute.xlu0 0
      %1116 = vperm.xlu0 %1115, %v1081
      %v1117 = vpop.permute.xlu0 %1116
      %1118 = vset.pattern.permute.xlu0 0
      %1119 = vperm.xlu0 %1118, %v1082
      %v1120 = vpop.permute.xlu0 %1119
      %v1121 = vlaneseq
      %v1122 = vshrl.u32 %v1121, 7
      %v1123 = vsub.s32 %v472, %v1122
      %v1124 = vrot.slane %v1099, %v1123
      %v1125 = vlaneseq
      %v1126 = vshrl.u32 %v1125, 7
      %v1127 = vsub.s32 %v477, %v1126
      %v1128 = vrot.slane %v1102, %v1127
      %v1129 = vsel %vm482, %v1128, %v1124
      %v1130 = vlaneseq
      %v1131 = vshrl.u32 %v1130, 7
      %v1132 = vsub.s32 %v484, %v1131
      %v1133 = vrot.slane %v1105, %v1132
      %v1134 = vsel %vm489, %v1133, %v1129
      %v1135 = vlaneseq
      %v1136 = vshrl.u32 %v1135, 7
      %v1137 = vsub.s32 %v491, %v1136
      %v1138 = vrot.slane %v1108, %v1137
      %v1139 = vsel %vm496, %v1138, %v1134
      %v1140 = vlaneseq
      %v1141 = vshrl.u32 %v1140, 7
      %v1142 = vsub.s32 %v472, %v1141
      %v1143 = vrot.slane %v1111, %v1142
      %v1144 = vlaneseq
      %v1145 = vshrl.u32 %v1144, 7
      %v1146 = vsub.s32 %v477, %v1145
      %v1147 = vrot.slane %v1114, %v1146
      %v1148 = vsel %vm482, %v1147, %v1143
      %v1149 = vlaneseq
      %v1150 = vshrl.u32 %v1149, 7
      %v1151 = vsub.s32 %v484, %v1150
      %v1152 = vrot.slane %v1117, %v1151
      %v1153 = vsel %vm489, %v1152, %v1148
      %v1154 = vlaneseq
      %v1155 = vshrl.u32 %v1154, 7
      %v1156 = vsub.s32 %v491, %v1155
      %v1157 = vrot.slane %v1120, %v1156
      %v1158 = vsel %vm496, %v1157, %v1153
      %v1159 = vsel %vm553, %v1158, %v1139
      %v1160 = vsel %vm130, %v1159, 0
      %1162 = vmatprep.subr.mxu0 0.0
      %1163 = vmatpush1.msra.mxu0 0.0
      %1164 = vmatprep.subr.mxu0 0.0
      %1165 = vmatpush1.msra.mxu0 0.0
      %1166 = vmatprep.subr.mxu0 0.0
      %1167 = vmatpush1.msra.mxu0 0.0
      %1168 = vmatprep.subr.mxu0 0.0
      %1169 = vmatpush1.msra.mxu0 0.0
      %1170 = vmatprep.subr.mxu0 0.0
      %1171 = vmatpush1.msra.mxu0 0.0
      %1172 = vmatprep.subr.mxu0 0.0
      %1173 = vmatpush1.msra.mxu0 0.0
      %1174 = vmatprep.subr.mxu0 0.0
      %1175 = vmatpush1.msra.mxu0 0.0
      %1176 = vmatprep.subr.mxu0 0.0
      %1177 = vmatpush1.msra.mxu0 0.0
      %1178 = vmatprep.subr.mxu0 0.0
      %1179 = vmatpush1.msra.mxu0 0.0
      %1180 = vmatprep.subr.mxu0 0.0
      %1181 = vmatpush1.msra.mxu0 0.0
      %1182 = vmatprep.subr.mxu0 0.0
      %1183 = vmatpush1.msra.mxu0 0.0
      %1184 = vmatprep.subr.mxu0 0.0
      %1185 = vmatpush1.msra.mxu0 0.0
      %1186 = vmatprep.subr.mxu0 0.0
      %1187 = vmatpush1.msra.mxu0 %v50
      %1188 = vmatprep.subr.mxu0 0.0
      %1189 = vmatpush1.msra.mxu0 %v49
      %1190 = vmatprep.subr.mxu0 0.0
      %1191 = vmatpush1.msra.mxu0 %v48
      %1192 = vmatprep.subr.mxu0 0.0
      %1193 = vmatpush1.msra.mxu0 %v47
      %1194 = vmatprep.subr.mxu0 0.0
      %1195 = vmatpush2.msra.mxu0 0.0
      %1196 = vmatprep.subr.mxu0 0.0
      %1197 = vmatpush2.msra.mxu0 0.0
      %1198 = vmatprep.subr.mxu0 0.0
      %1199 = vmatpush2.msra.mxu0 0.0
      %1200 = vmatprep.subr.mxu0 0.0
      %1201 = vmatpush2.msra.mxu0 0.0
      %1202 = vmatprep.subr.mxu0 0.0
      %1203 = vmatpush2.msra.mxu0 0.0
      %1204 = vmatprep.subr.mxu0 0.0
      %1205 = vmatpush2.msra.mxu0 0.0
      %1206 = vmatprep.subr.mxu0 0.0
      %1207 = vmatpush2.msra.mxu0 0.0
      %1208 = vmatprep.subr.mxu0 0.0
      %1209 = vmatpush2.msra.mxu0 0.0
      %1210 = vmatprep.subr.mxu0 0.0
      %1211 = vmatpush2.msra.mxu0 0.0
      %1212 = vmatprep.subr.mxu0 0.0
      %1213 = vmatpush2.msra.mxu0 0.0
      %1214 = vmatprep.subr.mxu0 0.0
      %1215 = vmatpush2.msra.mxu0 0.0
      %1216 = vmatprep.subr.mxu0 0.0
      %1217 = vmatpush2.msra.mxu0 0.0
      %1218 = vmatprep.subr.mxu0 0.0
      %1219 = vmatpush2.msra.mxu0 0.0
      %1220 = vmatprep.subr.mxu0 0.0
      %1221 = vmatpush2.msra.mxu0 0.0
      %1222 = vmatprep.subr.mxu0 0.0
      %1223 = vmatpush2.msra.mxu0 0.0
      %1224 = vmatprep.subr.mxu0 0.0
      %1225 = vmatpush2.msra.mxu0 0.0
      %1226 = vmatprep.mubr.f32.mxu0 0.0
      %1227 = vmatmul.mubr.f32.gmra.mxu0 %v1160
      %v1228 = vpop.f32.mrf.mxu0
      %v1229 = vadd.f32 %v1087, %v1228
      %v1230 = vpop.f32.mrf.mxu0
      %1231 = vdwg.mxu0
      %s1232 = scalar_lea.vmem [#allocation2], %s116
      %vm1233 = vcmask 517120
      %1234 = vst.msk [vmem:[%s1232] sm:$0x3] %vm1233, %v1229
    $region42: #{_forward_core.3} parent=1 // loop_footer
      %s113 = sadd.s32 1, %s109
    $region43: #{_forward_core.3} parent=1 // loop_footer_branch
      %108 = sbr.rel target = $region39
    $region44: #{_forward_core.3} parent=1 // loop_exit
      _
    // Predicated region
    $region45: #{_forward_core.3} parent=1 // pred_check
      _
    $region46: #{_forward_core.3} parent=1 // pred_check_branch
      %1236 = sbr.rel (0) target = $region48
    $region47: #{_forward_core.3} parent=1 // pred_region
      %s1238 = ssub.s32 192, 192
      %1239 = vsyncadd [#allocation3], %s1238
      %s1240 = sshll.u32 [#allocation2], 4
      %s1241 = int_to_ptr.vmem [resolvable:$true] %s1240
      %1246 = dma.vmem_to_hbm [thread:$0]  %s1241, 192, %s9, [#allocation3], 32, 32, 2
    $region48: #{_forward_core.3} parent=1 // pred_fallthru
      _
    // Predicated region
    $region49: #{_forward_core.3} parent=1 // pred_check
      _
    $region50: #{_forward_core.3} parent=1 // pred_check_branch
      %1248 = sbr.rel (0) target = $region52
    $region51: #{_forward_core.3} parent=1 // pred_region
      %1249 = dma.done [#allocation3], 192
    $region52: #{_forward_core.3} parent=1 // pred_fallthru
      _
    %1250 = vsyncpa [#allocation3], 1

// kernel: _forward_core.2
$region0: #{_forward_core.2}
  #allocation0 [shape = 'u32[]', space=smem, size = 0x4, offset = 0x4, fixed_abs, tag = 'smem constant byte address 0x4 - core index']
  #allocation1 [shape = 'u32[144,128]{1,0:T(1,128)}', space=vmem, size = 0x12000, scoped, tag = 'internal scratch']
  %s0 = inlined_call_operand.vmem [shape: bf16[112,2048], index: 0, kind: input, shape index: {}]
  %s1 = inlined_call_operand.vmem [shape: bf16[2048,64], index: 1, kind: input, shape index: {}]
  %s2 = inlined_call_operand.vmem [shape: f32[1,64], index: 2, kind: input, shape index: {}]
  %s3 = inlined_call_operand.vmem [shape: bf16[32,64], index: 3, kind: input, shape index: {}]
  %s4 = inlined_call_operand.vmem [shape: bf16[112,128], index: 4, kind: output, shape index: {}]
  %s5 = sld [smem:[#allocation0]]
  $region49: #{_forward_core.2} parent=0
    _
  %s7 = ssub.s32 1, %s5
  %s8 = scalar_select 0, %s7, %s5
  loop: start=0, step=1, limit=4
  $region2: #{_forward_core.2} parent=0 // loop_pre_header
    _
  $region3: #{_forward_core.2} parent=0 // loop_header
    %s10 = sphi 0, %s14
    %p11 = scmp.ge.s32.totalorder %s10, 4
    %s20 = sphi 0, %s22
    %s23 = sphi 0, %s20
    %s24 = sphi 0, %s23
    %s40 = sphi 0, %s24
    %s44 = sphi 0, %s44
    %s46 = sphi 0, %s44
    %s47 = sphi 0, %s46
    %s61 = sphi 0, %s47
    %s65 = sphi 0, %s65
    %s67 = sphi 0, %s65
    %s68 = sphi 0, %s67
    %s82 = sphi 0, %s68
    %s86 = sphi 0, %s86
    %s88 = sphi 0, %s86
    %s89 = sphi 0, %s88
    %s103 = sphi 0, %s89
    %s109 = sphi 0, %s111
    %s112 = sphi 0, %s109
    %s113 = sphi 0, %s112
    %s129 = sphi 0, %s113
  $region4: #{_forward_core.2} parent=0 // loop_header_branch
    %13 = sbr.rel (%p11) target = $region8
  $region5: #{_forward_core.2} parent=0 // loop_body
    %s15 = ssub.s32 %s10, 1
    %s16 = ssub.s32 %s10, 2
    %s17 = sadd.s32 %s10, 1
    %s18 = ssub.s32 %s10, %s17
    %p19 = scmp.eq.s32.totalorder %s18, 0
    %s21 = sadd.s32 %s20, 1
    %s22 = scalar_select %p19, %s20, %s21
    %p25 = pneg %p19
    %p26 = scmp.eq.s32.totalorder %s10, 1
    %p27 = por %p25, %p26
    %p28 = scmp.ne.s32.totalorder %s20, %s23
    %p29 = scmp.eq.s32.totalorder %s10, 0
    %p30 = por %p28, %p29
    %p31 = scmp.ne.s32.totalorder %s20, %s23
    %p32 = scmp.eq.s32.totalorder %s15, 1
    %p33 = por %p31, %p32
    %p34 = scmp.ne.s32.totalorder %s23, %s24
    %p35 = scmp.eq.s32.totalorder %s15, 0
    %p36 = por %p34, %p35
    %p37 = scmp.ne.s32.totalorder %s23, %s24
    %p38 = scmp.eq.s32.totalorder %s16, 1
    %p39 = por %p37, %p38
    %p41 = scmp.ne.s32.totalorder %s24, %s40
    %p42 = scmp.eq.s32.totalorder %s16, 0
    %p43 = por %p41, %p42
    %s45 = sadd.s32 %s44, 1
    %p48 = scmp.eq.s32.totalorder %s10, 1
    %p49 = scmp.ne.s32.totalorder %s44, %s46
    %p50 = scmp.eq.s32.totalorder %s10, 0
    %p51 = por %p49, %p50
    %p52 = scmp.ne.s32.totalorder %s44, %s46
    %p53 = scmp.eq.s32.totalorder %s15, 1
    %p54 = por %p52, %p53
    %p55 = scmp.ne.s32.totalorder %s46, %s47
    %p56 = scmp.eq.s32.totalorder %s15, 0
    %p57 = por %p55, %p56
    %p58 = scmp.ne.s32.totalorder %s46, %s47
    %p59 = scmp.eq.s32.totalorder %s16, 1
    %p60 = por %p58, %p59
    %p62 = scmp.ne.s32.totalorder %s47, %s61
    %p63 = scmp.eq.s32.totalorder %s16, 0
    %p64 = por %p62, %p63
    %s66 = sadd.s32 %s65, 1
    %p69 = scmp.eq.s32.totalorder %s10, 1
    %p70 = scmp.ne.s32.totalorder %s65, %s67
    %p71 = scmp.eq.s32.totalorder %s10, 0
    %p72 = por %p70, %p71
    %p73 = scmp.ne.s32.totalorder %s65, %s67
    %p74 = scmp.eq.s32.totalorder %s15, 1
    %p75 = por %p73, %p74
    %p76 = scmp.ne.s32.totalorder %s67, %s68
    %p77 = scmp.eq.s32.totalorder %s15, 0
    %p78 = por %p76, %p77
    %p79 = scmp.ne.s32.totalorder %s67, %s68
    %p80 = scmp.eq.s32.totalorder %s16, 1
    %p81 = por %p79, %p80
    %p83 = scmp.ne.s32.totalorder %s68, %s82
    %p84 = scmp.eq.s32.totalorder %s16, 0
    %p85 = por %p83, %p84
    %s87 = sadd.s32 %s86, 1
    %p90 = scmp.eq.s32.totalorder %s10, 1
    %p91 = scmp.ne.s32.totalorder %s86, %s88
    %p92 = scmp.eq.s32.totalorder %s10, 0
    %p93 = por %p91, %p92
    %p94 = scmp.ne.s32.totalorder %s86, %s88
    %p95 = scmp.eq.s32.totalorder %s15, 1
    %p96 = por %p94, %p95
    %p97 = scmp.ne.s32.totalorder %s88, %s89
    %p98 = scmp.eq.s32.totalorder %s15, 0
    %p99 = por %p97, %p98
    %p100 = scmp.ne.s32.totalorder %s88, %s89
    %p101 = scmp.eq.s32.totalorder %s16, 1
    %p102 = por %p100, %p101
    %p104 = scmp.ne.s32.totalorder %s89, %s103
    %p105 = scmp.eq.s32.totalorder %s16, 0
    %p106 = por %p104, %p105
    %s107 = ssub.s32 %s10, %s17
    %p108 = scmp.eq.s32.totalorder %s107, 0
    %s110 = sadd.s32 %s109, 1
    %s111 = scalar_select %p108, %s109, %s110
    %p114 = pneg %p108
    %p115 = scmp.eq.s32.totalorder %s10, 1
    %p116 = por %p114, %p115
    %p117 = scmp.ne.s32.totalorder %s109, %s112
    %p118 = scmp.eq.s32.totalorder %s10, 0
    %p119 = por %p117, %p118
    %p120 = scmp.ne.s32.totalorder %s109, %s112
    %p121 = scmp.eq.s32.totalorder %s15, 1
    %p122 = por %p120, %p121
    %p123 = scmp.ne.s32.totalorder %s112, %s113
    %p124 = scmp.eq.s32.totalorder %s15, 0
    %p125 = por %p123, %p124
    %p126 = scmp.ne.s32.totalorder %s112, %s113
    %p127 = scmp.eq.s32.totalorder %s16, 1
    %p128 = por %p126, %p127
    %p130 = scmp.ne.s32.totalorder %s113, %s129
    %p131 = scmp.eq.s32.totalorder %s16, 0
    %p132 = por %p130, %p131
    %p133 = scmp.le.s32.totalorder 1, %s10
    %p134 = scmp.lt.s32.totalorder %s10, 3
    %p135 = pnand %p133, %p134
    %p136 = pneg %p135
    // Predicated region
    $region9: #{_forward_core.2} parent=5 // pred_check
      _
    $region10: #{_forward_core.2} parent=5 // pred_check_branch
      %138 = sbr.rel (%p135) target = $region12
    $region11: #{_forward_core.2} parent=5 // pred_region
      %s139 = ssub.s32 %s10, 1
      // Predicated region
      $region13: #{_forward_core.2} parent=11 // pred_check
        %p140 = pneg %p57
      $region14: #{_forward_core.2} parent=11 // pred_check_branch
        %142 = sbr.rel (%p140) target = $region16
      $region15: #{_forward_core.2} parent=11 // pred_region
        _
      $region16: #{_forward_core.2} parent=11 // pred_fallthru
        _
      // Predicated region
      $region17: #{_forward_core.2} parent=11 // pred_check
        %p143 = pneg %p78
      $region18: #{_forward_core.2} parent=11 // pred_check_branch
        %145 = sbr.rel (%p143) target = $region20
      $region19: #{_forward_core.2} parent=11 // pred_region
        _
      $region20: #{_forward_core.2} parent=11 // pred_fallthru
        _
      // Predicated region
      $region21: #{_forward_core.2} parent=11 // pred_check
        %p146 = pneg %p99
      $region22: #{_forward_core.2} parent=11 // pred_check_branch
        %148 = sbr.rel (%p146) target = $region24
      $region23: #{_forward_core.2} parent=11 // pred_region
        _
      $region24: #{_forward_core.2} parent=11 // pred_fallthru
        _
    $region12: #{_forward_core.2} parent=5 // pred_fallthru
      _
    %p149 = scmp.lt.s32.totalorder %s10, 2
    // Predicated region
    $region25: #{_forward_core.2} parent=5 // pred_check
      %p150 = pneg %p149
    $region26: #{_forward_core.2} parent=5 // pred_check_branch
      %152 = sbr.rel (%p150) target = $region28
    $region27: #{_forward_core.2} parent=5 // pred_region
      // Predicated region
      $region29: #{_forward_core.2} parent=27 // pred_check
        %p153 = pneg %p30
      $region30: #{_forward_core.2} parent=27 // pred_check_branch
        %155 = sbr.rel (%p153) target = $region32
      $region31: #{_forward_core.2} parent=27 // pred_region
        %s156 = smul.u32 7, %s10
        %p157 = scmp.lt.s32.totalorder %s156, 13
        %s158 = scalar_select %p157, %s156, 13
        %s159 = smul.addr %s158, 16
        %s160 = smul.addr %s159, 4
        %s161 = scalar_lea.vmem %s0, %s160
        %s162 = smul.u32 7, %s10
      $region32: #{_forward_core.2} parent=27 // pred_fallthru
        _
    $region28: #{_forward_core.2} parent=5 // pred_fallthru
      _
    %p163 = scmp.le.s32.totalorder 1, %s10
    %p164 = scmp.lt.s32.totalorder %s10, 3
    %p165 = pnand %p163, %p164
    %p166 = pneg %p165
    // Predicated region
    $region33: #{_forward_core.2} parent=5 // pred_check
      _
    $region34: #{_forward_core.2} parent=5 // pred_check_branch
      %168 = sbr.rel (%p165) target = $region36
    $region35: #{_forward_core.2} parent=5 // pred_region
      %s169 = ssub.s32 %s10, 1
      %s170 = smul.u32 7, %s15
      %p171 = scmp.lt.s32.totalorder %s170, 13
      %s172 = scalar_select %p171, %s170, 13
      %s173 = smul.addr %s172, 16
      %s174 = smul.addr %s173, 4
      %s175 = scalar_lea.vmem %s0, %s174
      %p176 = pneg %p36
      %p177 = pneg %p33
      %p178 = pneg %p57
      %p179 = pneg %p54
      %p180 = pneg %p78
      %p181 = pneg %p75
      %p182 = pneg %p99
      %p183 = pneg %p96
      %p184 = pneg %p125
      %p185 = pneg %p122
      %s186 = smul.u32 7, %s15
      %p187 = scmp.lt.s32.totalorder %s186, 13
      %s188 = scalar_select %p187, %s186, 13
      %s189 = smul.addr %s188, 4
      %s190 = scalar_lea.vmem %s4, %s189
      %s191 = smul.u32 7, %s15
      %p192 = scmp.lt.s32.totalorder %s191, 13
      %s193 = scalar_select %p192, %s191, 13
      %s194 = smul.addr %s193, 16
      %s195 = smul.addr %s194, 4
      %s196 = scalar_lea.vmem %s0, %s195
      %s197 = smul.u32 7, %s15
      %s198 = smul.u32 7, %s15
      %p199 = scmp.lt.s32.totalorder %s198, 13
      %s200 = scalar_select %p199, %s198, 13
      %s201 = smul.addr %s200, 4
      %s202 = scalar_lea.vmem %s4, %s201
      %s203 = smul.u32 7, %s15
      %v205 = vld [vmem:[%s196] sm:$0xff]
      %v206 = vld [vmem:[%s196 + $0x8] sm:$0xff]
      %v207 = vld [vmem:[%s196 + $0x10] sm:$0xff]
      %v208 = vld [vmem:[%s196 + $0x18] sm:$0xff]
      %v209 = vld [vmem:[%s196 + $0x20] sm:$0xff]
      %v210 = vld [vmem:[%s196 + $0x28] sm:$0xff]
      %v211 = vld [vmem:[%s196 + $0x30] sm:$0xff]
      %v212 = vld [vmem:[%s196 + $0x38] sm:$0xff]
      %v213 = vld [vmem:[%s196 + $0x40] sm:$0xff]
      %v214 = vld [vmem:[%s196 + $0x48] sm:$0xff]
      %v215 = vld [vmem:[%s196 + $0x50] sm:$0xff]
      %v216 = vld [vmem:[%s196 + $0x58] sm:$0xff]
      %v217 = vld [vmem:[%s196 + $0x60] sm:$0xff]
      %v218 = vld [vmem:[%s196 + $0x68] sm:$0xff]
      %v219 = vld [vmem:[%s196 + $0x70] sm:$0xff]
      %v220 = vld [vmem:[%s196 + $0x78] sm:$0xff]
      %v221 = vld [vmem:[%s196 + $0x80] sm:$0xff]
      %v222 = vld [vmem:[%s196 + $0x88] sm:$0xff]
      %v223 = vld [vmem:[%s196 + $0x90] sm:$0xff]
      %v224 = vld [vmem:[%s196 + $0x98] sm:$0xff]
      %v225 = vld [vmem:[%s196 + $0xa0] sm:$0xff]
      %v226 = vld [vmem:[%s196 + $0xa8] sm:$0xff]
      %v227 = vld [vmem:[%s196 + $0xb0] sm:$0xff]
      %v228 = vld [vmem:[%s196 + $0xb8] sm:$0xff]
      %v229 = vld [vmem:[%s196 + $0xc0] sm:$0xff]
      %v230 = vld [vmem:[%s196 + $0xc8] sm:$0xff]
      %v231 = vld [vmem:[%s196 + $0xd0] sm:$0xff]
      %v232 = vld [vmem:[%s196 + $0xd8] sm:$0xff]
      %v233 = vld [vmem:[%s196 + $0xe0] sm:$0xff]
      %v234 = vld [vmem:[%s196 + $0xe8] sm:$0xff]
      %v235 = vld [vmem:[%s196 + $0xf0] sm:$0xff]
      %v236 = vld [vmem:[%s196 + $0xf8] sm:$0xff]
      %v237 = vld [vmem:[%s196 + $0x100] sm:$0xff]
      %v238 = vld [vmem:[%s196 + $0x108] sm:$0xff]
      %v239 = vld [vmem:[%s196 + $0x110] sm:$0xff]
      %v240 = vld [vmem:[%s196 + $0x118] sm:$0xff]
      %v241 = vld [vmem:[%s196 + $0x120] sm:$0xff]
      %v242 = vld [vmem:[%s196 + $0x128] sm:$0xff]
      %v243 = vld [vmem:[%s196 + $0x130] sm:$0xff]
      %v244 = vld [vmem:[%s196 + $0x138] sm:$0xff]
      %v245 = vld [vmem:[%s196 + $0x140] sm:$0xff]
      %v246 = vld [vmem:[%s196 + $0x148] sm:$0xff]
      %v247 = vld [vmem:[%s196 + $0x150] sm:$0xff]
      %v248 = vld [vmem:[%s196 + $0x158] sm:$0xff]
      %v249 = vld [vmem:[%s196 + $0x160] sm:$0xff]
      %v250 = vld [vmem:[%s196 + $0x168] sm:$0xff]
      %v251 = vld [vmem:[%s196 + $0x170] sm:$0xff]
      %v252 = vld [vmem:[%s196 + $0x178] sm:$0xff]
      %v253 = vld [vmem:[%s196 + $0x180] sm:$0xff]
      %v254 = vld [vmem:[%s196 + $0x188] sm:$0xff]
      %v255 = vld [vmem:[%s196 + $0x190] sm:$0xff]
      %v256 = vld [vmem:[%s196 + $0x198] sm:$0xff]
      %v257 = vld [vmem:[%s196 + $0x1a0] sm:$0xff]
      %v258 = vld [vmem:[%s196 + $0x1a8] sm:$0xff]
      %v259 = vld [vmem:[%s196 + $0x1b0] sm:$0xff]
      %v260 = vld [vmem:[%s196 + $0x1b8] sm:$0xff]
      %v261 = vld [vmem:[%s1] sm:$0xf]
      %v262 = vld [vmem:[%s1 + $0x4] sm:$0xf]
      %v263 = vld [vmem:[%s1 + $0x8] sm:$0xf]
      %v264 = vld [vmem:[%s1 + $0xc] sm:$0xf]
      %v265 = vld [vmem:[%s1 + $0x10] sm:$0xf]
      %v266 = vld [vmem:[%s1 + $0x14] sm:$0xf]
      %v267 = vld [vmem:[%s1 + $0x18] sm:$0xf]
      %v268 = vld [vmem:[%s1 + $0x1c] sm:$0xf]
      %v269 = vld [vmem:[%s1 + $0x20] sm:$0xf]
      %v270 = vld [vmem:[%s1 + $0x24] sm:$0xf]
      %v271 = vld [vmem:[%s1 + $0x28] sm:$0xf]
      %v272 = vld [vmem:[%s1 + $0x2c] sm:$0xf]
      %v273 = vld [vmem:[%s1 + $0x30] sm:$0xf]
      %v274 = vld [vmem:[%s1 + $0x34] sm:$0xf]
      %v275 = vld [vmem:[%s1 + $0x38] sm:$0xf]
      %v276 = vld [vmem:[%s1 + $0x3c] sm:$0xf]
      %v277 = vld [vmem:[%s1 + $0x40] sm:$0xf]
      %v278 = vld [vmem:[%s1 + $0x44] sm:$0xf]
      %v279 = vld [vmem:[%s1 + $0x48] sm:$0xf]
      %v280 = vld [vmem:[%s1 + $0x4c] sm:$0xf]
      %v281 = vld [vmem:[%s1 + $0x50] sm:$0xf]
      %v282 = vld [vmem:[%s1 + $0x54] sm:$0xf]
      %v283 = vld [vmem:[%s1 + $0x58] sm:$0xf]
      %v284 = vld [vmem:[%s1 + $0x5c] sm:$0xf]
      %v285 = vld [vmem:[%s1 + $0x60] sm:$0xf]
      %v286 = vld [vmem:[%s1 + $0x64] sm:$0xf]
      %v287 = vld [vmem:[%s1 + $0x68] sm:$0xf]
      %v288 = vld [vmem:[%s1 + $0x6c] sm:$0xf]
      %v289 = vld [vmem:[%s1 + $0x70] sm:$0xf]
      %v290 = vld [vmem:[%s1 + $0x74] sm:$0xf]
      %v291 = vld [vmem:[%s1 + $0x78] sm:$0xf]
      %v292 = vld [vmem:[%s1 + $0x7c] sm:$0xf]
      %v293 = vld [vmem:[%s1 + $0x80] sm:$0xf]
      %v294 = vld [vmem:[%s1 + $0x84] sm:$0xf]
      %v295 = vld [vmem:[%s1 + $0x88] sm:$0xf]
      %v296 = vld [vmem:[%s1 + $0x8c] sm:$0xf]
      %v297 = vld [vmem:[%s1 + $0x90] sm:$0xf]
      %v298 = vld [vmem:[%s1 + $0x94] sm:$0xf]
      %v299 = vld [vmem:[%s1 + $0x98] sm:$0xf]
      %v300 = vld [vmem:[%s1 + $0x9c] sm:$0xf]
      %v301 = vld [vmem:[%s1 + $0xa0] sm:$0xf]
      %v302 = vld [vmem:[%s1 + $0xa4] sm:$0xf]
      %v303 = vld [vmem:[%s1 + $0xa8] sm:$0xf]
      %v304 = vld [vmem:[%s1 + $0xac] sm:$0xf]
      %v305 = vld [vmem:[%s1 + $0xb0] sm:$0xf]
      %v306 = vld [vmem:[%s1 + $0xb4] sm:$0xf]
      %v307 = vld [vmem:[%s1 + $0xb8] sm:$0xf]
      %v308 = vld [vmem:[%s1 + $0xbc] sm:$0xf]
      %v309 = vld [vmem:[%s1 + $0xc0] sm:$0xf]
      %v310 = vld [vmem:[%s1 + $0xc4] sm:$0xf]
      %v311 = vld [vmem:[%s1 + $0xc8] sm:$0xf]
      %v312 = vld [vmem:[%s1 + $0xcc] sm:$0xf]
      %v313 = vld [vmem:[%s1 + $0xd0] sm:$0xf]
      %v314 = vld [vmem:[%s1 + $0xd4] sm:$0xf]
      %v315 = vld [vmem:[%s1 + $0xd8] sm:$0xf]
      %v316 = vld [vmem:[%s1 + $0xdc] sm:$0xf]
      %v317 = vld [vmem:[%s1 + $0xe0] sm:$0xf]
      %v318 = vld [vmem:[%s1 + $0xe4] sm:$0xf]
      %v319 = vld [vmem:[%s1 + $0xe8] sm:$0xf]
      %v320 = vld [vmem:[%s1 + $0xec] sm:$0xf]
      %v321 = vld [vmem:[%s1 + $0xf0] sm:$0xf]
      %v322 = vld [vmem:[%s1 + $0xf4] sm:$0xf]
      %v323 = vld [vmem:[%s1 + $0xf8] sm:$0xf]
      %v324 = vld [vmem:[%s1 + $0xfc] sm:$0xf]
      %v325 = vld [vmem:[%s1 + $0x100] sm:$0xf]
      %v326 = vld [vmem:[%s1 + $0x104] sm:$0xf]
      %v327 = vld [vmem:[%s1 + $0x108] sm:$0xf]
      %v328 = vld [vmem:[%s1 + $0x10c] sm:$0xf]
      %v329 = vld [vmem:[%s1 + $0x110] sm:$0xf]
      %v330 = vld [vmem:[%s1 + $0x114] sm:$0xf]
      %v331 = vld [vmem:[%s1 + $0x118] sm:$0xf]
      %v332 = vld [vmem:[%s1 + $0x11c] sm:$0xf]
      %v333 = vld [vmem:[%s1 + $0x120] sm:$0xf]
      %v334 = vld [vmem:[%s1 + $0x124] sm:$0xf]
      %v335 = vld [vmem:[%s1 + $0x128] sm:$0xf]
      %v336 = vld [vmem:[%s1 + $0x12c] sm:$0xf]
      %v337 = vld [vmem:[%s1 + $0x130] sm:$0xf]
      %v338 = vld [vmem:[%s1 + $0x134] sm:$0xf]
      %v339 = vld [vmem:[%s1 + $0x138] sm:$0xf]
      %v340 = vld [vmem:[%s1 + $0x13c] sm:$0xf]
      %v341 = vld [vmem:[%s1 + $0x140] sm:$0xf]
      %v342 = vld [vmem:[%s1 + $0x144] sm:$0xf]
      %v343 = vld [vmem:[%s1 + $0x148] sm:$0xf]
      %v344 = vld [vmem:[%s1 + $0x14c] sm:$0xf]
      %v345 = vld [vmem:[%s1 + $0x150] sm:$0xf]
      %v346 = vld [vmem:[%s1 + $0x154] sm:$0xf]
      %v347 = vld [vmem:[%s1 + $0x158] sm:$0xf]
      %v348 = vld [vmem:[%s1 + $0x15c] sm:$0xf]
      %v349 = vld [vmem:[%s1 + $0x160] sm:$0xf]
      %v350 = vld [vmem:[%s1 + $0x164] sm:$0xf]
      %v351 = vld [vmem:[%s1 + $0x168] sm:$0xf]
      %v352 = vld [vmem:[%s1 + $0x16c] sm:$0xf]
      %v353 = vld [vmem:[%s1 + $0x170] sm:$0xf]
      %v354 = vld [vmem:[%s1 + $0x174] sm:$0xf]
      %v355 = vld [vmem:[%s1 + $0x178] sm:$0xf]
      %v356 = vld [vmem:[%s1 + $0x17c] sm:$0xf]
      %v357 = vld [vmem:[%s1 + $0x180] sm:$0xf]
      %v358 = vld [vmem:[%s1 + $0x184] sm:$0xf]
      %v359 = vld [vmem:[%s1 + $0x188] sm:$0xf]
      %v360 = vld [vmem:[%s1 + $0x18c] sm:$0xf]
      %v361 = vld [vmem:[%s1 + $0x190] sm:$0xf]
      %v362 = vld [vmem:[%s1 + $0x194] sm:$0xf]
      %v363 = vld [vmem:[%s1 + $0x198] sm:$0xf]
      %v364 = vld [vmem:[%s1 + $0x19c] sm:$0xf]
      %v365 = vld [vmem:[%s1 + $0x1a0] sm:$0xf]
      %v366 = vld [vmem:[%s1 + $0x1a4] sm:$0xf]
      %v367 = vld [vmem:[%s1 + $0x1a8] sm:$0xf]
      %v368 = vld [vmem:[%s1 + $0x1ac] sm:$0xf]
      %v369 = vld [vmem:[%s1 + $0x1b0] sm:$0xf]
      %v370 = vld [vmem:[%s1 + $0x1b4] sm:$0xf]
      %v371 = vld [vmem:[%s1 + $0x1b8] sm:$0xf]
      %v372 = vld [vmem:[%s1 + $0x1bc] sm:$0xf]
      %v373 = vld [vmem:[%s1 + $0x1c0] sm:$0xf]
      %v374 = vld [vmem:[%s1 + $0x1c4] sm:$0xf]
      %v375 = vld [vmem:[%s1 + $0x1c8] sm:$0xf]
      %v376 = vld [vmem:[%s1 + $0x1cc] sm:$0xf]
      %v377 = vld [vmem:[%s1 + $0x1d0] sm:$0xf]
      %v378 = vld [vmem:[%s1 + $0x1d4] sm:$0xf]
      %v379 = vld [vmem:[%s1 + $0x1d8] sm:$0xf]
      %v380 = vld [vmem:[%s1 + $0x1dc] sm:$0xf]
      %v381 = vld [vmem:[%s1 + $0x1e0] sm:$0xf]
      %v382 = vld [vmem:[%s1 + $0x1e4] sm:$0xf]
      %v383 = vld [vmem:[%s1 + $0x1e8] sm:$0xf]
      %v384 = vld [vmem:[%s1 + $0x1ec] sm:$0xf]
      %v385 = vld [vmem:[%s1 + $0x1f0] sm:$0xf]
      %v386 = vld [vmem:[%s1 + $0x1f4] sm:$0xf]
      %v387 = vld [vmem:[%s1 + $0x1f8] sm:$0xf]
      %v388 = vld [vmem:[%s1 + $0x1fc] sm:$0xf]
      %v389 = vld [vmem:[%s1 + $0x200] sm:$0xf]
      %v390 = vld [vmem:[%s1 + $0x204] sm:$0xf]
      %v391 = vld [vmem:[%s1 + $0x208] sm:$0xf]
      %v392 = vld [vmem:[%s1 + $0x20c] sm:$0xf]
      %v393 = vld [vmem:[%s1 + $0x210] sm:$0xf]
      %v394 = vld [vmem:[%s1 + $0x214] sm:$0xf]
      %v395 = vld [vmem:[%s1 + $0x218] sm:$0xf]
      %v396 = vld [vmem:[%s1 + $0x21c] sm:$0xf]
      %v397 = vld [vmem:[%s1 + $0x220] sm:$0xf]
      %v398 = vld [vmem:[%s1 + $0x224] sm:$0xf]
      %v399 = vld [vmem:[%s1 + $0x228] sm:$0xf]
      %v400 = vld [vmem:[%s1 + $0x22c] sm:$0xf]
      %v401 = vld [vmem:[%s1 + $0x230] sm:$0xf]
      %v402 = vld [vmem:[%s1 + $0x234] sm:$0xf]
      %v403 = vld [vmem:[%s1 + $0x238] sm:$0xf]
      %v404 = vld [vmem:[%s1 + $0x23c] sm:$0xf]
      %v405 = vld [vmem:[%s1 + $0x240] sm:$0xf]
      %v406 = vld [vmem:[%s1 + $0x244] sm:$0xf]
      %v407 = vld [vmem:[%s1 + $0x248] sm:$0xf]
      %v408 = vld [vmem:[%s1 + $0x24c] sm:$0xf]
      %v409 = vld [vmem:[%s1 + $0x250] sm:$0xf]
      %v410 = vld [vmem:[%s1 + $0x254] sm:$0xf]
      %v411 = vld [vmem:[%s1 + $0x258] sm:$0xf]
      %v412 = vld [vmem:[%s1 + $0x25c] sm:$0xf]
      %v413 = vld [vmem:[%s1 + $0x260] sm:$0xf]
      %v414 = vld [vmem:[%s1 + $0x264] sm:$0xf]
      %v415 = vld [vmem:[%s1 + $0x268] sm:$0xf]
      %v416 = vld [vmem:[%s1 + $0x26c] sm:$0xf]
      %v417 = vld [vmem:[%s1 + $0x270] sm:$0xf]
      %v418 = vld [vmem:[%s1 + $0x274] sm:$0xf]
      %v419 = vld [vmem:[%s1 + $0x278] sm:$0xf]
      %v420 = vld [vmem:[%s1 + $0x27c] sm:$0xf]
      %v421 = vld [vmem:[%s1 + $0x280] sm:$0xf]
      %v422 = vld [vmem:[%s1 + $0x284] sm:$0xf]
      %v423 = vld [vmem:[%s1 + $0x288] sm:$0xf]
      %v424 = vld [vmem:[%s1 + $0x28c] sm:$0xf]
      %v425 = vld [vmem:[%s1 + $0x290] sm:$0xf]
      %v426 = vld [vmem:[%s1 + $0x294] sm:$0xf]
      %v427 = vld [vmem:[%s1 + $0x298] sm:$0xf]
      %v428 = vld [vmem:[%s1 + $0x29c] sm:$0xf]
      %v429 = vld [vmem:[%s1 + $0x2a0] sm:$0xf]
      %v430 = vld [vmem:[%s1 + $0x2a4] sm:$0xf]
      %v431 = vld [vmem:[%s1 + $0x2a8] sm:$0xf]
      %v432 = vld [vmem:[%s1 + $0x2ac] sm:$0xf]
      %v433 = vld [vmem:[%s1 + $0x2b0] sm:$0xf]
      %v434 = vld [vmem:[%s1 + $0x2b4] sm:$0xf]
      %v435 = vld [vmem:[%s1 + $0x2b8] sm:$0xf]
      %v436 = vld [vmem:[%s1 + $0x2bc] sm:$0xf]
      %v437 = vld [vmem:[%s1 + $0x2c0] sm:$0xf]
      %v438 = vld [vmem:[%s1 + $0x2c4] sm:$0xf]
      %v439 = vld [vmem:[%s1 + $0x2c8] sm:$0xf]
      %v440 = vld [vmem:[%s1 + $0x2cc] sm:$0xf]
      %v441 = vld [vmem:[%s1 + $0x2d0] sm:$0xf]
      %v442 = vld [vmem:[%s1 + $0x2d4] sm:$0xf]
      %v443 = vld [vmem:[%s1 + $0x2d8] sm:$0xf]
      %v444 = vld [vmem:[%s1 + $0x2dc] sm:$0xf]
      %v445 = vld [vmem:[%s1 + $0x2e0] sm:$0xf]
      %v446 = vld [vmem:[%s1 + $0x2e4] sm:$0xf]
      %v447 = vld [vmem:[%s1 + $0x2e8] sm:$0xf]
      %v448 = vld [vmem:[%s1 + $0x2ec] sm:$0xf]
      %v449 = vld [vmem:[%s1 + $0x2f0] sm:$0xf]
      %v450 = vld [vmem:[%s1 + $0x2f4] sm:$0xf]
      %v451 = vld [vmem:[%s1 + $0x2f8] sm:$0xf]
      %v452 = vld [vmem:[%s1 + $0x2fc] sm:$0xf]
      %v453 = vld [vmem:[%s1 + $0x300] sm:$0xf]
      %v454 = vld [vmem:[%s1 + $0x304] sm:$0xf]
      %v455 = vld [vmem:[%s1 + $0x308] sm:$0xf]
      %v456 = vld [vmem:[%s1 + $0x30c] sm:$0xf]
      %v457 = vld [vmem:[%s1 + $0x310] sm:$0xf]
      %v458 = vld [vmem:[%s1 + $0x314] sm:$0xf]
      %v459 = vld [vmem:[%s1 + $0x318] sm:$0xf]
      %v460 = vld [vmem:[%s1 + $0x31c] sm:$0xf]
      %v461 = vld [vmem:[%s1 + $0x320] sm:$0xf]
      %v462 = vld [vmem:[%s1 + $0x324] sm:$0xf]
      %v463 = vld [vmem:[%s1 + $0x328] sm:$0xf]
      %v464 = vld [vmem:[%s1 + $0x32c] sm:$0xf]
      %v465 = vld [vmem:[%s1 + $0x330] sm:$0xf]
      %v466 = vld [vmem:[%s1 + $0x334] sm:$0xf]
      %v467 = vld [vmem:[%s1 + $0x338] sm:$0xf]
      %v468 = vld [vmem:[%s1 + $0x33c] sm:$0xf]
      %v469 = vld [vmem:[%s1 + $0x340] sm:$0xf]
      %v470 = vld [vmem:[%s1 + $0x344] sm:$0xf]
      %v471 = vld [vmem:[%s1 + $0x348] sm:$0xf]
      %v472 = vld [vmem:[%s1 + $0x34c] sm:$0xf]
      %v473 = vld [vmem:[%s1 + $0x350] sm:$0xf]
      %v474 = vld [vmem:[%s1 + $0x354] sm:$0xf]
      %v475 = vld [vmem:[%s1 + $0x358] sm:$0xf]
      %v476 = vld [vmem:[%s1 + $0x35c] sm:$0xf]
      %v477 = vld [vmem:[%s1 + $0x360] sm:$0xf]
      %v478 = vld [vmem:[%s1 + $0x364] sm:$0xf]
      %v479 = vld [vmem:[%s1 + $0x368] sm:$0xf]
      %v480 = vld [vmem:[%s1 + $0x36c] sm:$0xf]
      %v481 = vld [vmem:[%s1 + $0x370] sm:$0xf]
      %v482 = vld [vmem:[%s1 + $0x374] sm:$0xf]
      %v483 = vld [vmem:[%s1 + $0x378] sm:$0xf]
      %v484 = vld [vmem:[%s1 + $0x37c] sm:$0xf]
      %v485 = vld [vmem:[%s1 + $0x380] sm:$0xf]
      %v486 = vld [vmem:[%s1 + $0x384] sm:$0xf]
      %v487 = vld [vmem:[%s1 + $0x388] sm:$0xf]
      %v488 = vld [vmem:[%s1 + $0x38c] sm:$0xf]
      %v489 = vld [vmem:[%s1 + $0x390] sm:$0xf]
      %v490 = vld [vmem:[%s1 + $0x394] sm:$0xf]
      %v491 = vld [vmem:[%s1 + $0x398] sm:$0xf]
      %v492 = vld [vmem:[%s1 + $0x39c] sm:$0xf]
      %v493 = vld [vmem:[%s1 + $0x3a0] sm:$0xf]
      %v494 = vld [vmem:[%s1 + $0x3a4] sm:$0xf]
      %v495 = vld [vmem:[%s1 + $0x3a8] sm:$0xf]
      %v496 = vld [vmem:[%s1 + $0x3ac] sm:$0xf]
      %v497 = vld [vmem:[%s1 + $0x3b0] sm:$0xf]
      %v498 = vld [vmem:[%s1 + $0x3b4] sm:$0xf]
      %v499 = vld [vmem:[%s1 + $0x3b8] sm:$0xf]
      %v500 = vld [vmem:[%s1 + $0x3bc] sm:$0xf]
      %v501 = vld [vmem:[%s1 + $0x3c0] sm:$0xf]
      %v502 = vld [vmem:[%s1 + $0x3c4] sm:$0xf]
      %v503 = vld [vmem:[%s1 + $0x3c8] sm:$0xf]
      %v504 = vld [vmem:[%s1 + $0x3cc] sm:$0xf]
      %v505 = vld [vmem:[%s1 + $0x3d0] sm:$0xf]
      %v506 = vld [vmem:[%s1 + $0x3d4] sm:$0xf]
      %v507 = vld [vmem:[%s1 + $0x3d8] sm:$0xf]
      %v508 = vld [vmem:[%s1 + $0x3dc] sm:$0xf]
      %v509 = vld [vmem:[%s1 + $0x3e0] sm:$0xf]
      %v510 = vld [vmem:[%s1 + $0x3e4] sm:$0xf]
      %v511 = vld [vmem:[%s1 + $0x3e8] sm:$0xf]
      %v512 = vld [vmem:[%s1 + $0x3ec] sm:$0xf]
      %v513 = vld [vmem:[%s1 + $0x3f0] sm:$0xf]
      %v514 = vld [vmem:[%s1 + $0x3f4] sm:$0xf]
      %v515 = vld [vmem:[%s1 + $0x3f8] sm:$0xf]
      %v516 = vld [vmem:[%s1 + $0x3fc] sm:$0xf]
      %v517 = vld [vmem:[%s2] sm:$0x1]
      %v519 = vlaneseq
      %v520 = vshrl.u32 %v519, 7
      %v521 = vsub.s32 0, %v520
      %v522 = vrot.slane %v517, %v521
      %v580 = vunpack.c.l.b16 %v205
      %v581 = vunpack.c.h.b16 %v205
      %v582 = vunpack.c.l.b16 %v206
      %v583 = vunpack.c.h.b16 %v206
      %v584 = vunpack.c.l.b16 %v207
      %v585 = vunpack.c.h.b16 %v207
      %v586 = vunpack.c.l.b16 %v208
      %v587 = vunpack.c.h.b16 %v208
      %v588 = vunpack.c.l.b16 %v209
      %v589 = vunpack.c.h.b16 %v209
      %v590 = vunpack.c.l.b16 %v210
      %v591 = vunpack.c.h.b16 %v210
      %v592 = vunpack.c.l.b16 %v211
      %v593 = vunpack.c.h.b16 %v211
      %v594 = vunpack.c.l.b16 %v212
      %v595 = vunpack.c.h.b16 %v212
      %v596 = vunpack.c.l.b16 %v213
      %v597 = vunpack.c.h.b16 %v213
      %v598 = vunpack.c.l.b16 %v214
      %v599 = vunpack.c.h.b16 %v214
      %v600 = vunpack.c.l.b16 %v215
      %v601 = vunpack.c.h.b16 %v215
      %v602 = vunpack.c.l.b16 %v216
      %v603 = vunpack.c.h.b16 %v216
      %v604 = vunpack.c.l.b16 %v217
      %v605 = vunpack.c.h.b16 %v217
      %v606 = vunpack.c.l.b16 %v218
      %v607 = vunpack.c.h.b16 %v218
      %v608 = vunpack.c.l.b16 %v219
      %v609 = vunpack.c.h.b16 %v219
      %v610 = vunpack.c.l.b16 %v220
      %v611 = vunpack.c.h.b16 %v220
      %v612 = vunpack.c.l.b16 %v221
      %v613 = vunpack.c.h.b16 %v221
      %v614 = vunpack.c.l.b16 %v222
      %v615 = vunpack.c.h.b16 %v222
      %v616 = vunpack.c.l.b16 %v223
      %v617 = vunpack.c.h.b16 %v223
      %v618 = vunpack.c.l.b16 %v224
      %v619 = vunpack.c.h.b16 %v224
      %v620 = vunpack.c.l.b16 %v225
      %v621 = vunpack.c.h.b16 %v225
      %v622 = vunpack.c.l.b16 %v226
      %v623 = vunpack.c.h.b16 %v226
      %v624 = vunpack.c.l.b16 %v227
      %v625 = vunpack.c.h.b16 %v227
      %v626 = vunpack.c.l.b16 %v228
      %v627 = vunpack.c.h.b16 %v228
      %v628 = vunpack.c.l.b16 %v229
      %v629 = vunpack.c.h.b16 %v229
      %v630 = vunpack.c.l.b16 %v230
      %v631 = vunpack.c.h.b16 %v230
      %v632 = vunpack.c.l.b16 %v231
      %v633 = vunpack.c.h.b16 %v231
      %v634 = vunpack.c.l.b16 %v232
      %v635 = vunpack.c.h.b16 %v232
      %v636 = vunpack.c.l.b16 %v233
      %v637 = vunpack.c.h.b16 %v233
      %v638 = vunpack.c.l.b16 %v234
      %v639 = vunpack.c.h.b16 %v234
      %v640 = vunpack.c.l.b16 %v235
      %v641 = vunpack.c.h.b16 %v235
      %v642 = vunpack.c.l.b16 %v236
      %v643 = vunpack.c.h.b16 %v236
      %v644 = vunpack.c.l.b16 %v237
      %v645 = vunpack.c.h.b16 %v237
      %v646 = vunpack.c.l.b16 %v238
      %v647 = vunpack.c.h.b16 %v238
      %v648 = vunpack.c.l.b16 %v239
      %v649 = vunpack.c.h.b16 %v239
      %v650 = vunpack.c.l.b16 %v240
      %v651 = vunpack.c.h.b16 %v240
      %v652 = vunpack.c.l.b16 %v241
      %v653 = vunpack.c.h.b16 %v241
      %v654 = vunpack.c.l.b16 %v242
      %v655 = vunpack.c.h.b16 %v242
      %v656 = vunpack.c.l.b16 %v243
      %v657 = vunpack.c.h.b16 %v243
      %v658 = vunpack.c.l.b16 %v244
      %v659 = vunpack.c.h.b16 %v244
      %v660 = vunpack.c.l.b16 %v245
      %v661 = vunpack.c.h.b16 %v245
      %v662 = vunpack.c.l.b16 %v246
      %v663 = vunpack.c.h.b16 %v246
      %v664 = vunpack.c.l.b16 %v247
      %v665 = vunpack.c.h.b16 %v247
      %v666 = vunpack.c.l.b16 %v248
      %v667 = vunpack.c.h.b16 %v248
      %v668 = vunpack.c.l.b16 %v249
      %v669 = vunpack.c.h.b16 %v249
      %v670 = vunpack.c.l.b16 %v250
      %v671 = vunpack.c.h.b16 %v250
      %v672 = vunpack.c.l.b16 %v251
      %v673 = vunpack.c.h.b16 %v251
      %v674 = vunpack.c.l.b16 %v252
      %v675 = vunpack.c.h.b16 %v252
      %v676 = vunpack.c.l.b16 %v253
      %v677 = vunpack.c.h.b16 %v253
      %v678 = vunpack.c.l.b16 %v254
      %v679 = vunpack.c.h.b16 %v254
      %v680 = vunpack.c.l.b16 %v255
      %v681 = vunpack.c.h.b16 %v255
      %v682 = vunpack.c.l.b16 %v256
      %v683 = vunpack.c.h.b16 %v256
      %v684 = vunpack.c.l.b16 %v257
      %v685 = vunpack.c.h.b16 %v257
      %v686 = vunpack.c.l.b16 %v258
      %v687 = vunpack.c.h.b16 %v258
      %v688 = vunpack.c.l.b16 %v259
      %v689 = vunpack.c.h.b16 %v259
      %v690 = vunpack.c.l.b16 %v260
      %v691 = vunpack.c.h.b16 %v260
      %v692 = vpack.c.b16 %v596, %v580
      %v693 = vpack.c.b16 %v597, %v581
      %v694 = vpack.c.b16 %v598, %v582
      %v695 = vpack.c.b16 %v599, %v583
      %v696 = vpack.c.b16 %v600, %v584
      %v697 = vpack.c.b16 %v601, %v585
      %v698 = vpack.c.b16 %v602, %v586
      %v699 = vpack.c.b16 %v603, %v587
      %v700 = vpack.c.b16 %v604, %v588
      %v701 = vpack.c.b16 %v605, %v589
      %v702 = vpack.c.b16 %v606, %v590
      %v703 = vpack.c.b16 %v607, %v591
      %v704 = vpack.c.b16 %v608, %v592
      %v705 = vpack.c.b16 %v609, %v593
      %v706 = vpack.c.b16 %v610, %v594
      %v707 = vpack.c.b16 %v611, %v595
      %v708 = vpack.c.b16 %v628, %v612
      %v709 = vpack.c.b16 %v629, %v613
      %v710 = vpack.c.b16 %v630, %v614
      %v711 = vpack.c.b16 %v631, %v615
      %v712 = vpack.c.b16 %v632, %v616
      %v713 = vpack.c.b16 %v633, %v617
      %v714 = vpack.c.b16 %v634, %v618
      %v715 = vpack.c.b16 %v635, %v619
      %v716 = vpack.c.b16 %v636, %v620
      %v717 = vpack.c.b16 %v637, %v621
      %v718 = vpack.c.b16 %v638, %v622
      %v719 = vpack.c.b16 %v639, %v623
      %v720 = vpack.c.b16 %v640, %v624
      %v721 = vpack.c.b16 %v641, %v625
      %v722 = vpack.c.b16 %v642, %v626
      %v723 = vpack.c.b16 %v643, %v627
      %v724 = vpack.c.b16 %v660, %v644
      %v725 = vpack.c.b16 %v661, %v645
      %v726 = vpack.c.b16 %v662, %v646
      %v727 = vpack.c.b16 %v663, %v647
      %v728 = vpack.c.b16 %v664, %v648
      %v729 = vpack.c.b16 %v665, %v649
      %v730 = vpack.c.b16 %v666, %v650
      %v731 = vpack.c.b16 %v667, %v651
      %v732 = vpack.c.b16 %v668, %v652
      %v733 = vpack.c.b16 %v669, %v653
      %v734 = vpack.c.b16 %v670, %v654
      %v735 = vpack.c.b16 %v671, %v655
      %v736 = vpack.c.b16 %v672, %v656
      %v737 = vpack.c.b16 %v673, %v657
      %v738 = vpack.c.b16 %v674, %v658
      %v739 = vpack.c.b16 %v675, %v659
      %v740 = vpack.c.b16 %v676, %v676
      %v741 = vpack.c.b16 %v677, %v677
      %v742 = vpack.c.b16 %v678, %v678
      %v743 = vpack.c.b16 %v679, %v679
      %v744 = vpack.c.b16 %v680, %v680
      %v745 = vpack.c.b16 %v681, %v681
      %v746 = vpack.c.b16 %v682, %v682
      %v747 = vpack.c.b16 %v683, %v683
      %v748 = vpack.c.b16 %v684, %v684
      %v749 = vpack.c.b16 %v685, %v685
      %v750 = vpack.c.b16 %v686, %v686
      %v751 = vpack.c.b16 %v687, %v687
      %v752 = vpack.c.b16 %v688, %v688
      %v753 = vpack.c.b16 %v689, %v689
      %v754 = vpack.c.b16 %v690, %v690
      %v755 = vpack.c.b16 %v691, %v691
      %v1076 = vunpack.c.l.b16 %v261
      %v1077 = vunpack.c.l.b16 %v262
      %v1078 = vunpack.c.l.b16 %v263
      %v1079 = vunpack.c.l.b16 %v264
      %v1080 = vunpack.c.l.b16 %v265
      %v1081 = vunpack.c.l.b16 %v266
      %v1082 = vunpack.c.l.b16 %v267
      %v1083 = vunpack.c.l.b16 %v268
      %v1084 = vunpack.c.l.b16 %v269
      %v1085 = vunpack.c.l.b16 %v270
      %v1086 = vunpack.c.l.b16 %v271
      %v1087 = vunpack.c.l.b16 %v272
      %v1088 = vunpack.c.l.b16 %v273
      %v1089 = vunpack.c.l.b16 %v274
      %v1090 = vunpack.c.l.b16 %v275
      %v1091 = vunpack.c.l.b16 %v276
      %v1092 = vunpack.c.l.b16 %v277
      %v1093 = vunpack.c.l.b16 %v278
      %v1094 = vunpack.c.l.b16 %v279
      %v1095 = vunpack.c.l.b16 %v280
      %v1096 = vunpack.c.l.b16 %v281
      %v1097 = vunpack.c.l.b16 %v282
      %v1098 = vunpack.c.l.b16 %v283
      %v1099 = vunpack.c.l.b16 %v284
      %v1100 = vunpack.c.l.b16 %v285
      %v1101 = vunpack.c.l.b16 %v286
      %v1102 = vunpack.c.l.b16 %v287
      %v1103 = vunpack.c.l.b16 %v288
      %v1104 = vunpack.c.l.b16 %v289
      %v1105 = vunpack.c.l.b16 %v290
      %v1106 = vunpack.c.l.b16 %v291
      %v1107 = vunpack.c.l.b16 %v292
      %v1108 = vunpack.c.l.b16 %v293
      %v1109 = vunpack.c.l.b16 %v294
      %v1110 = vunpack.c.l.b16 %v295
      %v1111 = vunpack.c.l.b16 %v296
      %v1112 = vunpack.c.l.b16 %v297
      %v1113 = vunpack.c.l.b16 %v298
      %v1114 = vunpack.c.l.b16 %v299
      %v1115 = vunpack.c.l.b16 %v300
      %v1116 = vunpack.c.l.b16 %v301
      %v1117 = vunpack.c.l.b16 %v302
      %v1118 = vunpack.c.l.b16 %v303
      %v1119 = vunpack.c.l.b16 %v304
      %v1120 = vunpack.c.l.b16 %v305
      %v1121 = vunpack.c.l.b16 %v306
      %v1122 = vunpack.c.l.b16 %v307
      %v1123 = vunpack.c.l.b16 %v308
      %v1124 = vunpack.c.l.b16 %v309
      %v1125 = vunpack.c.l.b16 %v310
      %v1126 = vunpack.c.l.b16 %v311
      %v1127 = vunpack.c.l.b16 %v312
      %v1128 = vunpack.c.l.b16 %v313
      %v1129 = vunpack.c.l.b16 %v314
      %v1130 = vunpack.c.l.b16 %v315
      %v1131 = vunpack.c.l.b16 %v316
      %v1132 = vunpack.c.l.b16 %v317
      %v1133 = vunpack.c.l.b16 %v318
      %v1134 = vunpack.c.l.b16 %v319
      %v1135 = vunpack.c.l.b16 %v320
      %v1136 = vunpack.c.l.b16 %v321
      %v1137 = vunpack.c.l.b16 %v322
      %v1138 = vunpack.c.l.b16 %v323
      %v1139 = vunpack.c.l.b16 %v324
      %v1140 = vunpack.c.l.b16 %v325
      %v1141 = vunpack.c.l.b16 %v326
      %v1142 = vunpack.c.l.b16 %v327
      %v1143 = vunpack.c.l.b16 %v328
      %v1144 = vunpack.c.l.b16 %v329
      %v1145 = vunpack.c.l.b16 %v330
      %v1146 = vunpack.c.l.b16 %v331
      %v1147 = vunpack.c.l.b16 %v332
      %v1148 = vunpack.c.l.b16 %v333
      %v1149 = vunpack.c.l.b16 %v334
      %v1150 = vunpack.c.l.b16 %v335
      %v1151 = vunpack.c.l.b16 %v336
      %v1152 = vunpack.c.l.b16 %v337
      %v1153 = vunpack.c.l.b16 %v338
      %v1154 = vunpack.c.l.b16 %v339
      %v1155 = vunpack.c.l.b16 %v340
      %v1156 = vunpack.c.l.b16 %v341
      %v1157 = vunpack.c.l.b16 %v342
      %v1158 = vunpack.c.l.b16 %v343
      %v1159 = vunpack.c.l.b16 %v344
      %v1160 = vunpack.c.l.b16 %v345
      %v1161 = vunpack.c.l.b16 %v346
      %v1162 = vunpack.c.l.b16 %v347
      %v1163 = vunpack.c.l.b16 %v348
      %v1164 = vunpack.c.l.b16 %v349
      %v1165 = vunpack.c.l.b16 %v350
      %v1166 = vunpack.c.l.b16 %v351
      %v1167 = vunpack.c.l.b16 %v352
      %v1168 = vunpack.c.l.b16 %v353
      %v1169 = vunpack.c.l.b16 %v354
      %v1170 = vunpack.c.l.b16 %v355
      %v1171 = vunpack.c.l.b16 %v356
      %v1172 = vunpack.c.l.b16 %v357
      %v1173 = vunpack.c.l.b16 %v358
      %v1174 = vunpack.c.l.b16 %v359
      %v1175 = vunpack.c.l.b16 %v360
      %v1176 = vunpack.c.l.b16 %v361
      %v1177 = vunpack.c.l.b16 %v362
      %v1178 = vunpack.c.l.b16 %v363
      %v1179 = vunpack.c.l.b16 %v364
      %v1180 = vunpack.c.l.b16 %v365
      %v1181 = vunpack.c.l.b16 %v366
      %v1182 = vunpack.c.l.b16 %v367
      %v1183 = vunpack.c.l.b16 %v368
      %v1184 = vunpack.c.l.b16 %v369
      %v1185 = vunpack.c.l.b16 %v370
      %v1186 = vunpack.c.l.b16 %v371
      %v1187 = vunpack.c.l.b16 %v372
      %v1188 = vunpack.c.l.b16 %v373
      %v1189 = vunpack.c.l.b16 %v374
      %v1190 = vunpack.c.l.b16 %v375
      %v1191 = vunpack.c.l.b16 %v376
      %v1192 = vunpack.c.l.b16 %v377
      %v1193 = vunpack.c.l.b16 %v378
      %v1194 = vunpack.c.l.b16 %v379
      %v1195 = vunpack.c.l.b16 %v380
      %v1196 = vunpack.c.l.b16 %v381
      %v1197 = vunpack.c.l.b16 %v382
      %v1198 = vunpack.c.l.b16 %v383
      %v1199 = vunpack.c.l.b16 %v384
      %v1200 = vunpack.c.l.b16 %v385
      %v1201 = vunpack.c.l.b16 %v386
      %v1202 = vunpack.c.l.b16 %v387
      %v1203 = vunpack.c.l.b16 %v388
      %v1204 = vunpack.c.l.b16 %v389
      %v1205 = vunpack.c.l.b16 %v390
      %v1206 = vunpack.c.l.b16 %v391
      %v1207 = vunpack.c.l.b16 %v392
      %v1208 = vunpack.c.l.b16 %v393
      %v1209 = vunpack.c.l.b16 %v394
      %v1210 = vunpack.c.l.b16 %v395
      %v1211 = vunpack.c.l.b16 %v396
      %v1212 = vunpack.c.l.b16 %v397
      %v1213 = vunpack.c.l.b16 %v398
      %v1214 = vunpack.c.l.b16 %v399
      %v1215 = vunpack.c.l.b16 %v400
      %v1216 = vunpack.c.l.b16 %v401
      %v1217 = vunpack.c.l.b16 %v402
      %v1218 = vunpack.c.l.b16 %v403
      %v1219 = vunpack.c.l.b16 %v404
      %v1220 = vunpack.c.l.b16 %v405
      %v1221 = vunpack.c.l.b16 %v406
      %v1222 = vunpack.c.l.b16 %v407
      %v1223 = vunpack.c.l.b16 %v408
      %v1224 = vunpack.c.l.b16 %v409
      %v1225 = vunpack.c.l.b16 %v410
      %v1226 = vunpack.c.l.b16 %v411
      %v1227 = vunpack.c.l.b16 %v412
      %v1228 = vunpack.c.l.b16 %v413
      %v1229 = vunpack.c.l.b16 %v414
      %v1230 = vunpack.c.l.b16 %v415
      %v1231 = vunpack.c.l.b16 %v416
      %v1232 = vunpack.c.l.b16 %v417
      %v1233 = vunpack.c.l.b16 %v418
      %v1234 = vunpack.c.l.b16 %v419
      %v1235 = vunpack.c.l.b16 %v420
      %v1236 = vunpack.c.l.b16 %v421
      %v1237 = vunpack.c.l.b16 %v422
      %v1238 = vunpack.c.l.b16 %v423
      %v1239 = vunpack.c.l.b16 %v424
      %v1240 = vunpack.c.l.b16 %v425
      %v1241 = vunpack.c.l.b16 %v426
      %v1242 = vunpack.c.l.b16 %v427
      %v1243 = vunpack.c.l.b16 %v428
      %v1244 = vunpack.c.l.b16 %v429
      %v1245 = vunpack.c.l.b16 %v430
      %v1246 = vunpack.c.l.b16 %v431
      %v1247 = vunpack.c.l.b16 %v432
      %v1248 = vunpack.c.l.b16 %v433
      %v1249 = vunpack.c.l.b16 %v434
      %v1250 = vunpack.c.l.b16 %v435
      %v1251 = vunpack.c.l.b16 %v436
      %v1252 = vunpack.c.l.b16 %v437
      %v1253 = vunpack.c.l.b16 %v438
      %v1254 = vunpack.c.l.b16 %v439
      %v1255 = vunpack.c.l.b16 %v440
      %v1256 = vunpack.c.l.b16 %v441
      %v1257 = vunpack.c.l.b16 %v442
      %v1258 = vunpack.c.l.b16 %v443
      %v1259 = vunpack.c.l.b16 %v444
      %v1260 = vunpack.c.l.b16 %v445
      %v1261 = vunpack.c.l.b16 %v446
      %v1262 = vunpack.c.l.b16 %v447
      %v1263 = vunpack.c.l.b16 %v448
      %v1264 = vunpack.c.l.b16 %v449
      %v1265 = vunpack.c.l.b16 %v450
      %v1266 = vunpack.c.l.b16 %v451
      %v1267 = vunpack.c.l.b16 %v452
      %v1268 = vunpack.c.l.b16 %v453
      %v1269 = vunpack.c.l.b16 %v454
      %v1270 = vunpack.c.l.b16 %v455
      %v1271 = vunpack.c.l.b16 %v456
      %v1272 = vunpack.c.l.b16 %v457
      %v1273 = vunpack.c.l.b16 %v458
      %v1274 = vunpack.c.l.b16 %v459
      %v1275 = vunpack.c.l.b16 %v460
      %v1276 = vunpack.c.l.b16 %v461
      %v1277 = vunpack.c.l.b16 %v462
      %v1278 = vunpack.c.l.b16 %v463
      %v1279 = vunpack.c.l.b16 %v464
      %v1280 = vunpack.c.l.b16 %v465
      %v1281 = vunpack.c.l.b16 %v466
      %v1282 = vunpack.c.l.b16 %v467
      %v1283 = vunpack.c.l.b16 %v468
      %v1284 = vunpack.c.l.b16 %v469
      %v1285 = vunpack.c.l.b16 %v470
      %v1286 = vunpack.c.l.b16 %v471
      %v1287 = vunpack.c.l.b16 %v472
      %v1288 = vunpack.c.l.b16 %v473
      %v1289 = vunpack.c.l.b16 %v474
      %v1290 = vunpack.c.l.b16 %v475
      %v1291 = vunpack.c.l.b16 %v476
      %v1292 = vunpack.c.l.b16 %v477
      %v1293 = vunpack.c.l.b16 %v478
      %v1294 = vunpack.c.l.b16 %v479
      %v1295 = vunpack.c.l.b16 %v480
      %v1296 = vunpack.c.l.b16 %v481
      %v1297 = vunpack.c.l.b16 %v482
      %v1298 = vunpack.c.l.b16 %v483
      %v1299 = vunpack.c.l.b16 %v484
      %v1300 = vunpack.c.l.b16 %v485
      %v1301 = vunpack.c.l.b16 %v486
      %v1302 = vunpack.c.l.b16 %v487
      %v1303 = vunpack.c.l.b16 %v488
      %v1304 = vunpack.c.l.b16 %v489
      %v1305 = vunpack.c.l.b16 %v490
      %v1306 = vunpack.c.l.b16 %v491
      %v1307 = vunpack.c.l.b16 %v492
      %v1308 = vunpack.c.l.b16 %v493
      %v1309 = vunpack.c.l.b16 %v494
      %v1310 = vunpack.c.l.b16 %v495
      %v1311 = vunpack.c.l.b16 %v496
      %v1312 = vunpack.c.l.b16 %v497
      %v1313 = vunpack.c.l.b16 %v498
      %v1314 = vunpack.c.l.b16 %v499
      %v1315 = vunpack.c.l.b16 %v500
      %v1316 = vunpack.c.l.b16 %v501
      %v1317 = vunpack.c.l.b16 %v502
      %v1318 = vunpack.c.l.b16 %v503
      %v1319 = vunpack.c.l.b16 %v504
      %v1320 = vunpack.c.l.b16 %v505
      %v1321 = vunpack.c.l.b16 %v506
      %v1322 = vunpack.c.l.b16 %v507
      %v1323 = vunpack.c.l.b16 %v508
      %v1324 = vunpack.c.l.b16 %v509
      %v1325 = vunpack.c.l.b16 %v510
      %v1326 = vunpack.c.l.b16 %v511
      %v1327 = vunpack.c.l.b16 %v512
      %v1328 = vunpack.c.l.b16 %v513
      %v1329 = vunpack.c.l.b16 %v514
      %v1330 = vunpack.c.l.b16 %v515
      %v1331 = vunpack.c.l.b16 %v516
      %v1332 = vpack.c.b16 %v1077, %v1076
      %v1333 = vpack.c.b16 %v1079, %v1078
      %v1334 = vpack.c.b16 %v1081, %v1080
      %v1335 = vpack.c.b16 %v1083, %v1082
      %v1336 = vpack.c.b16 %v1085, %v1084
      %v1337 = vpack.c.b16 %v1087, %v1086
      %v1338 = vpack.c.b16 %v1089, %v1088
      %v1339 = vpack.c.b16 %v1091, %v1090
      %v1340 = vpack.c.b16 %v1093, %v1092
      %v1341 = vpack.c.b16 %v1095, %v1094
      %v1342 = vpack.c.b16 %v1097, %v1096
      %v1343 = vpack.c.b16 %v1099, %v1098
      %v1344 = vpack.c.b16 %v1101, %v1100
      %v1345 = vpack.c.b16 %v1103, %v1102
      %v1346 = vpack.c.b16 %v1105, %v1104
      %v1347 = vpack.c.b16 %v1107, %v1106
      %v1348 = vpack.c.b16 %v1109, %v1108
      %v1349 = vpack.c.b16 %v1111, %v1110
      %v1350 = vpack.c.b16 %v1113, %v1112
      %v1351 = vpack.c.b16 %v1115, %v1114
      %v1352 = vpack.c.b16 %v1117, %v1116
      %v1353 = vpack.c.b16 %v1119, %v1118
      %v1354 = vpack.c.b16 %v1121, %v1120
      %v1355 = vpack.c.b16 %v1123, %v1122
      %v1356 = vpack.c.b16 %v1125, %v1124
      %v1357 = vpack.c.b16 %v1127, %v1126
      %v1358 = vpack.c.b16 %v1129, %v1128
      %v1359 = vpack.c.b16 %v1131, %v1130
      %v1360 = vpack.c.b16 %v1133, %v1132
      %v1361 = vpack.c.b16 %v1135, %v1134
      %v1362 = vpack.c.b16 %v1137, %v1136
      %v1363 = vpack.c.b16 %v1139, %v1138
      %v1364 = vpack.c.b16 %v1141, %v1140
      %v1365 = vpack.c.b16 %v1143, %v1142
      %v1366 = vpack.c.b16 %v1145, %v1144
      %v1367 = vpack.c.b16 %v1147, %v1146
      %v1368 = vpack.c.b16 %v1149, %v1148
      %v1369 = vpack.c.b16 %v1151, %v1150
      %v1370 = vpack.c.b16 %v1153, %v1152
      %v1371 = vpack.c.b16 %v1155, %v1154
      %v1372 = vpack.c.b16 %v1157, %v1156
      %v1373 = vpack.c.b16 %v1159, %v1158
      %v1374 = vpack.c.b16 %v1161, %v1160
      %v1375 = vpack.c.b16 %v1163, %v1162
      %v1376 = vpack.c.b16 %v1165, %v1164
      %v1377 = vpack.c.b16 %v1167, %v1166
      %v1378 = vpack.c.b16 %v1169, %v1168
      %v1379 = vpack.c.b16 %v1171, %v1170
      %v1380 = vpack.c.b16 %v1173, %v1172
      %v1381 = vpack.c.b16 %v1175, %v1174
      %v1382 = vpack.c.b16 %v1177, %v1176
      %v1383 = vpack.c.b16 %v1179, %v1178
      %v1384 = vpack.c.b16 %v1181, %v1180
      %v1385 = vpack.c.b16 %v1183, %v1182
      %v1386 = vpack.c.b16 %v1185, %v1184
      %v1387 = vpack.c.b16 %v1187, %v1186
      %v1388 = vpack.c.b16 %v1189, %v1188
      %v1389 = vpack.c.b16 %v1191, %v1190
      %v1390 = vpack.c.b16 %v1193, %v1192
      %v1391 = vpack.c.b16 %v1195, %v1194
      %v1392 = vpack.c.b16 %v1197, %v1196
      %v1393 = vpack.c.b16 %v1199, %v1198
      %v1394 = vpack.c.b16 %v1201, %v1200
      %v1395 = vpack.c.b16 %v1203, %v1202
      %v1396 = vpack.c.b16 %v1205, %v1204
      %v1397 = vpack.c.b16 %v1207, %v1206
      %v1398 = vpack.c.b16 %v1209, %v1208
      %v1399 = vpack.c.b16 %v1211, %v1210
      %v1400 = vpack.c.b16 %v1213, %v1212
      %v1401 = vpack.c.b16 %v1215, %v1214
      %v1402 = vpack.c.b16 %v1217, %v1216
      %v1403 = vpack.c.b16 %v1219, %v1218
      %v1404 = vpack.c.b16 %v1221, %v1220
      %v1405 = vpack.c.b16 %v1223, %v1222
      %v1406 = vpack.c.b16 %v1225, %v1224
      %v1407 = vpack.c.b16 %v1227, %v1226
      %v1408 = vpack.c.b16 %v1229, %v1228
      %v1409 = vpack.c.b16 %v1231, %v1230
      %v1410 = vpack.c.b16 %v1233, %v1232
      %v1411 = vpack.c.b16 %v1235, %v1234
      %v1412 = vpack.c.b16 %v1237, %v1236
      %v1413 = vpack.c.b16 %v1239, %v1238
      %v1414 = vpack.c.b16 %v1241, %v1240
      %v1415 = vpack.c.b16 %v1243, %v1242
      %v1416 = vpack.c.b16 %v1245, %v1244
      %v1417 = vpack.c.b16 %v1247, %v1246
      %v1418 = vpack.c.b16 %v1249, %v1248
      %v1419 = vpack.c.b16 %v1251, %v1250
      %v1420 = vpack.c.b16 %v1253, %v1252
      %v1421 = vpack.c.b16 %v1255, %v1254
      %v1422 = vpack.c.b16 %v1257, %v1256
      %v1423 = vpack.c.b16 %v1259, %v1258
      %v1424 = vpack.c.b16 %v1261, %v1260
      %v1425 = vpack.c.b16 %v1263, %v1262
      %v1426 = vpack.c.b16 %v1265, %v1264
      %v1427 = vpack.c.b16 %v1267, %v1266
      %v1428 = vpack.c.b16 %v1269, %v1268
      %v1429 = vpack.c.b16 %v1271, %v1270
      %v1430 = vpack.c.b16 %v1273, %v1272
      %v1431 = vpack.c.b16 %v1275, %v1274
      %v1432 = vpack.c.b16 %v1277, %v1276
      %v1433 = vpack.c.b16 %v1279, %v1278
      %v1434 = vpack.c.b16 %v1281, %v1280
      %v1435 = vpack.c.b16 %v1283, %v1282
      %v1436 = vpack.c.b16 %v1285, %v1284
      %v1437 = vpack.c.b16 %v1287, %v1286
      %v1438 = vpack.c.b16 %v1289, %v1288
      %v1439 = vpack.c.b16 %v1291, %v1290
      %v1440 = vpack.c.b16 %v1293, %v1292
      %v1441 = vpack.c.b16 %v1295, %v1294
      %v1442 = vpack.c.b16 %v1297, %v1296
      %v1443 = vpack.c.b16 %v1299, %v1298
      %v1444 = vpack.c.b16 %v1301, %v1300
      %v1445 = vpack.c.b16 %v1303, %v1302
      %v1446 = vpack.c.b16 %v1305, %v1304
      %v1447 = vpack.c.b16 %v1307, %v1306
      %v1448 = vpack.c.b16 %v1309, %v1308
      %v1449 = vpack.c.b16 %v1311, %v1310
      %v1450 = vpack.c.b16 %v1313, %v1312
      %v1451 = vpack.c.b16 %v1315, %v1314
      %v1452 = vpack.c.b16 %v1317, %v1316
      %v1453 = vpack.c.b16 %v1319, %v1318
      %v1454 = vpack.c.b16 %v1321, %v1320
      %v1455 = vpack.c.b16 %v1323, %v1322
      %v1456 = vpack.c.b16 %v1325, %v1324
      %v1457 = vpack.c.b16 %v1327, %v1326
      %v1458 = vpack.c.b16 %v1329, %v1328
      %v1459 = vpack.c.b16 %v1331, %v1330
      %1588 = vmatprep.subr.bf16.mxu0 0
      %1589 = vmatpush1.bf16.msra.mxu0 %v1339
      %1590 = vmatprep.subr.bf16.mxu0 0
      %1591 = vmatpush1.bf16.msra.mxu0 %v1338
      %1592 = vmatprep.subr.bf16.mxu0 0
      %1593 = vmatpush1.bf16.msra.mxu0 %v1337
      %1594 = vmatprep.subr.bf16.mxu0 0
      %1595 = vmatpush1.bf16.msra.mxu0 %v1336
      %1596 = vmatprep.subr.bf16.mxu0 0
      %1597 = vmatpush1.bf16.msra.mxu0 %v1335
      %1598 = vmatprep.subr.bf16.mxu0 0
      %1599 = vmatpush1.bf16.msra.mxu0 %v1334
      %1600 = vmatprep.subr.bf16.mxu0 0
      %1601 = vmatpush1.bf16.msra.mxu0 %v1333
      %1602 = vmatprep.subr.bf16.mxu0 0
      %1603 = vmatpush1.bf16.msra.mxu0 %v1332
      %1604 = vmatprep.subr.bf16.mxu0 0
      %1605 = vmatpush2.bf16.msra.mxu0 %v1347
      %1606 = vmatprep.subr.bf16.mxu0 0
      %1607 = vmatpush2.bf16.msra.mxu0 %v1346
      %1608 = vmatprep.subr.bf16.mxu0 0
      %1609 = vmatpush2.bf16.msra.mxu0 %v1345
      %1610 = vmatprep.subr.bf16.mxu0 0
      %1611 = vmatpush2.bf16.msra.mxu0 %v1344
      %1612 = vmatprep.subr.bf16.mxu0 0
      %1613 = vmatpush2.bf16.msra.mxu0 %v1343
      %1614 = vmatprep.subr.bf16.mxu0 0
      %1615 = vmatpush2.bf16.msra.mxu0 %v1342
      %1616 = vmatprep.subr.bf16.mxu0 0
      %1617 = vmatpush2.bf16.msra.mxu0 %v1341
      %1618 = vmatprep.subr.bf16.mxu0 0
      %1619 = vmatpush2.bf16.msra.mxu0 %v1340
      %1620 = vmatprep.mubr.bf16.mxu0 %v693
      %1621 = vmatmul.mubr.bf16.gmra.mxu0 %v692
      %v1622 = vpop.f32.mrf.mxu0
      %v1623 = vadd.f32 %v522, %v1622
      %v1624 = vpop.f32.mrf.mxu0
      %v1625 = vpop.f32.mrf.mxu0
      %v1626 = vadd.f32 %v522, %v1625
      %v1627 = vpop.f32.mrf.mxu0
      %1628 = vmatprep.mubr.bf16.mxu0 %v709
      %1629 = vmatmul.mubr.bf16.gmra.mxu0 %v708
      %v1630 = vpop.f32.mrf.mxu0
      %v1631 = vadd.f32 %v522, %v1630
      %v1632 = vpop.f32.mrf.mxu0
      %v1633 = vpop.f32.mrf.mxu0
      %v1634 = vadd.f32 %v522, %v1633
      %v1635 = vpop.f32.mrf.mxu0
      %1636 = vmatprep.mubr.bf16.mxu0 %v725
      %1637 = vmatmul.mubr.bf16.gmra.mxu0 %v724
      %v1638 = vpop.f32.mrf.mxu0
      %v1639 = vadd.f32 %v522, %v1638
      %v1640 = vpop.f32.mrf.mxu0
      %v1641 = vpop.f32.mrf.mxu0
      %v1642 = vadd.f32 %v522, %v1641
      %v1643 = vpop.f32.mrf.mxu0
      %1644 = vmatprep.mubr.bf16.mxu0 %v741
      %1645 = vmatmul.mubr.bf16.gmra.mxu0 %v740
      %v1646 = vpop.f32.mrf.mxu0
      %v1647 = vadd.f32 %v522, %v1646
      %v1648 = vpop.f32.mrf.mxu0
      %v1649 = vpop.f32.mrf.mxu0
      %v1650 = vpop.f32.mrf.mxu0
      %1651 = vdwg.mxu0
      %1652 = vmatprep.subr.bf16.mxu0 0
      %1653 = vmatpush1.bf16.msra.mxu0 %v1355
      %1654 = vmatprep.subr.bf16.mxu0 0
      %1655 = vmatpush1.bf16.msra.mxu0 %v1354
      %1656 = vmatprep.subr.bf16.mxu0 0
      %1657 = vmatpush1.bf16.msra.mxu0 %v1353
      %1658 = vmatprep.subr.bf16.mxu0 0
      %1659 = vmatpush1.bf16.msra.mxu0 %v1352
      %1660 = vmatprep.subr.bf16.mxu0 0
      %1661 = vmatpush1.bf16.msra.mxu0 %v1351
      %1662 = vmatprep.subr.bf16.mxu0 0
      %1663 = vmatpush1.bf16.msra.mxu0 %v1350
      %1664 = vmatprep.subr.bf16.mxu0 0
      %1665 = vmatpush1.bf16.msra.mxu0 %v1349
      %1666 = vmatprep.subr.bf16.mxu0 0
      %1667 = vmatpush1.bf16.msra.mxu0 %v1348
      %1668 = vmatprep.subr.bf16.mxu0 0
      %1669 = vmatpush2.bf16.msra.mxu0 %v1363
      %1670 = vmatprep.subr.bf16.mxu0 0
      %1671 = vmatpush2.bf16.msra.mxu0 %v1362
      %1672 = vmatprep.subr.bf16.mxu0 0
      %1673 = vmatpush2.bf16.msra.mxu0 %v1361
      %1674 = vmatprep.subr.bf16.mxu0 0
      %1675 = vmatpush2.bf16.msra.mxu0 %v1360
      %1676 = vmatprep.subr.bf16.mxu0 0
      %1677 = vmatpush2.bf16.msra.mxu0 %v1359
      %1678 = vmatprep.subr.bf16.mxu0 0
      %1679 = vmatpush2.bf16.msra.mxu0 %v1358
      %1680 = vmatprep.subr.bf16.mxu0 0
      %1681 = vmatpush2.bf16.msra.mxu0 %v1357
      %1682 = vmatprep.subr.bf16.mxu0 0
      %1683 = vmatpush2.bf16.msra.mxu0 %v1356
      %1684 = vmatprep.mubr.bf16.mxu0 %v695
      %1685 = vmatmul.mubr.bf16.gmra.mxu0 %v694
      %v1686 = vpop.f32.mrf.mxu0
      %v1687 = vadd.f32 %v1623, %v1686
      %v1688 = vpop.f32.mrf.mxu0
      %v1689 = vpop.f32.mrf.mxu0
      %v1690 = vadd.f32 %v1626, %v1689
      %v1691 = vpop.f32.mrf.mxu0
      %1692 = vmatprep.mubr.bf16.mxu0 %v711
      %1693 = vmatmul.mubr.bf16.gmra.mxu0 %v710
      %v1694 = vpop.f32.mrf.mxu0
      %v1695 = vadd.f32 %v1631, %v1694
      %v1696 = vpop.f32.mrf.mxu0
      %v1697 = vpop.f32.mrf.mxu0
      %v1698 = vadd.f32 %v1634, %v1697
      %v1699 = vpop.f32.mrf.mxu0
      %1700 = vmatprep.mubr.bf16.mxu0 %v727
      %1701 = vmatmul.mubr.bf16.gmra.mxu0 %v726
      %v1702 = vpop.f32.mrf.mxu0
      %v1703 = vadd.f32 %v1639, %v1702
      %v1704 = vpop.f32.mrf.mxu0
      %v1705 = vpop.f32.mrf.mxu0
      %v1706 = vadd.f32 %v1642, %v1705
      %v1707 = vpop.f32.mrf.mxu0
      %1708 = vmatprep.mubr.bf16.mxu0 %v743
      %1709 = vmatmul.mubr.bf16.gmra.mxu0 %v742
      %v1710 = vpop.f32.mrf.mxu0
      %v1711 = vadd.f32 %v1647, %v1710
      %v1712 = vpop.f32.mrf.mxu0
      %v1713 = vpop.f32.mrf.mxu0
      %v1714 = vpop.f32.mrf.mxu0
      %1715 = vdwg.mxu0
      %1716 = vmatprep.subr.bf16.mxu0 0
      %1717 = vmatpush1.bf16.msra.mxu0 %v1371
      %1718 = vmatprep.subr.bf16.mxu0 0
      %1719 = vmatpush1.bf16.msra.mxu0 %v1370
      %1720 = vmatprep.subr.bf16.mxu0 0
      %1721 = vmatpush1.bf16.msra.mxu0 %v1369
      %1722 = vmatprep.subr.bf16.mxu0 0
      %1723 = vmatpush1.bf16.msra.mxu0 %v1368
      %1724 = vmatprep.subr.bf16.mxu0 0
      %1725 = vmatpush1.bf16.msra.mxu0 %v1367
      %1726 = vmatprep.subr.bf16.mxu0 0
      %1727 = vmatpush1.bf16.msra.mxu0 %v1366
      %1728 = vmatprep.subr.bf16.mxu0 0
      %1729 = vmatpush1.bf16.msra.mxu0 %v1365
      %1730 = vmatprep.subr.bf16.mxu0 0
      %1731 = vmatpush1.bf16.msra.mxu0 %v1364
      %1732 = vmatprep.subr.bf16.mxu0 0
      %1733 = vmatpush2.bf16.msra.mxu0 %v1379
      %1734 = vmatprep.subr.bf16.mxu0 0
      %1735 = vmatpush2.bf16.msra.mxu0 %v1378
      %1736 = vmatprep.subr.bf16.mxu0 0
      %1737 = vmatpush2.bf16.msra.mxu0 %v1377
      %1738 = vmatprep.subr.bf16.mxu0 0
      %1739 = vmatpush2.bf16.msra.mxu0 %v1376
      %1740 = vmatprep.subr.bf16.mxu0 0
      %1741 = vmatpush2.bf16.msra.mxu0 %v1375
      %1742 = vmatprep.subr.bf16.mxu0 0
      %1743 = vmatpush2.bf16.msra.mxu0 %v1374
      %1744 = vmatprep.subr.bf16.mxu0 0
      %1745 = vmatpush2.bf16.msra.mxu0 %v1373
      %1746 = vmatprep.subr.bf16.mxu0 0
      %1747 = vmatpush2.bf16.msra.mxu0 %v1372
      %1748 = vmatprep.mubr.bf16.mxu0 %v697
      %1749 = vmatmul.mubr.bf16.gmra.mxu0 %v696
      %v1750 = vpop.f32.mrf.mxu0
      %v1751 = vadd.f32 %v1687, %v1750
      %v1752 = vpop.f32.mrf.mxu0
      %v1753 = vpop.f32.mrf.mxu0
      %v1754 = vadd.f32 %v1690, %v1753
      %v1755 = vpop.f32.mrf.mxu0
      %1756 = vmatprep.mubr.bf16.mxu0 %v713
      %1757 = vmatmul.mubr.bf16.gmra.mxu0 %v712
      %v1758 = vpop.f32.mrf.mxu0
      %v1759 = vadd.f32 %v1695, %v1758
      %v1760 = vpop.f32.mrf.mxu0
      %v1761 = vpop.f32.mrf.mxu0
      %v1762 = vadd.f32 %v1698, %v1761
      %v1763 = vpop.f32.mrf.mxu0
      %1764 = vmatprep.mubr.bf16.mxu0 %v729
      %1765 = vmatmul.mubr.bf16.gmra.mxu0 %v728
      %v1766 = vpop.f32.mrf.mxu0
      %v1767 = vadd.f32 %v1703, %v1766
      %v1768 = vpop.f32.mrf.mxu0
      %v1769 = vpop.f32.mrf.mxu0
      %v1770 = vadd.f32 %v1706, %v1769
      %v1771 = vpop.f32.mrf.mxu0
      %1772 = vmatprep.mubr.bf16.mxu0 %v745
      %1773 = vmatmul.mubr.bf16.gmra.mxu0 %v744
      %v1774 = vpop.f32.mrf.mxu0
      %v1775 = vadd.f32 %v1711, %v1774
      %v1776 = vpop.f32.mrf.mxu0
      %v1777 = vpop.f32.mrf.mxu0
      %v1778 = vpop.f32.mrf.mxu0
      %1779 = vdwg.mxu0
      %1780 = vmatprep.subr.bf16.mxu0 0
      %1781 = vmatpush1.bf16.msra.mxu0 %v1387
      %1782 = vmatprep.subr.bf16.mxu0 0
      %1783 = vmatpush1.bf16.msra.mxu0 %v1386
      %1784 = vmatprep.subr.bf16.mxu0 0
      %1785 = vmatpush1.bf16.msra.mxu0 %v1385
      %1786 = vmatprep.subr.bf16.mxu0 0
      %1787 = vmatpush1.bf16.msra.mxu0 %v1384
      %1788 = vmatprep.subr.bf16.mxu0 0
      %1789 = vmatpush1.bf16.msra.mxu0 %v1383
      %1790 = vmatprep.subr.bf16.mxu0 0
      %1791 = vmatpush1.bf16.msra.mxu0 %v1382
      %1792 = vmatprep.subr.bf16.mxu0 0
      %1793 = vmatpush1.bf16.msra.mxu0 %v1381
      %1794 = vmatprep.subr.bf16.mxu0 0
      %1795 = vmatpush1.bf16.msra.mxu0 %v1380
      %1796 = vmatprep.subr.bf16.mxu0 0
      %1797 = vmatpush2.bf16.msra.mxu0 %v1395
      %1798 = vmatprep.subr.bf16.mxu0 0
      %1799 = vmatpush2.bf16.msra.mxu0 %v1394
      %1800 = vmatprep.subr.bf16.mxu0 0
      %1801 = vmatpush2.bf16.msra.mxu0 %v1393
      %1802 = vmatprep.subr.bf16.mxu0 0
      %1803 = vmatpush2.bf16.msra.mxu0 %v1392
      %1804 = vmatprep.subr.bf16.mxu0 0
      %1805 = vmatpush2.bf16.msra.mxu0 %v1391
      %1806 = vmatprep.subr.bf16.mxu0 0
      %1807 = vmatpush2.bf16.msra.mxu0 %v1390
      %1808 = vmatprep.subr.bf16.mxu0 0
      %1809 = vmatpush2.bf16.msra.mxu0 %v1389
      %1810 = vmatprep.subr.bf16.mxu0 0
      %1811 = vmatpush2.bf16.msra.mxu0 %v1388
      %1812 = vmatprep.mubr.bf16.mxu0 %v699
      %1813 = vmatmul.mubr.bf16.gmra.mxu0 %v698
      %v1814 = vpop.f32.mrf.mxu0
      %v1815 = vadd.f32 %v1751, %v1814
      %v1816 = vpop.f32.mrf.mxu0
      %v1817 = vpop.f32.mrf.mxu0
      %v1818 = vadd.f32 %v1754, %v1817
      %v1819 = vpop.f32.mrf.mxu0
      %1820 = vmatprep.mubr.bf16.mxu0 %v715
      %1821 = vmatmul.mubr.bf16.gmra.mxu0 %v714
      %v1822 = vpop.f32.mrf.mxu0
      %v1823 = vadd.f32 %v1759, %v1822
      %v1824 = vpop.f32.mrf.mxu0
      %v1825 = vpop.f32.mrf.mxu0
      %v1826 = vadd.f32 %v1762, %v1825
      %v1827 = vpop.f32.mrf.mxu0
      %1828 = vmatprep.mubr.bf16.mxu0 %v731
      %1829 = vmatmul.mubr.bf16.gmra.mxu0 %v730
      %v1830 = vpop.f32.mrf.mxu0
      %v1831 = vadd.f32 %v1767, %v1830
      %v1832 = vpop.f32.mrf.mxu0
      %v1833 = vpop.f32.mrf.mxu0
      %v1834 = vadd.f32 %v1770, %v1833
      %v1835 = vpop.f32.mrf.mxu0
      %1836 = vmatprep.mubr.bf16.mxu0 %v747
      %1837 = vmatmul.mubr.bf16.gmra.mxu0 %v746
      %v1838 = vpop.f32.mrf.mxu0
      %v1839 = vadd.f32 %v1775, %v1838
      %v1840 = vpop.f32.mrf.mxu0
      %v1841 = vpop.f32.mrf.mxu0
      %v1842 = vpop.f32.mrf.mxu0
      %1843 = vdwg.mxu0
      %1844 = vmatprep.subr.bf16.mxu0 0
      %1845 = vmatpush1.bf16.msra.mxu0 %v1403
      %1846 = vmatprep.subr.bf16.mxu0 0
      %1847 = vmatpush1.bf16.msra.mxu0 %v1402
      %1848 = vmatprep.subr.bf16.mxu0 0
      %1849 = vmatpush1.bf16.msra.mxu0 %v1401
      %1850 = vmatprep.subr.bf16.mxu0 0
      %1851 = vmatpush1.bf16.msra.mxu0 %v1400
      %1852 = vmatprep.subr.bf16.mxu0 0
      %1853 = vmatpush1.bf16.msra.mxu0 %v1399
      %1854 = vmatprep.subr.bf16.mxu0 0
      %1855 = vmatpush1.bf16.msra.mxu0 %v1398
      %1856 = vmatprep.subr.bf16.mxu0 0
      %1857 = vmatpush1.bf16.msra.mxu0 %v1397
      %1858 = vmatprep.subr.bf16.mxu0 0
      %1859 = vmatpush1.bf16.msra.mxu0 %v1396
      %1860 = vmatprep.subr.bf16.mxu0 0
      %1861 = vmatpush2.bf16.msra.mxu0 %v1411
      %1862 = vmatprep.subr.bf16.mxu0 0
      %1863 = vmatpush2.bf16.msra.mxu0 %v1410
      %1864 = vmatprep.subr.bf16.mxu0 0
      %1865 = vmatpush2.bf16.msra.mxu0 %v1409
      %1866 = vmatprep.subr.bf16.mxu0 0
      %1867 = vmatpush2.bf16.msra.mxu0 %v1408
      %1868 = vmatprep.subr.bf16.mxu0 0
      %1869 = vmatpush2.bf16.msra.mxu0 %v1407
      %1870 = vmatprep.subr.bf16.mxu0 0
      %1871 = vmatpush2.bf16.msra.mxu0 %v1406
      %1872 = vmatprep.subr.bf16.mxu0 0
      %1873 = vmatpush2.bf16.msra.mxu0 %v1405
      %1874 = vmatprep.subr.bf16.mxu0 0
      %1875 = vmatpush2.bf16.msra.mxu0 %v1404
      %1876 = vmatprep.mubr.bf16.mxu0 %v701
      %1877 = vmatmul.mubr.bf16.gmra.mxu0 %v700
      %v1878 = vpop.f32.mrf.mxu0
      %v1879 = vadd.f32 %v1815, %v1878
      %v1880 = vpop.f32.mrf.mxu0
      %v1881 = vpop.f32.mrf.mxu0
      %v1882 = vadd.f32 %v1818, %v1881
      %v1883 = vpop.f32.mrf.mxu0
      %1884 = vmatprep.mubr.bf16.mxu0 %v717
      %1885 = vmatmul.mubr.bf16.gmra.mxu0 %v716
      %v1886 = vpop.f32.mrf.mxu0
      %v1887 = vadd.f32 %v1823, %v1886
      %v1888 = vpop.f32.mrf.mxu0
      %v1889 = vpop.f32.mrf.mxu0
      %v1890 = vadd.f32 %v1826, %v1889
      %v1891 = vpop.f32.mrf.mxu0
      %1892 = vmatprep.mubr.bf16.mxu0 %v733
      %1893 = vmatmul.mubr.bf16.gmra.mxu0 %v732
      %v1894 = vpop.f32.mrf.mxu0
      %v1895 = vadd.f32 %v1831, %v1894
      %v1896 = vpop.f32.mrf.mxu0
      %v1897 = vpop.f32.mrf.mxu0
      %v1898 = vadd.f32 %v1834, %v1897
      %v1899 = vpop.f32.mrf.mxu0
      %1900 = vmatprep.mubr.bf16.mxu0 %v749
      %1901 = vmatmul.mubr.bf16.gmra.mxu0 %v748
      %v1902 = vpop.f32.mrf.mxu0
      %v1903 = vadd.f32 %v1839, %v1902
      %v1904 = vpop.f32.mrf.mxu0
      %v1905 = vpop.f32.mrf.mxu0
      %v1906 = vpop.f32.mrf.mxu0
      %1907 = vdwg.mxu0
      %1908 = vmatprep.subr.bf16.mxu0 0
      %1909 = vmatpush1.bf16.msra.mxu0 %v1419
      %1910 = vmatprep.subr.bf16.mxu0 0
      %1911 = vmatpush1.bf16.msra.mxu0 %v1418
      %1912 = vmatprep.subr.bf16.mxu0 0
      %1913 = vmatpush1.bf16.msra.mxu0 %v1417
      %1914 = vmatprep.subr.bf16.mxu0 0
      %1915 = vmatpush1.bf16.msra.mxu0 %v1416
      %1916 = vmatprep.subr.bf16.mxu0 0
      %1917 = vmatpush1.bf16.msra.mxu0 %v1415
      %1918 = vmatprep.subr.bf16.mxu0 0
      %1919 = vmatpush1.bf16.msra.mxu0 %v1414
      %1920 = vmatprep.subr.bf16.mxu0 0
      %1921 = vmatpush1.bf16.msra.mxu0 %v1413
      %1922 = vmatprep.subr.bf16.mxu0 0
      %1923 = vmatpush1.bf16.msra.mxu0 %v1412
      %1924 = vmatprep.subr.bf16.mxu0 0
      %1925 = vmatpush2.bf16.msra.mxu0 %v1427
      %1926 = vmatprep.subr.bf16.mxu0 0
      %1927 = vmatpush2.bf16.msra.mxu0 %v1426
      %1928 = vmatprep.subr.bf16.mxu0 0
      %1929 = vmatpush2.bf16.msra.mxu0 %v1425
      %1930 = vmatprep.subr.bf16.mxu0 0
      %1931 = vmatpush2.bf16.msra.mxu0 %v1424
      %1932 = vmatprep.subr.bf16.mxu0 0
      %1933 = vmatpush2.bf16.msra.mxu0 %v1423
      %1934 = vmatprep.subr.bf16.mxu0 0
      %1935 = vmatpush2.bf16.msra.mxu0 %v1422
      %1936 = vmatprep.subr.bf16.mxu0 0
      %1937 = vmatpush2.bf16.msra.mxu0 %v1421
      %1938 = vmatprep.subr.bf16.mxu0 0
      %1939 = vmatpush2.bf16.msra.mxu0 %v1420
      %1940 = vmatprep.mubr.bf16.mxu0 %v703
      %1941 = vmatmul.mubr.bf16.gmra.mxu0 %v702
      %v1942 = vpop.f32.mrf.mxu0
      %v1943 = vadd.f32 %v1879, %v1942
      %v1944 = vpop.f32.mrf.mxu0
      %v1945 = vpop.f32.mrf.mxu0
      %v1946 = vadd.f32 %v1882, %v1945
      %v1947 = vpop.f32.mrf.mxu0
      %1948 = vmatprep.mubr.bf16.mxu0 %v719
      %1949 = vmatmul.mubr.bf16.gmra.mxu0 %v718
      %v1950 = vpop.f32.mrf.mxu0
      %v1951 = vadd.f32 %v1887, %v1950
      %v1952 = vpop.f32.mrf.mxu0
      %v1953 = vpop.f32.mrf.mxu0
      %v1954 = vadd.f32 %v1890, %v1953
      %v1955 = vpop.f32.mrf.mxu0
      %1956 = vmatprep.mubr.bf16.mxu0 %v735
      %1957 = vmatmul.mubr.bf16.gmra.mxu0 %v734
      %v1958 = vpop.f32.mrf.mxu0
      %v1959 = vadd.f32 %v1895, %v1958
      %v1960 = vpop.f32.mrf.mxu0
      %v1961 = vpop.f32.mrf.mxu0
      %v1962 = vadd.f32 %v1898, %v1961
      %v1963 = vpop.f32.mrf.mxu0
      %1964 = vmatprep.mubr.bf16.mxu0 %v751
      %1965 = vmatmul.mubr.bf16.gmra.mxu0 %v750
      %v1966 = vpop.f32.mrf.mxu0
      %v1967 = vadd.f32 %v1903, %v1966
      %v1968 = vpop.f32.mrf.mxu0
      %v1969 = vpop.f32.mrf.mxu0
      %v1970 = vpop.f32.mrf.mxu0
      %1971 = vdwg.mxu0
      %1972 = vmatprep.subr.bf16.mxu0 0
      %1973 = vmatpush1.bf16.msra.mxu0 %v1435
      %1974 = vmatprep.subr.bf16.mxu0 0
      %1975 = vmatpush1.bf16.msra.mxu0 %v1434
      %1976 = vmatprep.subr.bf16.mxu0 0
      %1977 = vmatpush1.bf16.msra.mxu0 %v1433
      %1978 = vmatprep.subr.bf16.mxu0 0
      %1979 = vmatpush1.bf16.msra.mxu0 %v1432
      %1980 = vmatprep.subr.bf16.mxu0 0
      %1981 = vmatpush1.bf16.msra.mxu0 %v1431
      %1982 = vmatprep.subr.bf16.mxu0 0
      %1983 = vmatpush1.bf16.msra.mxu0 %v1430
      %1984 = vmatprep.subr.bf16.mxu0 0
      %1985 = vmatpush1.bf16.msra.mxu0 %v1429
      %1986 = vmatprep.subr.bf16.mxu0 0
      %1987 = vmatpush1.bf16.msra.mxu0 %v1428
      %1988 = vmatprep.subr.bf16.mxu0 0
      %1989 = vmatpush2.bf16.msra.mxu0 %v1443
      %1990 = vmatprep.subr.bf16.mxu0 0
      %1991 = vmatpush2.bf16.msra.mxu0 %v1442
      %1992 = vmatprep.subr.bf16.mxu0 0
      %1993 = vmatpush2.bf16.msra.mxu0 %v1441
      %1994 = vmatprep.subr.bf16.mxu0 0
      %1995 = vmatpush2.bf16.msra.mxu0 %v1440
      %1996 = vmatprep.subr.bf16.mxu0 0
      %1997 = vmatpush2.bf16.msra.mxu0 %v1439
      %1998 = vmatprep.subr.bf16.mxu0 0
      %1999 = vmatpush2.bf16.msra.mxu0 %v1438
      %2000 = vmatprep.subr.bf16.mxu0 0
      %2001 = vmatpush2.bf16.msra.mxu0 %v1437
      %2002 = vmatprep.subr.bf16.mxu0 0
      %2003 = vmatpush2.bf16.msra.mxu0 %v1436
      %2004 = vmatprep.mubr.bf16.mxu0 %v705
      %2005 = vmatmul.mubr.bf16.gmra.mxu0 %v704
      %v2006 = vpop.f32.mrf.mxu0
      %v2007 = vadd.f32 %v1943, %v2006
      %v2008 = vpop.f32.mrf.mxu0
      %v2009 = vpop.f32.mrf.mxu0
      %v2010 = vadd.f32 %v1946, %v2009
      %v2011 = vpop.f32.mrf.mxu0
      %2012 = vmatprep.mubr.bf16.mxu0 %v721
      %2013 = vmatmul.mubr.bf16.gmra.mxu0 %v720
      %v2014 = vpop.f32.mrf.mxu0
      %v2015 = vadd.f32 %v1951, %v2014
      %v2016 = vpop.f32.mrf.mxu0
      %v2017 = vpop.f32.mrf.mxu0
      %v2018 = vadd.f32 %v1954, %v2017
      %v2019 = vpop.f32.mrf.mxu0
      %2020 = vmatprep.mubr.bf16.mxu0 %v737
      %2021 = vmatmul.mubr.bf16.gmra.mxu0 %v736
      %v2022 = vpop.f32.mrf.mxu0
      %v2023 = vadd.f32 %v1959, %v2022
      %v2024 = vpop.f32.mrf.mxu0
      %v2025 = vpop.f32.mrf.mxu0
      %v2026 = vadd.f32 %v1962, %v2025
      %v2027 = vpop.f32.mrf.mxu0
      %2028 = vmatprep.mubr.bf16.mxu0 %v753
      %2029 = vmatmul.mubr.bf16.gmra.mxu0 %v752
      %v2030 = vpop.f32.mrf.mxu0
      %v2031 = vadd.f32 %v1967, %v2030
      %v2032 = vpop.f32.mrf.mxu0
      %v2033 = vpop.f32.mrf.mxu0
      %v2034 = vpop.f32.mrf.mxu0
      %2035 = vdwg.mxu0
      %2036 = vmatprep.subr.bf16.mxu0 0
      %2037 = vmatpush1.bf16.msra.mxu0 %v1451
      %2038 = vmatprep.subr.bf16.mxu0 0
      %2039 = vmatpush1.bf16.msra.mxu0 %v1450
      %2040 = vmatprep.subr.bf16.mxu0 0
      %2041 = vmatpush1.bf16.msra.mxu0 %v1449
      %2042 = vmatprep.subr.bf16.mxu0 0
      %2043 = vmatpush1.bf16.msra.mxu0 %v1448
      %2044 = vmatprep.subr.bf16.mxu0 0
      %2045 = vmatpush1.bf16.msra.mxu0 %v1447
      %2046 = vmatprep.subr.bf16.mxu0 0
      %2047 = vmatpush1.bf16.msra.mxu0 %v1446
      %2048 = vmatprep.subr.bf16.mxu0 0
      %2049 = vmatpush1.bf16.msra.mxu0 %v1445
      %2050 = vmatprep.subr.bf16.mxu0 0
      %2051 = vmatpush1.bf16.msra.mxu0 %v1444
      %2052 = vmatprep.subr.bf16.mxu0 0
      %2053 = vmatpush2.bf16.msra.mxu0 %v1459
      %2054 = vmatprep.subr.bf16.mxu0 0
      %2055 = vmatpush2.bf16.msra.mxu0 %v1458
      %2056 = vmatprep.subr.bf16.mxu0 0
      %2057 = vmatpush2.bf16.msra.mxu0 %v1457
      %2058 = vmatprep.subr.bf16.mxu0 0
      %2059 = vmatpush2.bf16.msra.mxu0 %v1456
      %2060 = vmatprep.subr.bf16.mxu0 0
      %2061 = vmatpush2.bf16.msra.mxu0 %v1455
      %2062 = vmatprep.subr.bf16.mxu0 0
      %2063 = vmatpush2.bf16.msra.mxu0 %v1454
      %2064 = vmatprep.subr.bf16.mxu0 0
      %2065 = vmatpush2.bf16.msra.mxu0 %v1453
      %2066 = vmatprep.subr.bf16.mxu0 0
      %2067 = vmatpush2.bf16.msra.mxu0 %v1452
      %2068 = vmatprep.mubr.bf16.mxu0 %v707
      %2069 = vmatmul.mubr.bf16.gmra.mxu0 %v706
      %v2070 = vpop.f32.mrf.mxu0
      %v2071 = vadd.f32 %v2007, %v2070
      %v2072 = vpop.f32.mrf.mxu0
      %v2073 = vpop.f32.mrf.mxu0
      %v2074 = vadd.f32 %v2010, %v2073
      %v2075 = vpop.f32.mrf.mxu0
      %2076 = vmatprep.mubr.bf16.mxu0 %v723
      %2077 = vmatmul.mubr.bf16.gmra.mxu0 %v722
      %v2078 = vpop.f32.mrf.mxu0
      %v2079 = vadd.f32 %v2015, %v2078
      %v2080 = vpop.f32.mrf.mxu0
      %v2081 = vpop.f32.mrf.mxu0
      %v2082 = vadd.f32 %v2018, %v2081
      %v2083 = vpop.f32.mrf.mxu0
      %2084 = vmatprep.mubr.bf16.mxu0 %v739
      %2085 = vmatmul.mubr.bf16.gmra.mxu0 %v738
      %v2086 = vpop.f32.mrf.mxu0
      %v2087 = vadd.f32 %v2023, %v2086
      %v2088 = vpop.f32.mrf.mxu0
      %v2089 = vpop.f32.mrf.mxu0
      %v2090 = vadd.f32 %v2026, %v2089
      %v2091 = vpop.f32.mrf.mxu0
      %2092 = vmatprep.mubr.bf16.mxu0 %v755
      %2093 = vmatmul.mubr.bf16.gmra.mxu0 %v754
      %v2094 = vpop.f32.mrf.mxu0
      %v2095 = vadd.f32 %v2031, %v2094
      %v2096 = vpop.f32.mrf.mxu0
      %v2097 = vpop.f32.mrf.mxu0
      %v2098 = vpop.f32.mrf.mxu0
      %2099 = vdwg.mxu0
      %v2100 = vmax.f32 %v2071, 0.0
      %v2101 = vmax.f32 %v2074, 0.0
      %v2102 = vmax.f32 %v2079, 0.0
      %v2103 = vmax.f32 %v2082, 0.0
      %v2104 = vmax.f32 %v2087, 0.0
      %v2105 = vmax.f32 %v2090, 0.0
      %v2106 = vmax.f32 %v2095, 0.0
      %v2107 = vlaneseq
      %v2108 = vand.u32 %v2107, 127
      %vm2109 = vcmp.lt.s32.totalorder %v2108, 32
      %v2110 = vsel %vm2109, %v2100, %v2071
      %v2111 = vsel %vm2109, %v2101, %v2074
      %v2112 = vsel %vm2109, %v2102, %v2079
      %v2113 = vsel %vm2109, %v2103, %v2082
      %v2114 = vsel %vm2109, %v2104, %v2087
      %v2115 = vsel %vm2109, %v2105, %v2090
      %v2116 = vsel %vm2109, %v2106, %v2095
      %v2117 = vpack.c.bf16 %v2101, %v2100
      %v2118 = vpack.c.bf16 %v2103, %v2102
      %v2119 = vpack.c.bf16 %v2105, %v2104
      %v2120 = vpack.c.bf16 %v2106, %v2106
      %v2121 = vld [vmem:[%s3] sm:$0xf]
      %v2122 = vld [vmem:[%s3 + $0x4] sm:$0xf]
      %v2123 = vld [vmem:[%s3 + $0x8] sm:$0xf]
      %v2124 = vld [vmem:[%s3 + $0xc] sm:$0xf]
      %v2129 = vunpack.c.l.b16 %v2121
      %v2130 = vunpack.c.l.b16 %v2122
      %v2131 = vunpack.c.l.b16 %v2123
      %v2132 = vunpack.c.l.b16 %v2124
      %v2133 = vpack.c.b16 %v2130, %v2129
      %v2134 = vpack.c.b16 %v2132, %v2131
      %vm2137 = vcmask 261120
      %v2139 = vsel %vm2137, %v2117, 0
      %v2142 = vsel %vm2137, %v2118, 0
      %v2145 = vsel %vm2137, %v2119, 0
      %v2148 = vsel %vm2137, %v2120, 0
      %2150 = vmatprep.subr.bf16.mxu0 0
      %2151 = vmatpush1.bf16.msra.mxu0 0
      %2152 = vmatprep.subr.bf16.mxu0 0
      %2153 = vmatpush1.bf16.msra.mxu0 0
      %2154 = vmatprep.subr.bf16.mxu0 0
      %2155 = vmatpush1.bf16.msra.mxu0 0
      %2156 = vmatprep.subr.bf16.mxu0 0
      %2157 = vmatpush1.bf16.msra.mxu0 0
      %2158 = vmatprep.subr.bf16.mxu0 0
      %2159 = vmatpush1.bf16.msra.mxu0 0
      %2160 = vmatprep.subr.bf16.mxu0 0
      %2161 = vmatpush1.bf16.msra.mxu0 0
      %2162 = vmatprep.subr.bf16.mxu0 0
      %2163 = vmatpush1.bf16.msra.mxu0 %v2134
      %2164 = vmatprep.subr.bf16.mxu0 0
      %2165 = vmatpush1.bf16.msra.mxu0 %v2133
      %2166 = vmatprep.subr.bf16.mxu0 0
      %2167 = vmatpush2.bf16.msra.mxu0 0
      %2168 = vmatprep.subr.bf16.mxu0 0
      %2169 = vmatpush2.bf16.msra.mxu0 0
      %2170 = vmatprep.subr.bf16.mxu0 0
      %2171 = vmatpush2.bf16.msra.mxu0 0
      %2172 = vmatprep.subr.bf16.mxu0 0
      %2173 = vmatpush2.bf16.msra.mxu0 0
      %2174 = vmatprep.subr.bf16.mxu0 0
      %2175 = vmatpush2.bf16.msra.mxu0 0
      %2176 = vmatprep.subr.bf16.mxu0 0
      %2177 = vmatpush2.bf16.msra.mxu0 0
      %2178 = vmatprep.subr.bf16.mxu0 0
      %2179 = vmatpush2.bf16.msra.mxu0 0
      %2180 = vmatprep.subr.bf16.mxu0 0
      %2181 = vmatpush2.bf16.msra.mxu0 0
      %2182 = vmatprep.mubr.bf16.mxu0 0
      %2183 = vmatmul.mubr.bf16.gmra.mxu0 %v2139
      %v2184 = vpop.f32.mrf.mxu0
      %v2185 = vadd.f32 0.0, %v2184
      %v2186 = vpop.f32.mrf.mxu0
      %v2187 = vpop.f32.mrf.mxu0
      %v2188 = vadd.f32 0.0, %v2187
      %v2189 = vpop.f32.mrf.mxu0
      %2190 = vmatprep.mubr.bf16.mxu0 0
      %2191 = vmatmul.mubr.bf16.gmra.mxu0 %v2142
      %v2192 = vpop.f32.mrf.mxu0
      %v2193 = vadd.f32 0.0, %v2192
      %v2194 = vpop.f32.mrf.mxu0
      %v2195 = vpop.f32.mrf.mxu0
      %v2196 = vadd.f32 0.0, %v2195
      %v2197 = vpop.f32.mrf.mxu0
      %2198 = vmatprep.mubr.bf16.mxu0 0
      %2199 = vmatmul.mubr.bf16.gmra.mxu0 %v2145
      %v2200 = vpop.f32.mrf.mxu0
      %v2201 = vadd.f32 0.0, %v2200
      %v2202 = vpop.f32.mrf.mxu0
      %v2203 = vpop.f32.mrf.mxu0
      %v2204 = vadd.f32 0.0, %v2203
      %v2205 = vpop.f32.mrf.mxu0
      %2206 = vmatprep.mubr.bf16.mxu0 0
      %2207 = vmatmul.mubr.bf16.gmra.mxu0 %v2148
      %v2208 = vpop.f32.mrf.mxu0
      %v2209 = vadd.f32 0.0, %v2208
      %v2210 = vpop.f32.mrf.mxu0
      %v2211 = vpop.f32.mrf.mxu0
      %v2212 = vpop.f32.mrf.mxu0
      %2213 = vdwg.mxu0
      %v2214 = vpack.c.bf16 %v2111, %v2110
      %v2215 = vpack.c.bf16 %v2113, %v2112
      %v2216 = vpack.c.bf16 %v2115, %v2114
      %v2217 = vpack.c.bf16 %v2116, %v2116
      %v2222 = vunpack.c.l.b16 %v2214
      %v2223 = vunpack.c.h.b16 %v2214
      %v2224 = vunpack.c.l.b16 %v2215
      %v2225 = vunpack.c.h.b16 %v2215
      %v2226 = vunpack.c.l.b16 %v2216
      %v2227 = vunpack.c.h.b16 %v2216
      %v2228 = vunpack.c.l.b16 %v2217
      %v2229 = vpack.c.b16 %v2222, %v2222
      %v2230 = vpack.c.b16 %v2223, %v2223
      %v2231 = vpack.c.b16 %v2224, %v2224
      %v2232 = vpack.c.b16 %v2225, %v2225
      %v2233 = vpack.c.b16 %v2226, %v2226
      %v2234 = vpack.c.b16 %v2227, %v2227
      %v2235 = vpack.c.b16 %v2228, %v2228
      %vm2243 = vcmask 519168
      %2244 = vst.msk [vmem:[%s202] sm:$0xf] %vm2243, %v2229
      %2245 = vst.msk [vmem:[%s202 + $0x4] sm:$0xf] %vm2243, %v2230
      %2246 = vst.msk [vmem:[%s202 + $0x8] sm:$0xf] %vm2243, %v2231
      %2247 = vst.msk [vmem:[%s202 + $0xc] sm:$0xf] %vm2243, %v2232
      %2248 = vst.msk [vmem:[%s202 + $0x10] sm:$0xf] %vm2243, %v2233
      %2249 = vst.msk [vmem:[%s202 + $0x14] sm:$0xf] %vm2243, %v2234
      %2250 = vst.msk [vmem:[%s202 + $0x18] sm:$0xf] %vm2243, %v2235
      %v2251 = vpack.c.bf16 %v2188, %v2185
      %v2252 = vpack.c.bf16 %v2196, %v2193
      %v2253 = vpack.c.bf16 %v2204, %v2201
      %v2254 = vpack.c.bf16 %v2209, %v2209
      %v2259 = vunpack.c.l.b16 %v2251
      %v2260 = vunpack.c.h.b16 %v2251
      %v2261 = vunpack.c.l.b16 %v2252
      %v2262 = vunpack.c.h.b16 %v2252
      %v2263 = vunpack.c.l.b16 %v2253
      %v2264 = vunpack.c.h.b16 %v2253
      %v2265 = vunpack.c.l.b16 %v2254
      %v2266 = vpack.c.b16 %v2259, %v2259
      %v2267 = vpack.c.b16 %v2260, %v2260
      %v2268 = vpack.c.b16 %v2261, %v2261
      %v2269 = vpack.c.b16 %v2262, %v2262
      %v2270 = vpack.c.b16 %v2263, %v2263
      %v2271 = vpack.c.b16 %v2264, %v2264
      %v2272 = vpack.c.b16 %v2265, %v2265
      %2273 = vrot.lane.b32.xlu0 %v2266, 64
      %v2274 = vpop.permute.xlu0 %2273
      %2275 = vrot.lane.b32.xlu0 %v2267, 64
      %v2276 = vpop.permute.xlu0 %2275
      %2277 = vrot.lane.b32.xlu0 %v2268, 64
      %v2278 = vpop.permute.xlu0 %2277
      %2279 = vrot.lane.b32.xlu0 %v2269, 64
      %v2280 = vpop.permute.xlu0 %2279
      %2281 = vrot.lane.b32.xlu0 %v2270, 64
      %v2282 = vpop.permute.xlu0 %2281
      %2283 = vrot.lane.b32.xlu0 %v2271, 64
      %v2284 = vpop.permute.xlu0 %2283
      %2285 = vrot.lane.b32.xlu0 %v2272, 64
      %v2286 = vpop.permute.xlu0 %2285
      %vm2294 = vcmask 1043968
      %2295 = vst.msk [vmem:[%s202] sm:$0xf] %vm2294, %v2274
      %2296 = vst.msk [vmem:[%s202 + $0x4] sm:$0xf] %vm2294, %v2276
      %2297 = vst.msk [vmem:[%s202 + $0x8] sm:$0xf] %vm2294, %v2278
      %2298 = vst.msk [vmem:[%s202 + $0xc] sm:$0xf] %vm2294, %v2280
      %2299 = vst.msk [vmem:[%s202 + $0x10] sm:$0xf] %vm2294, %v2282
      %2300 = vst.msk [vmem:[%s202 + $0x14] sm:$0xf] %vm2294, %v2284
      %2301 = vst.msk [vmem:[%s202 + $0x18] sm:$0xf] %vm2294, %v2286
      %s2302 = smul.u32 7, %s15
      %p2303 = scmp.lt.s32.totalorder %s2302, 13
      %s2304 = scalar_select %p2303, %s2302, 13
      %s2305 = smul.addr %s2304, 4
      %s2306 = scalar_lea.vmem %s4, %s2305
      // Predicated region
      $region37: #{_forward_core.2} parent=35 // pred_check
        %p2307 = pneg %p122
      $region38: #{_forward_core.2} parent=35 // pred_check_branch
        %2309 = sbr.rel (%p2307) target = $region40
      $region39: #{_forward_core.2} parent=35 // pred_region
        %s2310 = smul.u32 7, %s15
      $region40: #{_forward_core.2} parent=35 // pred_fallthru
        _
    $region36: #{_forward_core.2} parent=5 // pred_fallthru
      _
    %p2311 = scmp.le.s32.totalorder 2, %s10
    // Predicated region
    $region41: #{_forward_core.2} parent=5 // pred_check
      %p2312 = pneg %p2311
    $region42: #{_forward_core.2} parent=5 // pred_check_branch
      %2314 = sbr.rel (%p2312) target = $region44
    $region43: #{_forward_core.2} parent=5 // pred_region
      %s2315 = ssub.s32 %s10, 2
      // Predicated region
      $region45: #{_forward_core.2} parent=43 // pred_check
        %p2316 = pneg %p128
      $region46: #{_forward_core.2} parent=43 // pred_check_branch
        %2318 = sbr.rel (%p2316) target = $region48
      $region47: #{_forward_core.2} parent=43 // pred_region
        %s2319 = smul.u32 7, %s16
        %p2320 = scmp.lt.s32.totalorder %s2319, 13
        %s2321 = scalar_select %p2320, %s2319, 13
        %s2322 = smul.addr %s2321, 4
        %s2323 = scalar_lea.vmem %s4, %s2322
      $region48: #{_forward_core.2} parent=43 // pred_fallthru
        _
    $region44: #{_forward_core.2} parent=5 // pred_fallthru
      _
  $region6: #{_forward_core.2} parent=0 // loop_footer
    %s14 = sadd.s32 1, %s10
  $region7: #{_forward_core.2} parent=0 // loop_footer_branch
    %9 = sbr.rel target = $region3
  $region8: #{_forward_core.2} parent=0 // loop_exit
    _

</llo_original>
